<compile_context>
chip_gen: v7x
topology: tpu7x:2x2x1
jax: 0.10.0
libtpu: 0.0.40
codegen_flags: <defaults>
</compile_context>

<pallas_src>
import functools
import math

import jax
import jax.numpy as jnp
from jax import lax
from jax.experimental import pallas as pl
from jax.experimental.pallas import tpu as pltpu


# ------------------------------ fused kernel ------------------------------- #

def _fused_encoder_kernel(
    x_ref, dis_ref, sys_ref, mask_ref,
    emb_w_ref, emb_b_ref,
    wq_ref, bq_ref, wk_ref, bk_ref, wv_ref, bv_ref,
    wc_ref, bc_ref,
    g1_ref, be1_ref,
    w1_ref, b1_ref, w2_ref, b2_ref,
    g2_ref, be2_ref,
    o_ref,
    *, n_layers, n_head):
  f32 = jnp.float32
  bf16 = jnp.bfloat16

  x_in = x_ref[...]            # (N, F_in)  f32
  dis = dis_ref[...]           # (N, N)     f32
  sys = sys_ref[...]           # (N, N)     f32
  src_mask = mask_ref[...]     # (N, N)     f32

  N = x_in.shape[0]
  D = emb_w_ref.shape[1]
  d_t = D // n_head

  # ----- embedding (bf16 MXU inputs, f32 accumulation) -----
  x = jnp.dot(x_in.astype(bf16), emb_w_ref[...],
              preferred_element_type=f32) + emb_b_ref[...]        # (N, D) f32

  # ----- layer-invariant graph-mask preprocessing (hoisted once) -----
  row = lax.broadcasted_iota(jnp.int32, (N, N), 0)
  col = lax.broadcasted_iota(jnp.int32, (N, N), 1)
  dis = jnp.where(row == col, jnp.inf, dis)                   # diag = inf
  sys = jnp.where((dis < 1e-6) & (sys == 1.0), 0.0, sys)      # drop coincident
  nmask = ((dis > 1e-6) & (dis < 0.9)) | (sys == 1.0)
  nmask_f32 = nmask.astype(f32)
  nmask_bf = nmask_f32.astype(bf16)                           # exact 0/1 in bf16
  counts = jnp.sum(nmask_f32, axis=-1, keepdims=True)         # (N, 1)
  inv_counts = pl.reciprocal(jnp.maximum(counts, 1.0), approx=True)
  neg_attn = jnp.broadcast_to((src_mask == 0.0)[None], (n_head, N, N))

  scale = 1.0 / math.sqrt(d_t)
  eps = 1e-12

  for l in range(n_layers):          # static unroll; weights indexed by layer
    # neighbor aggregation: mean of masked neighbor features
    neighbor = jnp.dot(nmask_bf, x.astype(bf16),
                       preferred_element_type=f32) * inv_counts   # (N, D)

    xb = jnp.broadcast_to(x.astype(bf16)[None], (n_head, N, D))
    nb = jnp.broadcast_to(neighbor.astype(bf16)[None], (n_head, N, D))

    # per-head projections as batched matmuls (weights pre-split per head)
    q = jnp.einsum('hnd,hdt->hnt', xb, wq_ref[l],
                   preferred_element_type=f32) + bq_ref[l]        # (H, N, d_t)
    k = jnp.einsum('hnd,hdt->hnt', nb, wk_ref[l],
                   preferred_element_type=f32) + bk_ref[l]
    v = jnp.einsum('hnd,hdt->hnt', nb, wv_ref[l],
                   preferred_element_type=f32) + bv_ref[l]

    # scaled dot-product attention (batched over heads)
    s = jnp.einsum('hqt,hkt->hqk', q.astype(bf16), k.astype(bf16),
                   preferred_element_type=f32) * scale            # (H, N, N)
    s = jnp.where(neg_attn, -10000.0, s)
    s = s - jnp.max(s, axis=-1, keepdims=True)
    p = jnp.exp(s)
    p = p * pl.reciprocal(jnp.sum(p, axis=-1, keepdims=True), approx=True)

    ctx = jnp.einsum('hqk,hkt->hqt', p.astype(bf16), v.astype(bf16),
                     preferred_element_type=f32)                  # (H, N, d_t)
    # concat + output projection == per-head matmul then sum over heads
    attn_h = jnp.einsum('hnt,htd->hnd', ctx.astype(bf16), wc_ref[l],
                        preferred_element_type=f32)               # (H, N, D)
    attn = jnp.sum(attn_h, axis=0) + bc_ref[l]                    # (N, D)

    # residual + LayerNorm 1 (dropout = identity)
    h1 = attn + x
    m1 = jnp.mean(h1, axis=-1, keepdims=True)
    v1 = jnp.mean((h1 - m1) ** 2, axis=-1, keepdims=True)
    h1 = (h1 - m1) * lax.rsqrt(v1 + eps)
    h1 = g1_ref[l] * h1 + be1_ref[l]

    # position-wise feed-forward
    f = jnp.dot(h1.astype(bf16), w1_ref[l],
                preferred_element_type=f32) + b1_ref[l]
    f = jnp.maximum(f, 0.0)
    f = jnp.dot(f.astype(bf16), w2_ref[l],
                preferred_element_type=f32) + b2_ref[l]

    # residual + LayerNorm 2
    h2 = f + h1
    m2 = jnp.mean(h2, axis=-1, keepdims=True)
    v2 = jnp.mean((h2 - m2) ** 2, axis=-1, keepdims=True)
    h2 = (h2 - m2) * lax.rsqrt(v2 + eps)
    x = g2_ref[l] * h2 + be2_ref[l]

  o_ref[...] = x.astype(o_ref.dtype)


# ------------------------------ pallas wrapper ------------------------------ #

def encoder_forward(x, dis, sys, src_mask, packed, n_layers, n_head):
  B, N, F_in = x.shape
  D = packed["emb_w"].shape[1]
  Hf = packed["w1"].shape[2]
  d_t = D // n_head
  L = n_layers

  def batch_block(*tail):
    # None == squeezed batch dim (kernel sees a clean 2-D ref per batch)
    nt = len(tail)
    return pl.BlockSpec((None,) + tuple(tail), lambda b, _nt=nt: (b,) + (0,) * _nt)

  def full_block(shape):
    zeros = (0,) * len(shape)
    return pl.BlockSpec(tuple(shape), lambda b, _z=zeros: _z)

  kernel = functools.partial(_fused_encoder_kernel,
                             n_layers=n_layers, n_head=n_head)

  return pl.pallas_call(
      kernel,
      out_shape=jax.ShapeDtypeStruct((B, N, D), jnp.float32),
      grid=(B,),
      in_specs=[
          batch_block(N, F_in),                 # x
          batch_block(N, N),                    # dis
          batch_block(N, N),                    # sys
          batch_block(N, N),                    # src_mask
          full_block((F_in, D)),                # emb_w (bf16)
          full_block((1, D)),                   # emb_b
          full_block((L, n_head, D, d_t)),      # wq (bf16, per-head)
          full_block((L, n_head, 1, d_t)),      # bq
          full_block((L, n_head, D, d_t)),      # wk
          full_block((L, n_head, 1, d_t)),      # bk
          full_block((L, n_head, D, d_t)),      # wv
          full_block((L, n_head, 1, d_t)),      # bv
          full_block((L, n_head, d_t, D)),      # wc (bf16, per-head)
          full_block((L, 1, D)),                # bc
          full_block((L, 1, D)),                # gamma1
          full_block((L, 1, D)),                # beta1
          full_block((L, D, Hf)),               # ffn w1 (bf16)
          full_block((L, 1, Hf)),               # ffn b1
          full_block((L, Hf, D)),               # ffn w2 (bf16)
          full_block((L, 1, D)),                # ffn b2
          full_block((L, 1, D)),                # gamma2
          full_block((L, 1, D)),                # beta2
      ],
      out_specs=batch_block(N, D),
      compiler_params=pltpu.CompilerParams(
          dimension_semantics=("parallel",)),   # batch axis -> both TCs on v7x
  )(x, dis, sys, src_mask,
    packed["emb_w"], packed["emb_b"],
    packed["wq"], packed["bq"], packed["wk"], packed["bk"],
    packed["wv"], packed["bv"], packed["wc"], packed["bc"],
    packed["g1"], packed["be1"],
    packed["w1"], packed["b1"], packed["w2"], packed["b2"],
    packed["g2"], packed["be2"])


# ------------------------------ parameters --------------------------------- #

def _linear_init(key, fan_in, fan_out):
  kw, kb = jax.random.split(key)
  bound = 1.0 / math.sqrt(fan_in)
  w = jax.random.uniform(kw, (fan_in, fan_out), jnp.float32, -bound, bound)
  b = jax.random.uniform(kb, (1, fan_out), jnp.float32, -bound, bound)
  return w, b


def init_raw_params(key, input_dim, d_model, ffn_hidden, n_layers):
  keys = jax.random.split(key, 1 + n_layers)
  emb_w, emb_b = _linear_init(keys[0], input_dim, d_model)
  layers = []
  for i in range(n_layers):
    lk = jax.random.split(keys[1 + i], 6)
    wq, bq = _linear_init(lk[0], d_model, d_model)
    wk, bk = _linear_init(lk[1], d_model, d_model)
    wv, bv = _linear_init(lk[2], d_model, d_model)
    wc, bc = _linear_init(lk[3], d_model, d_model)
    w1, b1 = _linear_init(lk[4], d_model, ffn_hidden)
    w2, b2 = _linear_init(lk[5], ffn_hidden, d_model)
    layers.append(dict(
        wq=wq, bq=bq, wk=wk, bk=bk, wv=wv, bv=bv, wc=wc, bc=bc,
        g1=jnp.ones((1, d_model), jnp.float32),
        be1=jnp.zeros((1, d_model), jnp.float32),
        w1=w1, b1=b1, w2=w2, b2=b2,
        g2=jnp.ones((1, d_model), jnp.float32),
        be2=jnp.zeros((1, d_model), jnp.float32)))
  return dict(emb_w=emb_w, emb_b=emb_b, layers=layers)


def pack_params(raw, n_head):
  """Stack per-layer weights, split Q/K/V/concat per head, cast MXU weights
  to bf16.  All reshapes happen here (host side), never inside the kernel."""
  layers = raw["layers"]
  L = len(layers)
  D = raw["emb_w"].shape[1]
  d_t = D // n_head
  bf16 = jnp.bfloat16

  def stack(name):
    return jnp.stack([lp[name] for lp in layers])

  def split_w(w):      # (L, D, D) -> (L, H, D, d_t), head-major output features
    return w.reshape(L, D, n_head, d_t).transpose(0, 2, 1, 3)

  def split_b(b):      # (L, 1, D) -> (L, H, 1, d_t)
    return b.reshape(L, n_head, d_t)[:, :, None, :]

  return dict(
      emb_w=raw["emb_w"].astype(bf16),
      emb_b=raw["emb_b"],
      wq=split_w(stack("wq")).astype(bf16), bq=split_b(stack("bq")),
      wk=split_w(stack("wk")).astype(bf16), bk=split_b(stack("bk")),
      wv=split_w(stack("wv")).astype(bf16), bv=split_b(stack("bv")),
      wc=stack("wc").reshape(L, n_head, d_t, D).astype(bf16),
      bc=stack("bc"),
      g1=stack("g1"), be1=stack("be1"),
      w1=stack("w1").astype(bf16), b1=stack("b1"),
      w2=stack("w2").astype(bf16), b2=stack("b2"),
      g2=stack("g2"), be2=stack("be2"))


# --------------------------- pure-JAX f32 reference ------------------------- #

def _layer_norm_ref(x, gamma, beta, eps=1e-12):
  mean = jnp.mean(x, -1, keepdims=True)
  var = jnp.mean((x - mean) ** 2, -1, keepdims=True)
  return gamma * (x - mean) / jnp.sqrt(var + eps) + beta


def encoder_ref(x_in, dis, sys, src_mask, raw, n_head):
  x = x_in @ raw["emb_w"] + raw["emb_b"]
  B, N, D = x.shape
  d_t = D // n_head
  eye = jnp.eye(N, dtype=bool)
  dis = jnp.where(eye[None, :, :], jnp.inf, dis)
  sys = jnp.where((dis < 1e-6) & (sys == 1.0), 0.0, sys)
  nmask_f = (((dis > 1e-6) & (dis < 0.9)) | (sys == 1.0)).astype(jnp.float32)
  counts = jnp.maximum(jnp.sum(nmask_f, -1, keepdims=True), 1.0)
  for lp in raw["layers"]:
    neighbor = jnp.einsum("bij,bjd->bid", nmask_f, x) / counts
    q = x @ lp["wq"] + lp["bq"]
    k = neighbor @ lp["wk"] + lp["bk"]
    v = neighbor @ lp["wv"] + lp["bv"]

    def split(t):
      return t.reshape(B, N, n_head, d_t).transpose(0, 2, 1, 3)

    qh, kh, vh = split(q), split(k), split(v)
    s = qh @ kh.transpose(0, 1, 3, 2) / math.sqrt(d_t)
    s = jnp.where(src_mask[:, None, :, :] == 0.0, -10000.0, s)
    p = jax.nn.softmax(s, axis=-1)
    ctx = (p @ vh).transpose(0, 2, 1, 3).reshape(B, N, D)
    attn = ctx @ lp["wc"] + lp["bc"]
    h1 = _layer_norm_ref(attn + x, lp["g1"], lp["be1"])
    f = jnp.maximum(h1 @ lp["w1"] + lp["b1"], 0.0) @ lp["w2"] + lp["b2"]
    x = _layer_norm_ref(f + h1, lp["g2"], lp["be2"])
  return x


# ----------------------------------- main ----------------------------------- #

if __name__ == "__main__":
  B, N = 2, 8            # batch, number of graph nodes
  input_dim = 6
  d_model = 32
  ffn_hidden = 64
  n_head = 4
  n_layers = 2

  key = jax.random.PRNGKey(0)
  k_x, k_dis, k_sys, k_mask, k_par = jax.random.split(key, 5)

  x = jax.random.normal(k_x, (B, N, input_dim), jnp.float32)
  # distances strictly > 1e-6 off-diagonal so every node has neighbors
  dis = jax.random.uniform(k_dis, (B, N, N), jnp.float32, 0.001, 1.2)
  sys = jax.random.bernoulli(k_sys, 0.3, (B, N, N)).astype(jnp.float32)
  src_mask = jax.random.bernoulli(k_mask, 0.9, (B, N, N)).astype(jnp.float32)

  raw = init_raw_params(k_par, input_dim, d_model, ffn_hidden, n_layers)
  packed = pack_params(raw, n_head)

  out = encoder_forward(x, dis, sys, src_mask, packed, n_layers, n_head)
  out = jax.block_until_ready(out)

  ref = encoder_ref(x, dis, sys, src_mask, raw, n_head)

  assert out.shape == (B, N, d_model)
  assert bool(jnp.all(jnp.isfinite(out)))
  # Loose tolerance: budget for bf16 MXU inputs + approx reciprocal vs f32 ref.
  assert bool(jnp.allclose(out, ref, atol=1e-1, rtol=1e-1)), \
      float(jnp.max(jnp.abs(out - ref)))
  print("KERNEL_OK")
</pallas_src>

<mosaic_0001>
module attributes {stable_mosaic.version = 11 : i64} {
  func.func @_fused_encoder_kernel(%arg0: i32, %arg1: memref<1x8x6xf32, #tpu.memory_space<vmem>>, %arg2: memref<1x8x8xf32, #tpu.memory_space<vmem>>, %arg3: memref<1x8x8xf32, #tpu.memory_space<vmem>>, %arg4: memref<1x8x8xf32, #tpu.memory_space<vmem>>, %arg5: memref<6x32xbf16, #tpu.memory_space<vmem>>, %arg6: memref<1x32xf32, #tpu.memory_space<vmem>>, %arg7: memref<2x4x32x8xbf16, #tpu.memory_space<vmem>>, %arg8: memref<2x4x1x8xf32, #tpu.memory_space<vmem>>, %arg9: memref<2x4x32x8xbf16, #tpu.memory_space<vmem>>, %arg10: memref<2x4x1x8xf32, #tpu.memory_space<vmem>>, %arg11: memref<2x4x32x8xbf16, #tpu.memory_space<vmem>>, %arg12: memref<2x4x1x8xf32, #tpu.memory_space<vmem>>, %arg13: memref<2x4x8x32xbf16, #tpu.memory_space<vmem>>, %arg14: memref<2x1x32xf32, #tpu.memory_space<vmem>>, %arg15: memref<2x1x32xf32, #tpu.memory_space<vmem>>, %arg16: memref<2x1x32xf32, #tpu.memory_space<vmem>>, %arg17: memref<2x32x64xbf16, #tpu.memory_space<vmem>>, %arg18: memref<2x1x64xf32, #tpu.memory_space<vmem>>, %arg19: memref<2x64x32xbf16, #tpu.memory_space<vmem>>, %arg20: memref<2x1x32xf32, #tpu.memory_space<vmem>>, %arg21: memref<2x1x32xf32, #tpu.memory_space<vmem>>, %arg22: memref<2x1x32xf32, #tpu.memory_space<vmem>>, %arg23: memref<1x8x32xf32, #tpu.memory_space<vmem>>) attributes {dimension_semantics = [#tpu.dimension_semantics<parallel>], iteration_bounds = array<i64: 2>, scalar_prefetch = 0 : i64, scratch_operands = 0 : i64, tpu.core_type = #tpu.core_type<tc>, window_params = [{transform_indices = @transform_0, window_bounds = array<i64: 1, 8, 6>}, {transform_indices = @transform_1, window_bounds = array<i64: 1, 8, 8>}, {transform_indices = @transform_2, window_bounds = array<i64: 1, 8, 8>}, {transform_indices = @transform_3, window_bounds = array<i64: 1, 8, 8>}, {pipeline_mode = #tpu.pipeline_mode<synchronous>, transform_indices = @transform_4, window_bounds = array<i64: 6, 32>}, {pipeline_mode = #tpu.pipeline_mode<synchronous>, transform_indices = @transform_5, window_bounds = array<i64: 1, 32>}, {pipeline_mode = #tpu.pipeline_mode<synchronous>, transform_indices = @transform_6, window_bounds = array<i64: 2, 4, 32, 8>}, {pipeline_mode = #tpu.pipeline_mode<synchronous>, transform_indices = @transform_7, window_bounds = array<i64: 2, 4, 1, 8>}, {pipeline_mode = #tpu.pipeline_mode<synchronous>, transform_indices = @transform_8, window_bounds = array<i64: 2, 4, 32, 8>}, {pipeline_mode = #tpu.pipeline_mode<synchronous>, transform_indices = @transform_9, window_bounds = array<i64: 2, 4, 1, 8>}, {pipeline_mode = #tpu.pipeline_mode<synchronous>, transform_indices = @transform_10, window_bounds = array<i64: 2, 4, 32, 8>}, {pipeline_mode = #tpu.pipeline_mode<synchronous>, transform_indices = @transform_11, window_bounds = array<i64: 2, 4, 1, 8>}, {pipeline_mode = #tpu.pipeline_mode<synchronous>, transform_indices = @transform_12, window_bounds = array<i64: 2, 4, 8, 32>}, {pipeline_mode = #tpu.pipeline_mode<synchronous>, transform_indices = @transform_13, window_bounds = array<i64: 2, 1, 32>}, {pipeline_mode = #tpu.pipeline_mode<synchronous>, transform_indices = @transform_14, window_bounds = array<i64: 2, 1, 32>}, {pipeline_mode = #tpu.pipeline_mode<synchronous>, transform_indices = @transform_15, window_bounds = array<i64: 2, 1, 32>}, {pipeline_mode = #tpu.pipeline_mode<synchronous>, transform_indices = @transform_16, window_bounds = array<i64: 2, 32, 64>}, {pipeline_mode = #tpu.pipeline_mode<synchronous>, transform_indices = @transform_17, window_bounds = array<i64: 2, 1, 64>}, {pipeline_mode = #tpu.pipeline_mode<synchronous>, transform_indices = @transform_18, window_bounds = array<i64: 2, 64, 32>}, {pipeline_mode = #tpu.pipeline_mode<synchronous>, transform_indices = @transform_19, window_bounds = array<i64: 2, 1, 32>}, {pipeline_mode = #tpu.pipeline_mode<synchronous>, transform_indices = @transform_20, window_bounds = array<i64: 2, 1, 32>}, {pipeline_mode = #tpu.pipeline_mode<synchronous>, transform_indices = @transform_21, window_bounds = array<i64: 2, 1, 32>}, {transform_indices = @transform_22, window_bounds = array<i64: 1, 8, 32>}]} {
    %c0 = arith.constant 0 : index
    %c0_0 = arith.constant 0 : index
    %c0_1 = arith.constant 0 : index
    %0 = vector.load %arg1[%c0, %c0_0, %c0_1] : memref<1x8x6xf32, #tpu.memory_space<vmem>>, vector<1x8x6xf32>
    %1 = vector.shape_cast %0 : vector<1x8x6xf32> to vector<8x6xf32>
    %c0_2 = arith.constant 0 : index
    %c0_3 = arith.constant 0 : index
    %c0_4 = arith.constant 0 : index
    %2 = vector.load %arg2[%c0_2, %c0_3, %c0_4] : memref<1x8x8xf32, #tpu.memory_space<vmem>>, vector<1x8x8xf32>
    %3 = vector.shape_cast %2 : vector<1x8x8xf32> to vector<8x8xf32>
    %c0_5 = arith.constant 0 : index
    %c0_6 = arith.constant 0 : index
    %c0_7 = arith.constant 0 : index
    %4 = vector.load %arg3[%c0_5, %c0_6, %c0_7] : memref<1x8x8xf32, #tpu.memory_space<vmem>>, vector<1x8x8xf32>
    %5 = vector.shape_cast %4 : vector<1x8x8xf32> to vector<8x8xf32>
    %c0_8 = arith.constant 0 : index
    %c0_9 = arith.constant 0 : index
    %c0_10 = arith.constant 0 : index
    %6 = vector.load %arg4[%c0_8, %c0_9, %c0_10] : memref<1x8x8xf32, #tpu.memory_space<vmem>>, vector<1x8x8xf32>
    %7 = vector.shape_cast %6 : vector<1x8x8xf32> to vector<8x8xf32>
    %8 = arith.truncf %1 : vector<8x6xf32> to vector<8x6xbf16>
    %c0_11 = arith.constant 0 : index
    %c0_12 = arith.constant 0 : index
    %9 = vector.load %arg5[%c0_11, %c0_12] : memref<6x32xbf16, #tpu.memory_space<vmem>>, vector<6x32xbf16>
    %cst = arith.constant dense<0.000000e+00> : vector<8x32xf32>
    %10 = tpu.matmul %8, %9, %cst {dimension_numbers = #tpu.dot_dimension_numbers<[1], [0], [0], [1], [0, 0, 1, 1], [], []>} : vector<8x6xbf16>, vector<6x32xbf16>, vector<8x32xf32> -> vector<8x32xf32>
    %c0_13 = arith.constant 0 : index
    %c0_14 = arith.constant 0 : index
    %11 = vector.load %arg6[%c0_13, %c0_14] : memref<1x32xf32, #tpu.memory_space<vmem>>, vector<1x32xf32>
    %12 = vector.broadcast %11 : vector<1x32xf32> to vector<8x32xf32>
    %13 = arith.addf %10, %12 : vector<8x32xf32>
    %14 = tpu.iota {dimensions = array<i32: 0>} : vector<8x8xi32>
    %15 = tpu.iota {dimensions = array<i32: 1>} : vector<8x8xi32>
    %16 = arith.cmpi eq, %14, %15 : vector<8x8xi32>
    %cst_15 = arith.constant 0x7F800000 : f32
    %17 = vector.broadcast %cst_15 : f32 to vector<8x8xf32>
    %18 = arith.select %16, %17, %3 : vector<8x8xi1>, vector<8x8xf32>
    %cst_16 = arith.constant 9.99999997E-7 : f32
    %19 = vector.broadcast %cst_16 : f32 to vector<8x8xf32>
    %20 = arith.cmpf olt, %18, %19 : vector<8x8xf32>
    %cst_17 = arith.constant 1.000000e+00 : f32
    %21 = vector.broadcast %cst_17 : f32 to vector<8x8xf32>
    %22 = arith.cmpf oeq, %5, %21 : vector<8x8xf32>
    %23 = arith.andi %20, %22 : vector<8x8xi1>
    %cst_18 = arith.constant 0.000000e+00 : f32
    %24 = vector.broadcast %cst_18 : f32 to vector<8x8xf32>
    %25 = arith.select %23, %24, %5 : vector<8x8xi1>, vector<8x8xf32>
    %cst_19 = arith.constant 9.99999997E-7 : f32
    %26 = vector.broadcast %cst_19 : f32 to vector<8x8xf32>
    %27 = arith.cmpf ogt, %18, %26 : vector<8x8xf32>
    %cst_20 = arith.constant 0.899999976 : f32
    %28 = vector.broadcast %cst_20 : f32 to vector<8x8xf32>
    %29 = arith.cmpf olt, %18, %28 : vector<8x8xf32>
    %30 = arith.andi %27, %29 : vector<8x8xi1>
    %cst_21 = arith.constant 1.000000e+00 : f32
    %31 = vector.broadcast %cst_21 : f32 to vector<8x8xf32>
    %32 = arith.cmpf oeq, %25, %31 : vector<8x8xf32>
    %33 = arith.ori %30, %32 : vector<8x8xi1>
    %34 = arith.extui %33 : vector<8x8xi1> to vector<8x8xi32>
    %35 = arith.sitofp %34 : vector<8x8xi32> to vector<8x8xf32>
    %36 = arith.truncf %35 : vector<8x8xf32> to vector<8x8xbf16>
    %cst_22 = arith.constant dense<0.000000e+00> : vector<8xf32>
    %37 = vector.multi_reduction <add>, %35, %cst_22 [1] : vector<8x8xf32> to vector<8xf32>
    %38 = vector.shape_cast %37 : vector<8xf32> to vector<8x1xf32>
    %cst_23 = arith.constant 1.000000e+00 : f32
    %39 = vector.broadcast %cst_23 : f32 to vector<8x1xf32>
    %40 = arith.maximumf %38, %39 : vector<8x1xf32>
    %41 = tpu.reciprocal %40 {approx = true} : vector<8x1xf32> -> vector<8x1xf32>
    %cst_24 = arith.constant 0.000000e+00 : f32
    %42 = vector.broadcast %cst_24 : f32 to vector<8x8xf32>
    %43 = arith.cmpf oeq, %7, %42 : vector<8x8xf32>
    %44 = vector.shape_cast %43 : vector<8x8xi1> to vector<1x8x8xi1>
    %45 = vector.shape_cast %44 : vector<1x8x8xi1> to vector<1x8x8xi1>
    %46 = vector.broadcast %45 : vector<1x8x8xi1> to vector<4x8x8xi1>
    %47 = arith.truncf %13 : vector<8x32xf32> to vector<8x32xbf16>
    %cst_25 = arith.constant dense<0.000000e+00> : vector<8x32xf32>
    %48 = tpu.matmul %36, %47, %cst_25 {dimension_numbers = #tpu.dot_dimension_numbers<[1], [0], [0], [1], [0, 0, 1, 1], [], []>} : vector<8x8xbf16>, vector<8x32xbf16>, vector<8x32xf32> -> vector<8x32xf32>
    %49 = vector.broadcast %41 : vector<8x1xf32> to vector<8x32xf32>
    %50 = arith.mulf %48, %49 : vector<8x32xf32>
    %51 = arith.truncf %13 : vector<8x32xf32> to vector<8x32xbf16>
    %52 = vector.shape_cast %51 : vector<8x32xbf16> to vector<1x8x32xbf16>
    %53 = vector.shape_cast %52 : vector<1x8x32xbf16> to vector<1x8x32xbf16>
    %54 = vector.broadcast %53 : vector<1x8x32xbf16> to vector<4x8x32xbf16>
    %55 = arith.truncf %50 : vector<8x32xf32> to vector<8x32xbf16>
    %56 = vector.shape_cast %55 : vector<8x32xbf16> to vector<1x8x32xbf16>
    %57 = vector.shape_cast %56 : vector<1x8x32xbf16> to vector<1x8x32xbf16>
    %58 = vector.broadcast %57 : vector<1x8x32xbf16> to vector<4x8x32xbf16>
    %c0_26 = arith.constant 0 : index
    %c0_27 = arith.constant 0 : index
    %c0_28 = arith.constant 0 : index
    %c0_29 = arith.constant 0 : index
    %59 = vector.load %arg7[%c0_26, %c0_27, %c0_28, %c0_29] : memref<2x4x32x8xbf16, #tpu.memory_space<vmem>>, vector<1x4x32x8xbf16>
    %60 = vector.shape_cast %59 : vector<1x4x32x8xbf16> to vector<4x32x8xbf16>
    "tpu.trace_start"() <{level = 10 : i32, message = "hnd,hdt->hnt"}> : () -> ()
    %cst_30 = arith.constant dense<0.000000e+00> : vector<4x8x8xf32>
    %61 = tpu.matmul %54, %60, %cst_30 {dimension_numbers = #tpu.dot_dimension_numbers<[2], [1], [1], [2], [0, 0, 0, 1, 1, 2], [0], [0]>} : vector<4x8x32xbf16>, vector<4x32x8xbf16>, vector<4x8x8xf32> -> vector<4x8x8xf32>
    "tpu.trace_stop"() : () -> ()
    %c0_31 = arith.constant 0 : index
    %c0_32 = arith.constant 0 : index
    %c0_33 = arith.constant 0 : index
    %c0_34 = arith.constant 0 : index
    %62 = vector.load %arg8[%c0_31, %c0_32, %c0_33, %c0_34] : memref<2x4x1x8xf32, #tpu.memory_space<vmem>>, vector<1x4x1x8xf32>
    %63 = vector.shape_cast %62 : vector<1x4x1x8xf32> to vector<4x1x8xf32>
    %64 = vector.broadcast %63 : vector<4x1x8xf32> to vector<4x8x8xf32>
    %65 = arith.addf %61, %64 : vector<4x8x8xf32>
    %c0_35 = arith.constant 0 : index
    %c0_36 = arith.constant 0 : index
    %c0_37 = arith.constant 0 : index
    %c0_38 = arith.constant 0 : index
    %66 = vector.load %arg9[%c0_35, %c0_36, %c0_37, %c0_38] : memref<2x4x32x8xbf16, #tpu.memory_space<vmem>>, vector<1x4x32x8xbf16>
    %67 = vector.shape_cast %66 : vector<1x4x32x8xbf16> to vector<4x32x8xbf16>
    "tpu.trace_start"() <{level = 10 : i32, message = "hnd,hdt->hnt"}> : () -> ()
    %cst_39 = arith.constant dense<0.000000e+00> : vector<4x8x8xf32>
    %68 = tpu.matmul %58, %67, %cst_39 {dimension_numbers = #tpu.dot_dimension_numbers<[2], [1], [1], [2], [0, 0, 0, 1, 1, 2], [0], [0]>} : vector<4x8x32xbf16>, vector<4x32x8xbf16>, vector<4x8x8xf32> -> vector<4x8x8xf32>
    "tpu.trace_stop"() : () -> ()
    %c0_40 = arith.constant 0 : index
    %c0_41 = arith.constant 0 : index
    %c0_42 = arith.constant 0 : index
    %c0_43 = arith.constant 0 : index
    %69 = vector.load %arg10[%c0_40, %c0_41, %c0_42, %c0_43] : memref<2x4x1x8xf32, #tpu.memory_space<vmem>>, vector<1x4x1x8xf32>
    %70 = vector.shape_cast %69 : vector<1x4x1x8xf32> to vector<4x1x8xf32>
    %71 = vector.broadcast %70 : vector<4x1x8xf32> to vector<4x8x8xf32>
    %72 = arith.addf %68, %71 : vector<4x8x8xf32>
    %c0_44 = arith.constant 0 : index
    %c0_45 = arith.constant 0 : index
    %c0_46 = arith.constant 0 : index
    %c0_47 = arith.constant 0 : index
    %73 = vector.load %arg11[%c0_44, %c0_45, %c0_46, %c0_47] : memref<2x4x32x8xbf16, #tpu.memory_space<vmem>>, vector<1x4x32x8xbf16>
    %74 = vector.shape_cast %73 : vector<1x4x32x8xbf16> to vector<4x32x8xbf16>
    "tpu.trace_start"() <{level = 10 : i32, message = "hnd,hdt->hnt"}> : () -> ()
    %cst_48 = arith.constant dense<0.000000e+00> : vector<4x8x8xf32>
    %75 = tpu.matmul %58, %74, %cst_48 {dimension_numbers = #tpu.dot_dimension_numbers<[2], [1], [1], [2], [0, 0, 0, 1, 1, 2], [0], [0]>} : vector<4x8x32xbf16>, vector<4x32x8xbf16>, vector<4x8x8xf32> -> vector<4x8x8xf32>
    "tpu.trace_stop"() : () -> ()
    %c0_49 = arith.constant 0 : index
    %c0_50 = arith.constant 0 : index
    %c0_51 = arith.constant 0 : index
    %c0_52 = arith.constant 0 : index
    %76 = vector.load %arg12[%c0_49, %c0_50, %c0_51, %c0_52] : memref<2x4x1x8xf32, #tpu.memory_space<vmem>>, vector<1x4x1x8xf32>
    %77 = vector.shape_cast %76 : vector<1x4x1x8xf32> to vector<4x1x8xf32>
    %78 = vector.broadcast %77 : vector<4x1x8xf32> to vector<4x8x8xf32>
    %79 = arith.addf %75, %78 : vector<4x8x8xf32>
    %80 = arith.truncf %65 : vector<4x8x8xf32> to vector<4x8x8xbf16>
    %81 = arith.truncf %72 : vector<4x8x8xf32> to vector<4x8x8xbf16>
    "tpu.trace_start"() <{level = 10 : i32, message = "hqt,hkt->hqk"}> : () -> ()
    %cst_53 = arith.constant dense<0.000000e+00> : vector<4x8x8xf32>
    %82 = tpu.matmul %80, %81, %cst_53 {dimension_numbers = #tpu.dot_dimension_numbers<[2], [2], [1], [1], [0, 0, 0, 1, 1, 1], [0], [0]>} : vector<4x8x8xbf16>, vector<4x8x8xbf16>, vector<4x8x8xf32> -> vector<4x8x8xf32>
    "tpu.trace_stop"() : () -> ()
    %cst_54 = arith.constant 0.353553385 : f32
    %83 = vector.broadcast %cst_54 : f32 to vector<4x8x8xf32>
    %84 = arith.mulf %82, %83 : vector<4x8x8xf32>
    %cst_55 = arith.constant -1.000000e+04 : f32
    %85 = vector.broadcast %cst_55 : f32 to vector<4x8x8xf32>
    %86 = arith.select %46, %85, %84 : vector<4x8x8xi1>, vector<4x8x8xf32>
    %cst_56 = arith.constant dense<0xFF800000> : vector<4x8xf32>
    %87 = vector.multi_reduction <maximumf>, %86, %cst_56 [2] : vector<4x8x8xf32> to vector<4x8xf32>
    %88 = vector.shape_cast %87 : vector<4x8xf32> to vector<4x8x1xf32>
    %89 = vector.broadcast %88 : vector<4x8x1xf32> to vector<4x8x8xf32>
    %90 = arith.subf %86, %89 : vector<4x8x8xf32>
    %91 = math.exp %90 : vector<4x8x8xf32>
    %cst_57 = arith.constant dense<0.000000e+00> : vector<4x8xf32>
    %92 = vector.multi_reduction <add>, %91, %cst_57 [2] : vector<4x8x8xf32> to vector<4x8xf32>
    %93 = vector.shape_cast %92 : vector<4x8xf32> to vector<4x8x1xf32>
    %94 = tpu.reciprocal %93 {approx = true} : vector<4x8x1xf32> -> vector<4x8x1xf32>
    %95 = vector.broadcast %94 : vector<4x8x1xf32> to vector<4x8x8xf32>
    %96 = arith.mulf %91, %95 : vector<4x8x8xf32>
    %97 = arith.truncf %96 : vector<4x8x8xf32> to vector<4x8x8xbf16>
    %98 = arith.truncf %79 : vector<4x8x8xf32> to vector<4x8x8xbf16>
    "tpu.trace_start"() <{level = 10 : i32, message = "hqk,hkt->hqt"}> : () -> ()
    %cst_58 = arith.constant dense<0.000000e+00> : vector<4x8x8xf32>
    %99 = tpu.matmul %97, %98, %cst_58 {dimension_numbers = #tpu.dot_dimension_numbers<[2], [1], [1], [2], [0, 0, 0, 1, 1, 2], [0], [0]>} : vector<4x8x8xbf16>, vector<4x8x8xbf16>, vector<4x8x8xf32> -> vector<4x8x8xf32>
    "tpu.trace_stop"() : () -> ()
    %100 = arith.truncf %99 : vector<4x8x8xf32> to vector<4x8x8xbf16>
    %c0_59 = arith.constant 0 : index
    %c0_60 = arith.constant 0 : index
    %c0_61 = arith.constant 0 : index
    %c0_62 = arith.constant 0 : index
    %101 = vector.load %arg13[%c0_59, %c0_60, %c0_61, %c0_62] : memref<2x4x8x32xbf16, #tpu.memory_space<vmem>>, vector<1x4x8x32xbf16>
    %102 = vector.shape_cast %101 : vector<1x4x8x32xbf16> to vector<4x8x32xbf16>
    "tpu.trace_start"() <{level = 10 : i32, message = "hnt,htd->hnd"}> : () -> ()
    %cst_63 = arith.constant dense<0.000000e+00> : vector<4x8x32xf32>
    %103 = tpu.matmul %100, %102, %cst_63 {dimension_numbers = #tpu.dot_dimension_numbers<[2], [1], [1], [2], [0, 0, 0, 1, 1, 2], [0], [0]>} : vector<4x8x8xbf16>, vector<4x8x32xbf16>, vector<4x8x32xf32> -> vector<4x8x32xf32>
    "tpu.trace_stop"() : () -> ()
    %cst_64 = arith.constant dense<0.000000e+00> : vector<8x32xf32>
    %104 = vector.multi_reduction <add>, %103, %cst_64 [0] : vector<4x8x32xf32> to vector<8x32xf32>
    %c0_65 = arith.constant 0 : index
    %c0_66 = arith.constant 0 : index
    %c0_67 = arith.constant 0 : index
    %105 = vector.load %arg14[%c0_65, %c0_66, %c0_67] : memref<2x1x32xf32, #tpu.memory_space<vmem>>, vector<1x1x32xf32>
    %106 = vector.shape_cast %105 : vector<1x1x32xf32> to vector<1x32xf32>
    %107 = vector.broadcast %106 : vector<1x32xf32> to vector<8x32xf32>
    %108 = arith.addf %104, %107 : vector<8x32xf32>
    %109 = arith.addf %108, %13 : vector<8x32xf32>
    %cst_68 = arith.constant dense<0.000000e+00> : vector<8xf32>
    %110 = vector.multi_reduction <add>, %109, %cst_68 [1] : vector<8x32xf32> to vector<8xf32>
    %111 = vector.shape_cast %110 : vector<8xf32> to vector<8x1xf32>
    %cst_69 = arith.constant 3.200000e+01 : f32
    %112 = vector.broadcast %cst_69 : f32 to vector<8x1xf32>
    %113 = arith.divf %111, %112 : vector<8x1xf32>
    %114 = vector.broadcast %113 : vector<8x1xf32> to vector<8x32xf32>
    %115 = arith.subf %109, %114 : vector<8x32xf32>
    %116 = arith.mulf %115, %115 : vector<8x32xf32>
    %cst_70 = arith.constant dense<0.000000e+00> : vector<8xf32>
    %117 = vector.multi_reduction <add>, %116, %cst_70 [1] : vector<8x32xf32> to vector<8xf32>
    %118 = vector.shape_cast %117 : vector<8xf32> to vector<8x1xf32>
    %cst_71 = arith.constant 3.200000e+01 : f32
    %119 = vector.broadcast %cst_71 : f32 to vector<8x1xf32>
    %120 = arith.divf %118, %119 : vector<8x1xf32>
    %121 = vector.broadcast %113 : vector<8x1xf32> to vector<8x32xf32>
    %122 = arith.subf %109, %121 : vector<8x32xf32>
    %cst_72 = arith.constant 9.99999996E-13 : f32
    %123 = vector.broadcast %cst_72 : f32 to vector<8x1xf32>
    %124 = arith.addf %120, %123 : vector<8x1xf32>
    %125 = math.rsqrt %124 : vector<8x1xf32>
    %126 = vector.broadcast %125 : vector<8x1xf32> to vector<8x32xf32>
    %127 = arith.mulf %122, %126 : vector<8x32xf32>
    %c0_73 = arith.constant 0 : index
    %c0_74 = arith.constant 0 : index
    %c0_75 = arith.constant 0 : index
    %128 = vector.load %arg15[%c0_73, %c0_74, %c0_75] : memref<2x1x32xf32, #tpu.memory_space<vmem>>, vector<1x1x32xf32>
    %129 = vector.shape_cast %128 : vector<1x1x32xf32> to vector<1x32xf32>
    %130 = vector.broadcast %129 : vector<1x32xf32> to vector<8x32xf32>
    %131 = arith.mulf %130, %127 : vector<8x32xf32>
    %c0_76 = arith.constant 0 : index
    %c0_77 = arith.constant 0 : index
    %c0_78 = arith.constant 0 : index
    %132 = vector.load %arg16[%c0_76, %c0_77, %c0_78] : memref<2x1x32xf32, #tpu.memory_space<vmem>>, vector<1x1x32xf32>
    %133 = vector.shape_cast %132 : vector<1x1x32xf32> to vector<1x32xf32>
    %134 = vector.broadcast %133 : vector<1x32xf32> to vector<8x32xf32>
    %135 = arith.addf %131, %134 : vector<8x32xf32>
    %136 = arith.truncf %135 : vector<8x32xf32> to vector<8x32xbf16>
    %c0_79 = arith.constant 0 : index
    %c0_80 = arith.constant 0 : index
    %c0_81 = arith.constant 0 : index
    %137 = vector.load %arg17[%c0_79, %c0_80, %c0_81] : memref<2x32x64xbf16, #tpu.memory_space<vmem>>, vector<1x32x64xbf16>
    %138 = vector.shape_cast %137 : vector<1x32x64xbf16> to vector<32x64xbf16>
    %cst_82 = arith.constant dense<0.000000e+00> : vector<8x64xf32>
    %139 = tpu.matmul %136, %138, %cst_82 {dimension_numbers = #tpu.dot_dimension_numbers<[1], [0], [0], [1], [0, 0, 1, 1], [], []>} : vector<8x32xbf16>, vector<32x64xbf16>, vector<8x64xf32> -> vector<8x64xf32>
    %c0_83 = arith.constant 0 : index
    %c0_84 = arith.constant 0 : index
    %c0_85 = arith.constant 0 : index
    %140 = vector.load %arg18[%c0_83, %c0_84, %c0_85] : memref<2x1x64xf32, #tpu.memory_space<vmem>>, vector<1x1x64xf32>
    %141 = vector.shape_cast %140 : vector<1x1x64xf32> to vector<1x64xf32>
    %142 = vector.broadcast %141 : vector<1x64xf32> to vector<8x64xf32>
    %143 = arith.addf %139, %142 : vector<8x64xf32>
    %cst_86 = arith.constant 0.000000e+00 : f32
    %144 = vector.broadcast %cst_86 : f32 to vector<8x64xf32>
    %145 = arith.maximumf %143, %144 : vector<8x64xf32>
    %146 = arith.truncf %145 : vector<8x64xf32> to vector<8x64xbf16>
    %c0_87 = arith.constant 0 : index
    %c0_88 = arith.constant 0 : index
    %c0_89 = arith.constant 0 : index
    %147 = vector.load %arg19[%c0_87, %c0_88, %c0_89] : memref<2x64x32xbf16, #tpu.memory_space<vmem>>, vector<1x64x32xbf16>
    %148 = vector.shape_cast %147 : vector<1x64x32xbf16> to vector<64x32xbf16>
    %cst_90 = arith.constant dense<0.000000e+00> : vector<8x32xf32>
    %149 = tpu.matmul %146, %148, %cst_90 {dimension_numbers = #tpu.dot_dimension_numbers<[1], [0], [0], [1], [0, 0, 1, 1], [], []>} : vector<8x64xbf16>, vector<64x32xbf16>, vector<8x32xf32> -> vector<8x32xf32>
    %c0_91 = arith.constant 0 : index
    %c0_92 = arith.constant 0 : index
    %c0_93 = arith.constant 0 : index
    %150 = vector.load %arg20[%c0_91, %c0_92, %c0_93] : memref<2x1x32xf32, #tpu.memory_space<vmem>>, vector<1x1x32xf32>
    %151 = vector.shape_cast %150 : vector<1x1x32xf32> to vector<1x32xf32>
    %152 = vector.broadcast %151 : vector<1x32xf32> to vector<8x32xf32>
    %153 = arith.addf %149, %152 : vector<8x32xf32>
    %154 = arith.addf %153, %135 : vector<8x32xf32>
    %cst_94 = arith.constant dense<0.000000e+00> : vector<8xf32>
    %155 = vector.multi_reduction <add>, %154, %cst_94 [1] : vector<8x32xf32> to vector<8xf32>
    %156 = vector.shape_cast %155 : vector<8xf32> to vector<8x1xf32>
    %cst_95 = arith.constant 3.200000e+01 : f32
    %157 = vector.broadcast %cst_95 : f32 to vector<8x1xf32>
    %158 = arith.divf %156, %157 : vector<8x1xf32>
    %159 = vector.broadcast %158 : vector<8x1xf32> to vector<8x32xf32>
    %160 = arith.subf %154, %159 : vector<8x32xf32>
    %161 = arith.mulf %160, %160 : vector<8x32xf32>
    %cst_96 = arith.constant dense<0.000000e+00> : vector<8xf32>
    %162 = vector.multi_reduction <add>, %161, %cst_96 [1] : vector<8x32xf32> to vector<8xf32>
    %163 = vector.shape_cast %162 : vector<8xf32> to vector<8x1xf32>
    %cst_97 = arith.constant 3.200000e+01 : f32
    %164 = vector.broadcast %cst_97 : f32 to vector<8x1xf32>
    %165 = arith.divf %163, %164 : vector<8x1xf32>
    %166 = vector.broadcast %158 : vector<8x1xf32> to vector<8x32xf32>
    %167 = arith.subf %154, %166 : vector<8x32xf32>
    %cst_98 = arith.constant 9.99999996E-13 : f32
    %168 = vector.broadcast %cst_98 : f32 to vector<8x1xf32>
    %169 = arith.addf %165, %168 : vector<8x1xf32>
    %170 = math.rsqrt %169 : vector<8x1xf32>
    %171 = vector.broadcast %170 : vector<8x1xf32> to vector<8x32xf32>
    %172 = arith.mulf %167, %171 : vector<8x32xf32>
    %c0_99 = arith.constant 0 : index
    %c0_100 = arith.constant 0 : index
    %c0_101 = arith.constant 0 : index
    %173 = vector.load %arg21[%c0_99, %c0_100, %c0_101] : memref<2x1x32xf32, #tpu.memory_space<vmem>>, vector<1x1x32xf32>
    %174 = vector.shape_cast %173 : vector<1x1x32xf32> to vector<1x32xf32>
    %175 = vector.broadcast %174 : vector<1x32xf32> to vector<8x32xf32>
    %176 = arith.mulf %175, %172 : vector<8x32xf32>
    %c0_102 = arith.constant 0 : index
    %c0_103 = arith.constant 0 : index
    %c0_104 = arith.constant 0 : index
    %177 = vector.load %arg22[%c0_102, %c0_103, %c0_104] : memref<2x1x32xf32, #tpu.memory_space<vmem>>, vector<1x1x32xf32>
    %178 = vector.shape_cast %177 : vector<1x1x32xf32> to vector<1x32xf32>
    %179 = vector.broadcast %178 : vector<1x32xf32> to vector<8x32xf32>
    %180 = arith.addf %176, %179 : vector<8x32xf32>
    %181 = arith.truncf %180 : vector<8x32xf32> to vector<8x32xbf16>
    %cst_105 = arith.constant dense<0.000000e+00> : vector<8x32xf32>
    %182 = tpu.matmul %36, %181, %cst_105 {dimension_numbers = #tpu.dot_dimension_numbers<[1], [0], [0], [1], [0, 0, 1, 1], [], []>} : vector<8x8xbf16>, vector<8x32xbf16>, vector<8x32xf32> -> vector<8x32xf32>
    %183 = vector.broadcast %41 : vector<8x1xf32> to vector<8x32xf32>
    %184 = arith.mulf %182, %183 : vector<8x32xf32>
    %185 = arith.truncf %180 : vector<8x32xf32> to vector<8x32xbf16>
    %186 = vector.shape_cast %185 : vector<8x32xbf16> to vector<1x8x32xbf16>
    %187 = vector.shape_cast %186 : vector<1x8x32xbf16> to vector<1x8x32xbf16>
    %188 = vector.broadcast %187 : vector<1x8x32xbf16> to vector<4x8x32xbf16>
    %189 = arith.truncf %184 : vector<8x32xf32> to vector<8x32xbf16>
    %190 = vector.shape_cast %189 : vector<8x32xbf16> to vector<1x8x32xbf16>
    %191 = vector.shape_cast %190 : vector<1x8x32xbf16> to vector<1x8x32xbf16>
    %192 = vector.broadcast %191 : vector<1x8x32xbf16> to vector<4x8x32xbf16>
    %c1 = arith.constant 1 : index
    %c0_106 = arith.constant 0 : index
    %c0_107 = arith.constant 0 : index
    %c0_108 = arith.constant 0 : index
    %193 = vector.load %arg7[%c1, %c0_106, %c0_107, %c0_108] : memref<2x4x32x8xbf16, #tpu.memory_space<vmem>>, vector<1x4x32x8xbf16>
    %194 = vector.shape_cast %193 : vector<1x4x32x8xbf16> to vector<4x32x8xbf16>
    "tpu.trace_start"() <{level = 10 : i32, message = "hnd,hdt->hnt"}> : () -> ()
    %cst_109 = arith.constant dense<0.000000e+00> : vector<4x8x8xf32>
    %195 = tpu.matmul %188, %194, %cst_109 {dimension_numbers = #tpu.dot_dimension_numbers<[2], [1], [1], [2], [0, 0, 0, 1, 1, 2], [0], [0]>} : vector<4x8x32xbf16>, vector<4x32x8xbf16>, vector<4x8x8xf32> -> vector<4x8x8xf32>
    "tpu.trace_stop"() : () -> ()
    %c1_110 = arith.constant 1 : index
    %c0_111 = arith.constant 0 : index
    %c0_112 = arith.constant 0 : index
    %c0_113 = arith.constant 0 : index
    %196 = vector.load %arg8[%c1_110, %c0_111, %c0_112, %c0_113] : memref<2x4x1x8xf32, #tpu.memory_space<vmem>>, vector<1x4x1x8xf32>
    %197 = vector.shape_cast %196 : vector<1x4x1x8xf32> to vector<4x1x8xf32>
    %198 = vector.broadcast %197 : vector<4x1x8xf32> to vector<4x8x8xf32>
    %199 = arith.addf %195, %198 : vector<4x8x8xf32>
    %c1_114 = arith.constant 1 : index
    %c0_115 = arith.constant 0 : index
    %c0_116 = arith.constant 0 : index
    %c0_117 = arith.constant 0 : index
    %200 = vector.load %arg9[%c1_114, %c0_115, %c0_116, %c0_117] : memref<2x4x32x8xbf16, #tpu.memory_space<vmem>>, vector<1x4x32x8xbf16>
    %201 = vector.shape_cast %200 : vector<1x4x32x8xbf16> to vector<4x32x8xbf16>
    "tpu.trace_start"() <{level = 10 : i32, message = "hnd,hdt->hnt"}> : () -> ()
    %cst_118 = arith.constant dense<0.000000e+00> : vector<4x8x8xf32>
    %202 = tpu.matmul %192, %201, %cst_118 {dimension_numbers = #tpu.dot_dimension_numbers<[2], [1], [1], [2], [0, 0, 0, 1, 1, 2], [0], [0]>} : vector<4x8x32xbf16>, vector<4x32x8xbf16>, vector<4x8x8xf32> -> vector<4x8x8xf32>
    "tpu.trace_stop"() : () -> ()
    %c1_119 = arith.constant 1 : index
    %c0_120 = arith.constant 0 : index
    %c0_121 = arith.constant 0 : index
    %c0_122 = arith.constant 0 : index
    %203 = vector.load %arg10[%c1_119, %c0_120, %c0_121, %c0_122] : memref<2x4x1x8xf32, #tpu.memory_space<vmem>>, vector<1x4x1x8xf32>
    %204 = vector.shape_cast %203 : vector<1x4x1x8xf32> to vector<4x1x8xf32>
    %205 = vector.broadcast %204 : vector<4x1x8xf32> to vector<4x8x8xf32>
    %206 = arith.addf %202, %205 : vector<4x8x8xf32>
    %c1_123 = arith.constant 1 : index
    %c0_124 = arith.constant 0 : index
    %c0_125 = arith.constant 0 : index
    %c0_126 = arith.constant 0 : index
    %207 = vector.load %arg11[%c1_123, %c0_124, %c0_125, %c0_126] : memref<2x4x32x8xbf16, #tpu.memory_space<vmem>>, vector<1x4x32x8xbf16>
    %208 = vector.shape_cast %207 : vector<1x4x32x8xbf16> to vector<4x32x8xbf16>
    "tpu.trace_start"() <{level = 10 : i32, message = "hnd,hdt->hnt"}> : () -> ()
    %cst_127 = arith.constant dense<0.000000e+00> : vector<4x8x8xf32>
    %209 = tpu.matmul %192, %208, %cst_127 {dimension_numbers = #tpu.dot_dimension_numbers<[2], [1], [1], [2], [0, 0, 0, 1, 1, 2], [0], [0]>} : vector<4x8x32xbf16>, vector<4x32x8xbf16>, vector<4x8x8xf32> -> vector<4x8x8xf32>
    "tpu.trace_stop"() : () -> ()
    %c1_128 = arith.constant 1 : index
    %c0_129 = arith.constant 0 : index
    %c0_130 = arith.constant 0 : index
    %c0_131 = arith.constant 0 : index
    %210 = vector.load %arg12[%c1_128, %c0_129, %c0_130, %c0_131] : memref<2x4x1x8xf32, #tpu.memory_space<vmem>>, vector<1x4x1x8xf32>
    %211 = vector.shape_cast %210 : vector<1x4x1x8xf32> to vector<4x1x8xf32>
    %212 = vector.broadcast %211 : vector<4x1x8xf32> to vector<4x8x8xf32>
    %213 = arith.addf %209, %212 : vector<4x8x8xf32>
    %214 = arith.truncf %199 : vector<4x8x8xf32> to vector<4x8x8xbf16>
    %215 = arith.truncf %206 : vector<4x8x8xf32> to vector<4x8x8xbf16>
    "tpu.trace_start"() <{level = 10 : i32, message = "hqt,hkt->hqk"}> : () -> ()
    %cst_132 = arith.constant dense<0.000000e+00> : vector<4x8x8xf32>
    %216 = tpu.matmul %214, %215, %cst_132 {dimension_numbers = #tpu.dot_dimension_numbers<[2], [2], [1], [1], [0, 0, 0, 1, 1, 1], [0], [0]>} : vector<4x8x8xbf16>, vector<4x8x8xbf16>, vector<4x8x8xf32> -> vector<4x8x8xf32>
    "tpu.trace_stop"() : () -> ()
    %cst_133 = arith.constant 0.353553385 : f32
    %217 = vector.broadcast %cst_133 : f32 to vector<4x8x8xf32>
    %218 = arith.mulf %216, %217 : vector<4x8x8xf32>
    %cst_134 = arith.constant -1.000000e+04 : f32
    %219 = vector.broadcast %cst_134 : f32 to vector<4x8x8xf32>
    %220 = arith.select %46, %219, %218 : vector<4x8x8xi1>, vector<4x8x8xf32>
    %cst_135 = arith.constant dense<0xFF800000> : vector<4x8xf32>
    %221 = vector.multi_reduction <maximumf>, %220, %cst_135 [2] : vector<4x8x8xf32> to vector<4x8xf32>
    %222 = vector.shape_cast %221 : vector<4x8xf32> to vector<4x8x1xf32>
    %223 = vector.broadcast %222 : vector<4x8x1xf32> to vector<4x8x8xf32>
    %224 = arith.subf %220, %223 : vector<4x8x8xf32>
    %225 = math.exp %224 : vector<4x8x8xf32>
    %cst_136 = arith.constant dense<0.000000e+00> : vector<4x8xf32>
    %226 = vector.multi_reduction <add>, %225, %cst_136 [2] : vector<4x8x8xf32> to vector<4x8xf32>
    %227 = vector.shape_cast %226 : vector<4x8xf32> to vector<4x8x1xf32>
    %228 = tpu.reciprocal %227 {approx = true} : vector<4x8x1xf32> -> vector<4x8x1xf32>
    %229 = vector.broadcast %228 : vector<4x8x1xf32> to vector<4x8x8xf32>
    %230 = arith.mulf %225, %229 : vector<4x8x8xf32>
    %231 = arith.truncf %230 : vector<4x8x8xf32> to vector<4x8x8xbf16>
    %232 = arith.truncf %213 : vector<4x8x8xf32> to vector<4x8x8xbf16>
    "tpu.trace_start"() <{level = 10 : i32, message = "hqk,hkt->hqt"}> : () -> ()
    %cst_137 = arith.constant dense<0.000000e+00> : vector<4x8x8xf32>
    %233 = tpu.matmul %231, %232, %cst_137 {dimension_numbers = #tpu.dot_dimension_numbers<[2], [1], [1], [2], [0, 0, 0, 1, 1, 2], [0], [0]>} : vector<4x8x8xbf16>, vector<4x8x8xbf16>, vector<4x8x8xf32> -> vector<4x8x8xf32>
    "tpu.trace_stop"() : () -> ()
    %234 = arith.truncf %233 : vector<4x8x8xf32> to vector<4x8x8xbf16>
    %c1_138 = arith.constant 1 : index
    %c0_139 = arith.constant 0 : index
    %c0_140 = arith.constant 0 : index
    %c0_141 = arith.constant 0 : index
    %235 = vector.load %arg13[%c1_138, %c0_139, %c0_140, %c0_141] : memref<2x4x8x32xbf16, #tpu.memory_space<vmem>>, vector<1x4x8x32xbf16>
    %236 = vector.shape_cast %235 : vector<1x4x8x32xbf16> to vector<4x8x32xbf16>
    "tpu.trace_start"() <{level = 10 : i32, message = "hnt,htd->hnd"}> : () -> ()
    %cst_142 = arith.constant dense<0.000000e+00> : vector<4x8x32xf32>
    %237 = tpu.matmul %234, %236, %cst_142 {dimension_numbers = #tpu.dot_dimension_numbers<[2], [1], [1], [2], [0, 0, 0, 1, 1, 2], [0], [0]>} : vector<4x8x8xbf16>, vector<4x8x32xbf16>, vector<4x8x32xf32> -> vector<4x8x32xf32>
    "tpu.trace_stop"() : () -> ()
    %cst_143 = arith.constant dense<0.000000e+00> : vector<8x32xf32>
    %238 = vector.multi_reduction <add>, %237, %cst_143 [0] : vector<4x8x32xf32> to vector<8x32xf32>
    %c1_144 = arith.constant 1 : index
    %c0_145 = arith.constant 0 : index
    %c0_146 = arith.constant 0 : index
    %239 = vector.load %arg14[%c1_144, %c0_145, %c0_146] : memref<2x1x32xf32, #tpu.memory_space<vmem>>, vector<1x1x32xf32>
    %240 = vector.shape_cast %239 : vector<1x1x32xf32> to vector<1x32xf32>
    %241 = vector.broadcast %240 : vector<1x32xf32> to vector<8x32xf32>
    %242 = arith.addf %238, %241 : vector<8x32xf32>
    %243 = arith.addf %242, %180 : vector<8x32xf32>
    %cst_147 = arith.constant dense<0.000000e+00> : vector<8xf32>
    %244 = vector.multi_reduction <add>, %243, %cst_147 [1] : vector<8x32xf32> to vector<8xf32>
    %245 = vector.shape_cast %244 : vector<8xf32> to vector<8x1xf32>
    %cst_148 = arith.constant 3.200000e+01 : f32
    %246 = vector.broadcast %cst_148 : f32 to vector<8x1xf32>
    %247 = arith.divf %245, %246 : vector<8x1xf32>
    %248 = vector.broadcast %247 : vector<8x1xf32> to vector<8x32xf32>
    %249 = arith.subf %243, %248 : vector<8x32xf32>
    %250 = arith.mulf %249, %249 : vector<8x32xf32>
    %cst_149 = arith.constant dense<0.000000e+00> : vector<8xf32>
    %251 = vector.multi_reduction <add>, %250, %cst_149 [1] : vector<8x32xf32> to vector<8xf32>
    %252 = vector.shape_cast %251 : vector<8xf32> to vector<8x1xf32>
    %cst_150 = arith.constant 3.200000e+01 : f32
    %253 = vector.broadcast %cst_150 : f32 to vector<8x1xf32>
    %254 = arith.divf %252, %253 : vector<8x1xf32>
    %255 = vector.broadcast %247 : vector<8x1xf32> to vector<8x32xf32>
    %256 = arith.subf %243, %255 : vector<8x32xf32>
    %cst_151 = arith.constant 9.99999996E-13 : f32
    %257 = vector.broadcast %cst_151 : f32 to vector<8x1xf32>
    %258 = arith.addf %254, %257 : vector<8x1xf32>
    %259 = math.rsqrt %258 : vector<8x1xf32>
    %260 = vector.broadcast %259 : vector<8x1xf32> to vector<8x32xf32>
    %261 = arith.mulf %256, %260 : vector<8x32xf32>
    %c1_152 = arith.constant 1 : index
    %c0_153 = arith.constant 0 : index
    %c0_154 = arith.constant 0 : index
    %262 = vector.load %arg15[%c1_152, %c0_153, %c0_154] : memref<2x1x32xf32, #tpu.memory_space<vmem>>, vector<1x1x32xf32>
    %263 = vector.shape_cast %262 : vector<1x1x32xf32> to vector<1x32xf32>
    %264 = vector.broadcast %263 : vector<1x32xf32> to vector<8x32xf32>
    %265 = arith.mulf %264, %261 : vector<8x32xf32>
    %c1_155 = arith.constant 1 : index
    %c0_156 = arith.constant 0 : index
    %c0_157 = arith.constant 0 : index
    %266 = vector.load %arg16[%c1_155, %c0_156, %c0_157] : memref<2x1x32xf32, #tpu.memory_space<vmem>>, vector<1x1x32xf32>
    %267 = vector.shape_cast %266 : vector<1x1x32xf32> to vector<1x32xf32>
    %268 = vector.broadcast %267 : vector<1x32xf32> to vector<8x32xf32>
    %269 = arith.addf %265, %268 : vector<8x32xf32>
    %270 = arith.truncf %269 : vector<8x32xf32> to vector<8x32xbf16>
    %c1_158 = arith.constant 1 : index
    %c0_159 = arith.constant 0 : index
    %c0_160 = arith.constant 0 : index
    %271 = vector.load %arg17[%c1_158, %c0_159, %c0_160] : memref<2x32x64xbf16, #tpu.memory_space<vmem>>, vector<1x32x64xbf16>
    %272 = vector.shape_cast %271 : vector<1x32x64xbf16> to vector<32x64xbf16>
    %cst_161 = arith.constant dense<0.000000e+00> : vector<8x64xf32>
    %273 = tpu.matmul %270, %272, %cst_161 {dimension_numbers = #tpu.dot_dimension_numbers<[1], [0], [0], [1], [0, 0, 1, 1], [], []>} : vector<8x32xbf16>, vector<32x64xbf16>, vector<8x64xf32> -> vector<8x64xf32>
    %c1_162 = arith.constant 1 : index
    %c0_163 = arith.constant 0 : index
    %c0_164 = arith.constant 0 : index
    %274 = vector.load %arg18[%c1_162, %c0_163, %c0_164] : memref<2x1x64xf32, #tpu.memory_space<vmem>>, vector<1x1x64xf32>
    %275 = vector.shape_cast %274 : vector<1x1x64xf32> to vector<1x64xf32>
    %276 = vector.broadcast %275 : vector<1x64xf32> to vector<8x64xf32>
    %277 = arith.addf %273, %276 : vector<8x64xf32>
    %cst_165 = arith.constant 0.000000e+00 : f32
    %278 = vector.broadcast %cst_165 : f32 to vector<8x64xf32>
    %279 = arith.maximumf %277, %278 : vector<8x64xf32>
    %280 = arith.truncf %279 : vector<8x64xf32> to vector<8x64xbf16>
    %c1_166 = arith.constant 1 : index
    %c0_167 = arith.constant 0 : index
    %c0_168 = arith.constant 0 : index
    %281 = vector.load %arg19[%c1_166, %c0_167, %c0_168] : memref<2x64x32xbf16, #tpu.memory_space<vmem>>, vector<1x64x32xbf16>
    %282 = vector.shape_cast %281 : vector<1x64x32xbf16> to vector<64x32xbf16>
    %cst_169 = arith.constant dense<0.000000e+00> : vector<8x32xf32>
    %283 = tpu.matmul %280, %282, %cst_169 {dimension_numbers = #tpu.dot_dimension_numbers<[1], [0], [0], [1], [0, 0, 1, 1], [], []>} : vector<8x64xbf16>, vector<64x32xbf16>, vector<8x32xf32> -> vector<8x32xf32>
    %c1_170 = arith.constant 1 : index
    %c0_171 = arith.constant 0 : index
    %c0_172 = arith.constant 0 : index
    %284 = vector.load %arg20[%c1_170, %c0_171, %c0_172] : memref<2x1x32xf32, #tpu.memory_space<vmem>>, vector<1x1x32xf32>
    %285 = vector.shape_cast %284 : vector<1x1x32xf32> to vector<1x32xf32>
    %286 = vector.broadcast %285 : vector<1x32xf32> to vector<8x32xf32>
    %287 = arith.addf %283, %286 : vector<8x32xf32>
    %288 = arith.addf %287, %269 : vector<8x32xf32>
    %cst_173 = arith.constant dense<0.000000e+00> : vector<8xf32>
    %289 = vector.multi_reduction <add>, %288, %cst_173 [1] : vector<8x32xf32> to vector<8xf32>
    %290 = vector.shape_cast %289 : vector<8xf32> to vector<8x1xf32>
    %cst_174 = arith.constant 3.200000e+01 : f32
    %291 = vector.broadcast %cst_174 : f32 to vector<8x1xf32>
    %292 = arith.divf %290, %291 : vector<8x1xf32>
    %293 = vector.broadcast %292 : vector<8x1xf32> to vector<8x32xf32>
    %294 = arith.subf %288, %293 : vector<8x32xf32>
    %295 = arith.mulf %294, %294 : vector<8x32xf32>
    %cst_175 = arith.constant dense<0.000000e+00> : vector<8xf32>
    %296 = vector.multi_reduction <add>, %295, %cst_175 [1] : vector<8x32xf32> to vector<8xf32>
    %297 = vector.shape_cast %296 : vector<8xf32> to vector<8x1xf32>
    %cst_176 = arith.constant 3.200000e+01 : f32
    %298 = vector.broadcast %cst_176 : f32 to vector<8x1xf32>
    %299 = arith.divf %297, %298 : vector<8x1xf32>
    %300 = vector.broadcast %292 : vector<8x1xf32> to vector<8x32xf32>
    %301 = arith.subf %288, %300 : vector<8x32xf32>
    %cst_177 = arith.constant 9.99999996E-13 : f32
    %302 = vector.broadcast %cst_177 : f32 to vector<8x1xf32>
    %303 = arith.addf %299, %302 : vector<8x1xf32>
    %304 = math.rsqrt %303 : vector<8x1xf32>
    %305 = vector.broadcast %304 : vector<8x1xf32> to vector<8x32xf32>
    %306 = arith.mulf %301, %305 : vector<8x32xf32>
    %c1_178 = arith.constant 1 : index
    %c0_179 = arith.constant 0 : index
    %c0_180 = arith.constant 0 : index
    %307 = vector.load %arg21[%c1_178, %c0_179, %c0_180] : memref<2x1x32xf32, #tpu.memory_space<vmem>>, vector<1x1x32xf32>
    %308 = vector.shape_cast %307 : vector<1x1x32xf32> to vector<1x32xf32>
    %309 = vector.broadcast %308 : vector<1x32xf32> to vector<8x32xf32>
    %310 = arith.mulf %309, %306 : vector<8x32xf32>
    %c1_181 = arith.constant 1 : index
    %c0_182 = arith.constant 0 : index
    %c0_183 = arith.constant 0 : index
    %311 = vector.load %arg22[%c1_181, %c0_182, %c0_183] : memref<2x1x32xf32, #tpu.memory_space<vmem>>, vector<1x1x32xf32>
    %312 = vector.shape_cast %311 : vector<1x1x32xf32> to vector<1x32xf32>
    %313 = vector.broadcast %312 : vector<1x32xf32> to vector<8x32xf32>
    %314 = arith.addf %310, %313 : vector<8x32xf32>
    %c0_184 = arith.constant 0 : index
    %c0_185 = arith.constant 0 : index
    %c0_186 = arith.constant 0 : index
    %315 = vector.load %arg23[%c0_184, %c0_185, %c0_186] : memref<1x8x32xf32, #tpu.memory_space<vmem>>, vector<1x8x32xf32>
    %316 = vector.shape_cast %315 : vector<1x8x32xf32> to vector<8x32xf32>
    %317 = vector.shape_cast %314 : vector<8x32xf32> to vector<1x8x32xf32>
    tpu.vector_store %arg23[%c0_184, %c0_185, %c0_186], %317 {strides = array<i32>} : memref<1x8x32xf32, #tpu.memory_space<vmem>>, vector<1x8x32xf32>,
    return
  }
  func.func @transform_0(%arg0: i32) -> (i32, i32, i32) {
    %c0_i32 = arith.constant 0 : i32
    %c0_i32_0 = arith.constant 0 : i32
    %c0_i32_1 = arith.constant 0 : i32
    return %arg0, %c0_i32, %c0_i32_0 : i32, i32, i32
  }
  func.func @transform_1(%arg0: i32) -> (i32, i32, i32) {
    %c0_i32 = arith.constant 0 : i32
    %c0_i32_0 = arith.constant 0 : i32
    %c0_i32_1 = arith.constant 0 : i32
    return %arg0, %c0_i32, %c0_i32_0 : i32, i32, i32
  }
  func.func @transform_2(%arg0: i32) -> (i32, i32, i32) {
    %c0_i32 = arith.constant 0 : i32
    %c0_i32_0 = arith.constant 0 : i32
    %c0_i32_1 = arith.constant 0 : i32
    return %arg0, %c0_i32, %c0_i32_0 : i32, i32, i32
  }
  func.func @transform_3(%arg0: i32) -> (i32, i32, i32) {
    %c0_i32 = arith.constant 0 : i32
    %c0_i32_0 = arith.constant 0 : i32
    %c0_i32_1 = arith.constant 0 : i32
    return %arg0, %c0_i32, %c0_i32_0 : i32, i32, i32
  }
  func.func @transform_4(%arg0: i32) -> (i32, i32) {
    %c0_i32 = arith.constant 0 : i32
    %c0_i32_0 = arith.constant 0 : i32
    %c0_i32_1 = arith.constant 0 : i32
    return %c0_i32, %c0_i32_0 : i32, i32
  }
  func.func @transform_5(%arg0: i32) -> (i32, i32) {
    %c0_i32 = arith.constant 0 : i32
    %c0_i32_0 = arith.constant 0 : i32
    %c0_i32_1 = arith.constant 0 : i32
    return %c0_i32, %c0_i32_0 : i32, i32
  }
  func.func @transform_6(%arg0: i32) -> (i32, i32, i32, i32) {
    %c0_i32 = arith.constant 0 : i32
    %c0_i32_0 = arith.constant 0 : i32
    %c0_i32_1 = arith.constant 0 : i32
    %c0_i32_2 = arith.constant 0 : i32
    %c0_i32_3 = arith.constant 0 : i32
    return %c0_i32, %c0_i32_0, %c0_i32_1, %c0_i32_2 : i32, i32, i32, i32
  }
  func.func @transform_7(%arg0: i32) -> (i32, i32, i32, i32) {
    %c0_i32 = arith.constant 0 : i32
    %c0_i32_0 = arith.constant 0 : i32
    %c0_i32_1 = arith.constant 0 : i32
    %c0_i32_2 = arith.constant 0 : i32
    %c0_i32_3 = arith.constant 0 : i32
    return %c0_i32, %c0_i32_0, %c0_i32_1, %c0_i32_2 : i32, i32, i32, i32
  }
  func.func @transform_8(%arg0: i32) -> (i32, i32, i32, i32) {
    %c0_i32 = arith.constant 0 : i32
    %c0_i32_0 = arith.constant 0 : i32
    %c0_i32_1 = arith.constant 0 : i32
    %c0_i32_2 = arith.constant 0 : i32
    %c0_i32_3 = arith.constant 0 : i32
    return %c0_i32, %c0_i32_0, %c0_i32_1, %c0_i32_2 : i32, i32, i32, i32
  }
  func.func @transform_9(%arg0: i32) -> (i32, i32, i32, i32) {
    %c0_i32 = arith.constant 0 : i32
    %c0_i32_0 = arith.constant 0 : i32
    %c0_i32_1 = arith.constant 0 : i32
    %c0_i32_2 = arith.constant 0 : i32
    %c0_i32_3 = arith.constant 0 : i32
    return %c0_i32, %c0_i32_0, %c0_i32_1, %c0_i32_2 : i32, i32, i32, i32
  }
  func.func @transform_10(%arg0: i32) -> (i32, i32, i32, i32) {
    %c0_i32 = arith.constant 0 : i32
    %c0_i32_0 = arith.constant 0 : i32
    %c0_i32_1 = arith.constant 0 : i32
    %c0_i32_2 = arith.constant 0 : i32
    %c0_i32_3 = arith.constant 0 : i32
    return %c0_i32, %c0_i32_0, %c0_i32_1, %c0_i32_2 : i32, i32, i32, i32
  }
  func.func @transform_11(%arg0: i32) -> (i32, i32, i32, i32) {
    %c0_i32 = arith.constant 0 : i32
    %c0_i32_0 = arith.constant 0 : i32
    %c0_i32_1 = arith.constant 0 : i32
    %c0_i32_2 = arith.constant 0 : i32
    %c0_i32_3 = arith.constant 0 : i32
    return %c0_i32, %c0_i32_0, %c0_i32_1, %c0_i32_2 : i32, i32, i32, i32
  }
  func.func @transform_12(%arg0: i32) -> (i32, i32, i32, i32) {
    %c0_i32 = arith.constant 0 : i32
    %c0_i32_0 = arith.constant 0 : i32
    %c0_i32_1 = arith.constant 0 : i32
    %c0_i32_2 = arith.constant 0 : i32
    %c0_i32_3 = arith.constant 0 : i32
    return %c0_i32, %c0_i32_0, %c0_i32_1, %c0_i32_2 : i32, i32, i32, i32
  }
  func.func @transform_13(%arg0: i32) -> (i32, i32, i32) {
    %c0_i32 = arith.constant 0 : i32
    %c0_i32_0 = arith.constant 0 : i32
    %c0_i32_1 = arith.constant 0 : i32
    %c0_i32_2 = arith.constant 0 : i32
    return %c0_i32, %c0_i32_0, %c0_i32_1 : i32, i32, i32
  }
  func.func @transform_14(%arg0: i32) -> (i32, i32, i32) {
    %c0_i32 = arith.constant 0 : i32
    %c0_i32_0 = arith.constant 0 : i32
    %c0_i32_1 = arith.constant 0 : i32
    %c0_i32_2 = arith.constant 0 : i32
    return %c0_i32, %c0_i32_0, %c0_i32_1 : i32, i32, i32
  }
  func.func @transform_15(%arg0: i32) -> (i32, i32, i32) {
    %c0_i32 = arith.constant 0 : i32
    %c0_i32_0 = arith.constant 0 : i32
    %c0_i32_1 = arith.constant 0 : i32
    %c0_i32_2 = arith.constant 0 : i32
    return %c0_i32, %c0_i32_0, %c0_i32_1 : i32, i32, i32
  }
  func.func @transform_16(%arg0: i32) -> (i32, i32, i32) {
    %c0_i32 = arith.constant 0 : i32
    %c0_i32_0 = arith.constant 0 : i32
    %c0_i32_1 = arith.constant 0 : i32
    %c0_i32_2 = arith.constant 0 : i32
    return %c0_i32, %c0_i32_0, %c0_i32_1 : i32, i32, i32
  }
  func.func @transform_17(%arg0: i32) -> (i32, i32, i32) {
    %c0_i32 = arith.constant 0 : i32
    %c0_i32_0 = arith.constant 0 : i32
    %c0_i32_1 = arith.constant 0 : i32
    %c0_i32_2 = arith.constant 0 : i32
    return %c0_i32, %c0_i32_0, %c0_i32_1 : i32, i32, i32
  }
  func.func @transform_18(%arg0: i32) -> (i32, i32, i32) {
    %c0_i32 = arith.constant 0 : i32
    %c0_i32_0 = arith.constant 0 : i32
    %c0_i32_1 = arith.constant 0 : i32
    %c0_i32_2 = arith.constant 0 : i32
    return %c0_i32, %c0_i32_0, %c0_i32_1 : i32, i32, i32
  }
  func.func @transform_19(%arg0: i32) -> (i32, i32, i32) {
    %c0_i32 = arith.constant 0 : i32
    %c0_i32_0 = arith.constant 0 : i32
    %c0_i32_1 = arith.constant 0 : i32
    %c0_i32_2 = arith.constant 0 : i32
    return %c0_i32, %c0_i32_0, %c0_i32_1 : i32, i32, i32
  }
  func.func @transform_20(%arg0: i32) -> (i32, i32, i32) {
    %c0_i32 = arith.constant 0 : i32
    %c0_i32_0 = arith.constant 0 : i32
    %c0_i32_1 = arith.constant 0 : i32
    %c0_i32_2 = arith.constant 0 : i32
    return %c0_i32, %c0_i32_0, %c0_i32_1 : i32, i32, i32
  }
  func.func @transform_21(%arg0: i32) -> (i32, i32, i32) {
    %c0_i32 = arith.constant 0 : i32
    %c0_i32_0 = arith.constant 0 : i32
    %c0_i32_1 = arith.constant 0 : i32
    %c0_i32_2 = arith.constant 0 : i32
    return %c0_i32, %c0_i32_0, %c0_i32_1 : i32, i32, i32
  }
  func.func @transform_22(%arg0: i32) -> (i32, i32, i32) {
    %c0_i32 = arith.constant 0 : i32
    %c0_i32_0 = arith.constant 0 : i32
    %c0_i32_1 = arith.constant 0 : i32
    return %arg0, %c0_i32, %c0_i32_0 : i32, i32, i32
  }
}

</mosaic_0001>

<llo_original>
// kernel: tpu_custom_call.1
$region0: #{tpu_custom_call.1}
  #allocation0 [shape = 'u32[]', space=smem, size = 0x4, offset = 0x4, fixed_abs, tag = 'smem constant byte address 0x4 - core index']
  #allocation1 [shape = 'u32[144,128]{1,0:T(1,128)}', space=vmem, size = 0x12000, scoped, tag = 'internal scratch']
  %s0 = inlined_call_operand.vmem [shape: f32[2,8,6], index: 0, kind: input, shape index: {}]
  %s1 = inlined_call_operand.vmem [shape: f32[2,8,8], index: 1, kind: input, shape index: {}]
  %s2 = inlined_call_operand.vmem [shape: f32[2,8,8], index: 2, kind: input, shape index: {}]
  %s3 = inlined_call_operand.vmem [shape: f32[2,8,8], index: 3, kind: input, shape index: {}]
  %s4 = inlined_call_operand.vmem [shape: bf16[6,32], index: 4, kind: input, shape index: {}]
  %s5 = inlined_call_operand.vmem [shape: f32[1,32], index: 5, kind: input, shape index: {}]
  %s6 = inlined_call_operand.vmem [shape: bf16[2,4,32,8], index: 6, kind: input, shape index: {}]
  %s7 = inlined_call_operand.vmem [shape: f32[2,4,1,8], index: 7, kind: input, shape index: {}]
  %s8 = inlined_call_operand.vmem [shape: bf16[2,4,32,8], index: 8, kind: input, shape index: {}]
  %s9 = inlined_call_operand.vmem [shape: f32[2,4,1,8], index: 9, kind: input, shape index: {}]
  %s10 = inlined_call_operand.vmem [shape: bf16[2,4,32,8], index: 10, kind: input, shape index: {}]
  %s11 = inlined_call_operand.vmem [shape: f32[2,4,1,8], index: 11, kind: input, shape index: {}]
  %s12 = inlined_call_operand.vmem [shape: bf16[2,4,8,32], index: 12, kind: input, shape index: {}]
  %s13 = inlined_call_operand.vmem [shape: f32[2,1,32], index: 13, kind: input, shape index: {}]
  %s14 = inlined_call_operand.vmem [shape: f32[2,1,32], index: 14, kind: input, shape index: {}]
  %s15 = inlined_call_operand.vmem [shape: f32[2,1,32], index: 15, kind: input, shape index: {}]
  %s16 = inlined_call_operand.vmem [shape: bf16[2,32,64], index: 16, kind: input, shape index: {}]
  %s17 = inlined_call_operand.vmem [shape: f32[2,1,64], index: 17, kind: input, shape index: {}]
  %s18 = inlined_call_operand.vmem [shape: bf16[2,64,32], index: 18, kind: input, shape index: {}]
  %s19 = inlined_call_operand.vmem [shape: f32[2,1,32], index: 19, kind: input, shape index: {}]
  %s20 = inlined_call_operand.vmem [shape: f32[2,1,32], index: 20, kind: input, shape index: {}]
  %s21 = inlined_call_operand.vmem [shape: f32[2,1,32], index: 21, kind: input, shape index: {}]
  %s22 = inlined_call_operand.hbm [shape: f32[2,8,32], index: 22, kind: output, shape index: {}]
  %s23 = sld [smem:[#allocation0]]
  $region121: #{tpu_custom_call.1} parent=0
    _
  %s25 = ssub.s32 1, %s23
  %s26 = scalar_select 0, %s25, %s23
  $region1: #{tpu_custom_call.1} parent=0
    #allocation2 [shape = 'u8[8192]{0}', space=vmem, size = 0x2000, scoped, tag = 'output window, operand 0']
    #allocation3 [shape = 's32[2]{0}', space=sflag, size = 0x8, scoped, tag = 'scoped memory for tpu_custom_call.1']
    %27 = vsyncpa [#allocation3], 0
    %s28 = scalar_lea.sflag [#allocation3], 1
    %29 = vsyncpa %s28, 0
    loop: start=0, step=1, limit=4
    $region2: #{tpu_custom_call.1} parent=1 // loop_pre_header
      _
    $region3: #{tpu_custom_call.1} parent=1 // loop_header
      %s31 = sphi 0, %s35
      %p32 = scmp.ge.s32.totalorder %s31, 4
      %s41 = sphi 0, %s43
      %s44 = sphi 0, %s41
      %s45 = sphi 0, %s44
      %s61 = sphi 0, %s45
      %s67 = sphi 0, %s69
      %s70 = sphi 0, %s67
      %s71 = sphi 0, %s70
      %s87 = sphi 0, %s71
      %s93 = sphi 0, %s95
      %s96 = sphi 0, %s93
      %s97 = sphi 0, %s96
      %s113 = sphi 0, %s97
      %s119 = sphi 0, %s121
      %s122 = sphi 0, %s119
      %s123 = sphi 0, %s122
      %s139 = sphi 0, %s123
      %s143 = sphi 0, %s143
      %s145 = sphi 0, %s143
      %s146 = sphi 0, %s145
      %s160 = sphi 0, %s146
      %s164 = sphi 0, %s164
      %s166 = sphi 0, %s164
      %s167 = sphi 0, %s166
      %s181 = sphi 0, %s167
      %s185 = sphi 0, %s185
      %s187 = sphi 0, %s185
      %s188 = sphi 0, %s187
      %s202 = sphi 0, %s188
      %s206 = sphi 0, %s206
      %s208 = sphi 0, %s206
      %s209 = sphi 0, %s208
      %s223 = sphi 0, %s209
      %s227 = sphi 0, %s227
      %s229 = sphi 0, %s227
      %s230 = sphi 0, %s229
      %s244 = sphi 0, %s230
      %s248 = sphi 0, %s248
      %s250 = sphi 0, %s248
      %s251 = sphi 0, %s250
      %s265 = sphi 0, %s251
      %s269 = sphi 0, %s269
      %s271 = sphi 0, %s269
      %s272 = sphi 0, %s271
      %s286 = sphi 0, %s272
      %s290 = sphi 0, %s290
      %s292 = sphi 0, %s290
      %s293 = sphi 0, %s292
      %s307 = sphi 0, %s293
      %s311 = sphi 0, %s311
      %s313 = sphi 0, %s311
      %s314 = sphi 0, %s313
      %s328 = sphi 0, %s314
      %s332 = sphi 0, %s332
      %s334 = sphi 0, %s332
      %s335 = sphi 0, %s334
      %s349 = sphi 0, %s335
      %s353 = sphi 0, %s353
      %s355 = sphi 0, %s353
      %s356 = sphi 0, %s355
      %s370 = sphi 0, %s356
      %s374 = sphi 0, %s374
      %s376 = sphi 0, %s374
      %s377 = sphi 0, %s376
      %s391 = sphi 0, %s377
      %s395 = sphi 0, %s395
      %s397 = sphi 0, %s395
      %s398 = sphi 0, %s397
      %s412 = sphi 0, %s398
      %s416 = sphi 0, %s416
      %s418 = sphi 0, %s416
      %s419 = sphi 0, %s418
      %s433 = sphi 0, %s419
      %s437 = sphi 0, %s437
      %s439 = sphi 0, %s437
      %s440 = sphi 0, %s439
      %s454 = sphi 0, %s440
      %s458 = sphi 0, %s458
      %s460 = sphi 0, %s458
      %s461 = sphi 0, %s460
      %s475 = sphi 0, %s461
      %s479 = sphi 0, %s479
      %s481 = sphi 0, %s479
      %s482 = sphi 0, %s481
      %s496 = sphi 0, %s482
      %s500 = sphi 0, %s500
      %s502 = sphi 0, %s500
      %s503 = sphi 0, %s502
      %s517 = sphi 0, %s503
      %s523 = sphi 0, %s525
      %s526 = sphi 0, %s523
      %s527 = sphi 0, %s526
      %s543 = sphi 0, %s527
    $region4: #{tpu_custom_call.1} parent=1 // loop_header_branch
      %34 = sbr.rel (%p32) target = $region8
    $region5: #{tpu_custom_call.1} parent=1 // loop_body
      %s36 = ssub.s32 %s31, 1
      %s37 = ssub.s32 %s31, 2
      %s38 = sadd.s32 %s31, 1
      %s39 = ssub.s32 %s31, %s38
      %p40 = scmp.eq.s32.totalorder %s39, 0
      %s42 = sadd.s32 %s41, 1
      %s43 = scalar_select %p40, %s41, %s42
      %p46 = pneg %p40
      %p47 = scmp.eq.s32.totalorder %s31, 1
      %p48 = por %p46, %p47
      %p49 = scmp.ne.s32.totalorder %s41, %s44
      %p50 = scmp.eq.s32.totalorder %s31, 0
      %p51 = por %p49, %p50
      %p52 = scmp.ne.s32.totalorder %s41, %s44
      %p53 = scmp.eq.s32.totalorder %s36, 1
      %p54 = por %p52, %p53
      %p55 = scmp.ne.s32.totalorder %s44, %s45
      %p56 = scmp.eq.s32.totalorder %s36, 0
      %p57 = por %p55, %p56
      %p58 = scmp.ne.s32.totalorder %s44, %s45
      %p59 = scmp.eq.s32.totalorder %s37, 1
      %p60 = por %p58, %p59
      %p62 = scmp.ne.s32.totalorder %s45, %s61
      %p63 = scmp.eq.s32.totalorder %s37, 0
      %p64 = por %p62, %p63
      %s65 = ssub.s32 %s31, %s38
      %p66 = scmp.eq.s32.totalorder %s65, 0
      %s68 = sadd.s32 %s67, 1
      %s69 = scalar_select %p66, %s67, %s68
      %p72 = pneg %p66
      %p73 = scmp.eq.s32.totalorder %s31, 1
      %p74 = por %p72, %p73
      %p75 = scmp.ne.s32.totalorder %s67, %s70
      %p76 = scmp.eq.s32.totalorder %s31, 0
      %p77 = por %p75, %p76
      %p78 = scmp.ne.s32.totalorder %s67, %s70
      %p79 = scmp.eq.s32.totalorder %s36, 1
      %p80 = por %p78, %p79
      %p81 = scmp.ne.s32.totalorder %s70, %s71
      %p82 = scmp.eq.s32.totalorder %s36, 0
      %p83 = por %p81, %p82
      %p84 = scmp.ne.s32.totalorder %s70, %s71
      %p85 = scmp.eq.s32.totalorder %s37, 1
      %p86 = por %p84, %p85
      %p88 = scmp.ne.s32.totalorder %s71, %s87
      %p89 = scmp.eq.s32.totalorder %s37, 0
      %p90 = por %p88, %p89
      %s91 = ssub.s32 %s31, %s38
      %p92 = scmp.eq.s32.totalorder %s91, 0
      %s94 = sadd.s32 %s93, 1
      %s95 = scalar_select %p92, %s93, %s94
      %p98 = pneg %p92
      %p99 = scmp.eq.s32.totalorder %s31, 1
      %p100 = por %p98, %p99
      %p101 = scmp.ne.s32.totalorder %s93, %s96
      %p102 = scmp.eq.s32.totalorder %s31, 0
      %p103 = por %p101, %p102
      %p104 = scmp.ne.s32.totalorder %s93, %s96
      %p105 = scmp.eq.s32.totalorder %s36, 1
      %p106 = por %p104, %p105
      %p107 = scmp.ne.s32.totalorder %s96, %s97
      %p108 = scmp.eq.s32.totalorder %s36, 0
      %p109 = por %p107, %p108
      %p110 = scmp.ne.s32.totalorder %s96, %s97
      %p111 = scmp.eq.s32.totalorder %s37, 1
      %p112 = por %p110, %p111
      %p114 = scmp.ne.s32.totalorder %s97, %s113
      %p115 = scmp.eq.s32.totalorder %s37, 0
      %p116 = por %p114, %p115
      %s117 = ssub.s32 %s31, %s38
      %p118 = scmp.eq.s32.totalorder %s117, 0
      %s120 = sadd.s32 %s119, 1
      %s121 = scalar_select %p118, %s119, %s120
      %p124 = pneg %p118
      %p125 = scmp.eq.s32.totalorder %s31, 1
      %p126 = por %p124, %p125
      %p127 = scmp.ne.s32.totalorder %s119, %s122
      %p128 = scmp.eq.s32.totalorder %s31, 0
      %p129 = por %p127, %p128
      %p130 = scmp.ne.s32.totalorder %s119, %s122
      %p131 = scmp.eq.s32.totalorder %s36, 1
      %p132 = por %p130, %p131
      %p133 = scmp.ne.s32.totalorder %s122, %s123
      %p134 = scmp.eq.s32.totalorder %s36, 0
      %p135 = por %p133, %p134
      %p136 = scmp.ne.s32.totalorder %s122, %s123
      %p137 = scmp.eq.s32.totalorder %s37, 1
      %p138 = por %p136, %p137
      %p140 = scmp.ne.s32.totalorder %s123, %s139
      %p141 = scmp.eq.s32.totalorder %s37, 0
      %p142 = por %p140, %p141
      %s144 = sadd.s32 %s143, 1
      %p147 = scmp.eq.s32.totalorder %s31, 1
      %p148 = scmp.ne.s32.totalorder %s143, %s145
      %p149 = scmp.eq.s32.totalorder %s31, 0
      %p150 = por %p148, %p149
      %p151 = scmp.ne.s32.totalorder %s143, %s145
      %p152 = scmp.eq.s32.totalorder %s36, 1
      %p153 = por %p151, %p152
      %p154 = scmp.ne.s32.totalorder %s145, %s146
      %p155 = scmp.eq.s32.totalorder %s36, 0
      %p156 = por %p154, %p155
      %p157 = scmp.ne.s32.totalorder %s145, %s146
      %p158 = scmp.eq.s32.totalorder %s37, 1
      %p159 = por %p157, %p158
      %p161 = scmp.ne.s32.totalorder %s146, %s160
      %p162 = scmp.eq.s32.totalorder %s37, 0
      %p163 = por %p161, %p162
      %s165 = sadd.s32 %s164, 1
      %p168 = scmp.eq.s32.totalorder %s31, 1
      %p169 = scmp.ne.s32.totalorder %s164, %s166
      %p170 = scmp.eq.s32.totalorder %s31, 0
      %p171 = por %p169, %p170
      %p172 = scmp.ne.s32.totalorder %s164, %s166
      %p173 = scmp.eq.s32.totalorder %s36, 1
      %p174 = por %p172, %p173
      %p175 = scmp.ne.s32.totalorder %s166, %s167
      %p176 = scmp.eq.s32.totalorder %s36, 0
      %p177 = por %p175, %p176
      %p178 = scmp.ne.s32.totalorder %s166, %s167
      %p179 = scmp.eq.s32.totalorder %s37, 1
      %p180 = por %p178, %p179
      %p182 = scmp.ne.s32.totalorder %s167, %s181
      %p183 = scmp.eq.s32.totalorder %s37, 0
      %p184 = por %p182, %p183
      %s186 = sadd.s32 %s185, 1
      %p189 = scmp.eq.s32.totalorder %s31, 1
      %p190 = scmp.ne.s32.totalorder %s185, %s187
      %p191 = scmp.eq.s32.totalorder %s31, 0
      %p192 = por %p190, %p191
      %p193 = scmp.ne.s32.totalorder %s185, %s187
      %p194 = scmp.eq.s32.totalorder %s36, 1
      %p195 = por %p193, %p194
      %p196 = scmp.ne.s32.totalorder %s187, %s188
      %p197 = scmp.eq.s32.totalorder %s36, 0
      %p198 = por %p196, %p197
      %p199 = scmp.ne.s32.totalorder %s187, %s188
      %p200 = scmp.eq.s32.totalorder %s37, 1
      %p201 = por %p199, %p200
      %p203 = scmp.ne.s32.totalorder %s188, %s202
      %p204 = scmp.eq.s32.totalorder %s37, 0
      %p205 = por %p203, %p204
      %s207 = sadd.s32 %s206, 1
      %p210 = scmp.eq.s32.totalorder %s31, 1
      %p211 = scmp.ne.s32.totalorder %s206, %s208
      %p212 = scmp.eq.s32.totalorder %s31, 0
      %p213 = por %p211, %p212
      %p214 = scmp.ne.s32.totalorder %s206, %s208
      %p215 = scmp.eq.s32.totalorder %s36, 1
      %p216 = por %p214, %p215
      %p217 = scmp.ne.s32.totalorder %s208, %s209
      %p218 = scmp.eq.s32.totalorder %s36, 0
      %p219 = por %p217, %p218
      %p220 = scmp.ne.s32.totalorder %s208, %s209
      %p221 = scmp.eq.s32.totalorder %s37, 1
      %p222 = por %p220, %p221
      %p224 = scmp.ne.s32.totalorder %s209, %s223
      %p225 = scmp.eq.s32.totalorder %s37, 0
      %p226 = por %p224, %p225
      %s228 = sadd.s32 %s227, 1
      %p231 = scmp.eq.s32.totalorder %s31, 1
      %p232 = scmp.ne.s32.totalorder %s227, %s229
      %p233 = scmp.eq.s32.totalorder %s31, 0
      %p234 = por %p232, %p233
      %p235 = scmp.ne.s32.totalorder %s227, %s229
      %p236 = scmp.eq.s32.totalorder %s36, 1
      %p237 = por %p235, %p236
      %p238 = scmp.ne.s32.totalorder %s229, %s230
      %p239 = scmp.eq.s32.totalorder %s36, 0
      %p240 = por %p238, %p239
      %p241 = scmp.ne.s32.totalorder %s229, %s230
      %p242 = scmp.eq.s32.totalorder %s37, 1
      %p243 = por %p241, %p242
      %p245 = scmp.ne.s32.totalorder %s230, %s244
      %p246 = scmp.eq.s32.totalorder %s37, 0
      %p247 = por %p245, %p246
      %s249 = sadd.s32 %s248, 1
      %p252 = scmp.eq.s32.totalorder %s31, 1
      %p253 = scmp.ne.s32.totalorder %s248, %s250
      %p254 = scmp.eq.s32.totalorder %s31, 0
      %p255 = por %p253, %p254
      %p256 = scmp.ne.s32.totalorder %s248, %s250
      %p257 = scmp.eq.s32.totalorder %s36, 1
      %p258 = por %p256, %p257
      %p259 = scmp.ne.s32.totalorder %s250, %s251
      %p260 = scmp.eq.s32.totalorder %s36, 0
      %p261 = por %p259, %p260
      %p262 = scmp.ne.s32.totalorder %s250, %s251
      %p263 = scmp.eq.s32.totalorder %s37, 1
      %p264 = por %p262, %p263
      %p266 = scmp.ne.s32.totalorder %s251, %s265
      %p267 = scmp.eq.s32.totalorder %s37, 0
      %p268 = por %p266, %p267
      %s270 = sadd.s32 %s269, 1
      %p273 = scmp.eq.s32.totalorder %s31, 1
      %p274 = scmp.ne.s32.totalorder %s269, %s271
      %p275 = scmp.eq.s32.totalorder %s31, 0
      %p276 = por %p274, %p275
      %p277 = scmp.ne.s32.totalorder %s269, %s271
      %p278 = scmp.eq.s32.totalorder %s36, 1
      %p279 = por %p277, %p278
      %p280 = scmp.ne.s32.totalorder %s271, %s272
      %p281 = scmp.eq.s32.totalorder %s36, 0
      %p282 = por %p280, %p281
      %p283 = scmp.ne.s32.totalorder %s271, %s272
      %p284 = scmp.eq.s32.totalorder %s37, 1
      %p285 = por %p283, %p284
      %p287 = scmp.ne.s32.totalorder %s272, %s286
      %p288 = scmp.eq.s32.totalorder %s37, 0
      %p289 = por %p287, %p288
      %s291 = sadd.s32 %s290, 1
      %p294 = scmp.eq.s32.totalorder %s31, 1
      %p295 = scmp.ne.s32.totalorder %s290, %s292
      %p296 = scmp.eq.s32.totalorder %s31, 0
      %p297 = por %p295, %p296
      %p298 = scmp.ne.s32.totalorder %s290, %s292
      %p299 = scmp.eq.s32.totalorder %s36, 1
      %p300 = por %p298, %p299
      %p301 = scmp.ne.s32.totalorder %s292, %s293
      %p302 = scmp.eq.s32.totalorder %s36, 0
      %p303 = por %p301, %p302
      %p304 = scmp.ne.s32.totalorder %s292, %s293
      %p305 = scmp.eq.s32.totalorder %s37, 1
      %p306 = por %p304, %p305
      %p308 = scmp.ne.s32.totalorder %s293, %s307
      %p309 = scmp.eq.s32.totalorder %s37, 0
      %p310 = por %p308, %p309
      %s312 = sadd.s32 %s311, 1
      %p315 = scmp.eq.s32.totalorder %s31, 1
      %p316 = scmp.ne.s32.totalorder %s311, %s313
      %p317 = scmp.eq.s32.totalorder %s31, 0
      %p318 = por %p316, %p317
      %p319 = scmp.ne.s32.totalorder %s311, %s313
      %p320 = scmp.eq.s32.totalorder %s36, 1
      %p321 = por %p319, %p320
      %p322 = scmp.ne.s32.totalorder %s313, %s314
      %p323 = scmp.eq.s32.totalorder %s36, 0
      %p324 = por %p322, %p323
      %p325 = scmp.ne.s32.totalorder %s313, %s314
      %p326 = scmp.eq.s32.totalorder %s37, 1
      %p327 = por %p325, %p326
      %p329 = scmp.ne.s32.totalorder %s314, %s328
      %p330 = scmp.eq.s32.totalorder %s37, 0
      %p331 = por %p329, %p330
      %s333 = sadd.s32 %s332, 1
      %p336 = scmp.eq.s32.totalorder %s31, 1
      %p337 = scmp.ne.s32.totalorder %s332, %s334
      %p338 = scmp.eq.s32.totalorder %s31, 0
      %p339 = por %p337, %p338
      %p340 = scmp.ne.s32.totalorder %s332, %s334
      %p341 = scmp.eq.s32.totalorder %s36, 1
      %p342 = por %p340, %p341
      %p343 = scmp.ne.s32.totalorder %s334, %s335
      %p344 = scmp.eq.s32.totalorder %s36, 0
      %p345 = por %p343, %p344
      %p346 = scmp.ne.s32.totalorder %s334, %s335
      %p347 = scmp.eq.s32.totalorder %s37, 1
      %p348 = por %p346, %p347
      %p350 = scmp.ne.s32.totalorder %s335, %s349
      %p351 = scmp.eq.s32.totalorder %s37, 0
      %p352 = por %p350, %p351
      %s354 = sadd.s32 %s353, 1
      %p357 = scmp.eq.s32.totalorder %s31, 1
      %p358 = scmp.ne.s32.totalorder %s353, %s355
      %p359 = scmp.eq.s32.totalorder %s31, 0
      %p360 = por %p358, %p359
      %p361 = scmp.ne.s32.totalorder %s353, %s355
      %p362 = scmp.eq.s32.totalorder %s36, 1
      %p363 = por %p361, %p362
      %p364 = scmp.ne.s32.totalorder %s355, %s356
      %p365 = scmp.eq.s32.totalorder %s36, 0
      %p366 = por %p364, %p365
      %p367 = scmp.ne.s32.totalorder %s355, %s356
      %p368 = scmp.eq.s32.totalorder %s37, 1
      %p369 = por %p367, %p368
      %p371 = scmp.ne.s32.totalorder %s356, %s370
      %p372 = scmp.eq.s32.totalorder %s37, 0
      %p373 = por %p371, %p372
      %s375 = sadd.s32 %s374, 1
      %p378 = scmp.eq.s32.totalorder %s31, 1
      %p379 = scmp.ne.s32.totalorder %s374, %s376
      %p380 = scmp.eq.s32.totalorder %s31, 0
      %p381 = por %p379, %p380
      %p382 = scmp.ne.s32.totalorder %s374, %s376
      %p383 = scmp.eq.s32.totalorder %s36, 1
      %p384 = por %p382, %p383
      %p385 = scmp.ne.s32.totalorder %s376, %s377
      %p386 = scmp.eq.s32.totalorder %s36, 0
      %p387 = por %p385, %p386
      %p388 = scmp.ne.s32.totalorder %s376, %s377
      %p389 = scmp.eq.s32.totalorder %s37, 1
      %p390 = por %p388, %p389
      %p392 = scmp.ne.s32.totalorder %s377, %s391
      %p393 = scmp.eq.s32.totalorder %s37, 0
      %p394 = por %p392, %p393
      %s396 = sadd.s32 %s395, 1
      %p399 = scmp.eq.s32.totalorder %s31, 1
      %p400 = scmp.ne.s32.totalorder %s395, %s397
      %p401 = scmp.eq.s32.totalorder %s31, 0
      %p402 = por %p400, %p401
      %p403 = scmp.ne.s32.totalorder %s395, %s397
      %p404 = scmp.eq.s32.totalorder %s36, 1
      %p405 = por %p403, %p404
      %p406 = scmp.ne.s32.totalorder %s397, %s398
      %p407 = scmp.eq.s32.totalorder %s36, 0
      %p408 = por %p406, %p407
      %p409 = scmp.ne.s32.totalorder %s397, %s398
      %p410 = scmp.eq.s32.totalorder %s37, 1
      %p411 = por %p409, %p410
      %p413 = scmp.ne.s32.totalorder %s398, %s412
      %p414 = scmp.eq.s32.totalorder %s37, 0
      %p415 = por %p413, %p414
      %s417 = sadd.s32 %s416, 1
      %p420 = scmp.eq.s32.totalorder %s31, 1
      %p421 = scmp.ne.s32.totalorder %s416, %s418
      %p422 = scmp.eq.s32.totalorder %s31, 0
      %p423 = por %p421, %p422
      %p424 = scmp.ne.s32.totalorder %s416, %s418
      %p425 = scmp.eq.s32.totalorder %s36, 1
      %p426 = por %p424, %p425
      %p427 = scmp.ne.s32.totalorder %s418, %s419
      %p428 = scmp.eq.s32.totalorder %s36, 0
      %p429 = por %p427, %p428
      %p430 = scmp.ne.s32.totalorder %s418, %s419
      %p431 = scmp.eq.s32.totalorder %s37, 1
      %p432 = por %p430, %p431
      %p434 = scmp.ne.s32.totalorder %s419, %s433
      %p435 = scmp.eq.s32.totalorder %s37, 0
      %p436 = por %p434, %p435
      %s438 = sadd.s32 %s437, 1
      %p441 = scmp.eq.s32.totalorder %s31, 1
      %p442 = scmp.ne.s32.totalorder %s437, %s439
      %p443 = scmp.eq.s32.totalorder %s31, 0
      %p444 = por %p442, %p443
      %p445 = scmp.ne.s32.totalorder %s437, %s439
      %p446 = scmp.eq.s32.totalorder %s36, 1
      %p447 = por %p445, %p446
      %p448 = scmp.ne.s32.totalorder %s439, %s440
      %p449 = scmp.eq.s32.totalorder %s36, 0
      %p450 = por %p448, %p449
      %p451 = scmp.ne.s32.totalorder %s439, %s440
      %p452 = scmp.eq.s32.totalorder %s37, 1
      %p453 = por %p451, %p452
      %p455 = scmp.ne.s32.totalorder %s440, %s454
      %p456 = scmp.eq.s32.totalorder %s37, 0
      %p457 = por %p455, %p456
      %s459 = sadd.s32 %s458, 1
      %p462 = scmp.eq.s32.totalorder %s31, 1
      %p463 = scmp.ne.s32.totalorder %s458, %s460
      %p464 = scmp.eq.s32.totalorder %s31, 0
      %p465 = por %p463, %p464
      %p466 = scmp.ne.s32.totalorder %s458, %s460
      %p467 = scmp.eq.s32.totalorder %s36, 1
      %p468 = por %p466, %p467
      %p469 = scmp.ne.s32.totalorder %s460, %s461
      %p470 = scmp.eq.s32.totalorder %s36, 0
      %p471 = por %p469, %p470
      %p472 = scmp.ne.s32.totalorder %s460, %s461
      %p473 = scmp.eq.s32.totalorder %s37, 1
      %p474 = por %p472, %p473
      %p476 = scmp.ne.s32.totalorder %s461, %s475
      %p477 = scmp.eq.s32.totalorder %s37, 0
      %p478 = por %p476, %p477
      %s480 = sadd.s32 %s479, 1
      %p483 = scmp.eq.s32.totalorder %s31, 1
      %p484 = scmp.ne.s32.totalorder %s479, %s481
      %p485 = scmp.eq.s32.totalorder %s31, 0
      %p486 = por %p484, %p485
      %p487 = scmp.ne.s32.totalorder %s479, %s481
      %p488 = scmp.eq.s32.totalorder %s36, 1
      %p489 = por %p487, %p488
      %p490 = scmp.ne.s32.totalorder %s481, %s482
      %p491 = scmp.eq.s32.totalorder %s36, 0
      %p492 = por %p490, %p491
      %p493 = scmp.ne.s32.totalorder %s481, %s482
      %p494 = scmp.eq.s32.totalorder %s37, 1
      %p495 = por %p493, %p494
      %p497 = scmp.ne.s32.totalorder %s482, %s496
      %p498 = scmp.eq.s32.totalorder %s37, 0
      %p499 = por %p497, %p498
      %s501 = sadd.s32 %s500, 1
      %p504 = scmp.eq.s32.totalorder %s31, 1
      %p505 = scmp.ne.s32.totalorder %s500, %s502
      %p506 = scmp.eq.s32.totalorder %s31, 0
      %p507 = por %p505, %p506
      %p508 = scmp.ne.s32.totalorder %s500, %s502
      %p509 = scmp.eq.s32.totalorder %s36, 1
      %p510 = por %p508, %p509
      %p511 = scmp.ne.s32.totalorder %s502, %s503
      %p512 = scmp.eq.s32.totalorder %s36, 0
      %p513 = por %p511, %p512
      %p514 = scmp.ne.s32.totalorder %s502, %s503
      %p515 = scmp.eq.s32.totalorder %s37, 1
      %p516 = por %p514, %p515
      %p518 = scmp.ne.s32.totalorder %s503, %s517
      %p519 = scmp.eq.s32.totalorder %s37, 0
      %p520 = por %p518, %p519
      %s521 = ssub.s32 %s31, %s38
      %p522 = scmp.eq.s32.totalorder %s521, 0
      %s524 = sadd.s32 %s523, 1
      %s525 = scalar_select %p522, %s523, %s524
      %p528 = pneg %p522
      %p529 = scmp.eq.s32.totalorder %s31, 1
      %p530 = por %p528, %p529
      %p531 = scmp.ne.s32.totalorder %s523, %s526
      %p532 = scmp.eq.s32.totalorder %s31, 0
      %p533 = por %p531, %p532
      %p534 = scmp.ne.s32.totalorder %s523, %s526
      %p535 = scmp.eq.s32.totalorder %s36, 1
      %p536 = por %p534, %p535
      %p537 = scmp.ne.s32.totalorder %s526, %s527
      %p538 = scmp.eq.s32.totalorder %s36, 0
      %p539 = por %p537, %p538
      %p540 = scmp.ne.s32.totalorder %s526, %s527
      %p541 = scmp.eq.s32.totalorder %s37, 1
      %p542 = por %p540, %p541
      %p544 = scmp.ne.s32.totalorder %s527, %s543
      %p545 = scmp.eq.s32.totalorder %s37, 0
      %p546 = por %p544, %p545
      %p547 = scmp.le.s32.totalorder 1, %s31
      %p548 = scmp.lt.s32.totalorder %s31, 3
      %p549 = pnand %p547, %p548
      %p550 = pneg %p549
      // Predicated region
      $region9: #{tpu_custom_call.1} parent=5 // pred_check
        _
      $region10: #{tpu_custom_call.1} parent=5 // pred_check_branch
        %552 = sbr.rel (%p549) target = $region12
      $region11: #{tpu_custom_call.1} parent=5 // pred_region
        %s553 = ssub.s32 %s31, 1
        // Predicated region
        $region13: #{tpu_custom_call.1} parent=11 // pred_check
          %p554 = pneg %p156
        $region14: #{tpu_custom_call.1} parent=11 // pred_check_branch
          %556 = sbr.rel (%p554) target = $region16
        $region15: #{tpu_custom_call.1} parent=11 // pred_region
          _
        $region16: #{tpu_custom_call.1} parent=11 // pred_fallthru
          _
        // Predicated region
        $region17: #{tpu_custom_call.1} parent=11 // pred_check
          %p557 = pneg %p177
        $region18: #{tpu_custom_call.1} parent=11 // pred_check_branch
          %559 = sbr.rel (%p557) target = $region20
        $region19: #{tpu_custom_call.1} parent=11 // pred_region
          _
        $region20: #{tpu_custom_call.1} parent=11 // pred_fallthru
          _
        // Predicated region
        $region21: #{tpu_custom_call.1} parent=11 // pred_check
          %p560 = pneg %p198
        $region22: #{tpu_custom_call.1} parent=11 // pred_check_branch
          %562 = sbr.rel (%p560) target = $region24
        $region23: #{tpu_custom_call.1} parent=11 // pred_region
          _
        $region24: #{tpu_custom_call.1} parent=11 // pred_fallthru
          _
        // Predicated region
        $region25: #{tpu_custom_call.1} parent=11 // pred_check
          %p563 = pneg %p219
        $region26: #{tpu_custom_call.1} parent=11 // pred_check_branch
          %565 = sbr.rel (%p563) target = $region28
        $region27: #{tpu_custom_call.1} parent=11 // pred_region
          _
        $region28: #{tpu_custom_call.1} parent=11 // pred_fallthru
          _
        // Predicated region
        $region29: #{tpu_custom_call.1} parent=11 // pred_check
          %p566 = pneg %p240
        $region30: #{tpu_custom_call.1} parent=11 // pred_check_branch
          %568 = sbr.rel (%p566) target = $region32
        $region31: #{tpu_custom_call.1} parent=11 // pred_region
          _
        $region32: #{tpu_custom_call.1} parent=11 // pred_fallthru
          _
        // Predicated region
        $region33: #{tpu_custom_call.1} parent=11 // pred_check
          %p569 = pneg %p261
        $region34: #{tpu_custom_call.1} parent=11 // pred_check_branch
          %571 = sbr.rel (%p569) target = $region36
        $region35: #{tpu_custom_call.1} parent=11 // pred_region
          _
        $region36: #{tpu_custom_call.1} parent=11 // pred_fallthru
          _
        // Predicated region
        $region37: #{tpu_custom_call.1} parent=11 // pred_check
          %p572 = pneg %p282
        $region38: #{tpu_custom_call.1} parent=11 // pred_check_branch
          %574 = sbr.rel (%p572) target = $region40
        $region39: #{tpu_custom_call.1} parent=11 // pred_region
          _
        $region40: #{tpu_custom_call.1} parent=11 // pred_fallthru
          _
        // Predicated region
        $region41: #{tpu_custom_call.1} parent=11 // pred_check
          %p575 = pneg %p303
        $region42: #{tpu_custom_call.1} parent=11 // pred_check_branch
          %577 = sbr.rel (%p575) target = $region44
        $region43: #{tpu_custom_call.1} parent=11 // pred_region
          _
        $region44: #{tpu_custom_call.1} parent=11 // pred_fallthru
          _
        // Predicated region
        $region45: #{tpu_custom_call.1} parent=11 // pred_check
          %p578 = pneg %p324
        $region46: #{tpu_custom_call.1} parent=11 // pred_check_branch
          %580 = sbr.rel (%p578) target = $region48
        $region47: #{tpu_custom_call.1} parent=11 // pred_region
          _
        $region48: #{tpu_custom_call.1} parent=11 // pred_fallthru
          _
        // Predicated region
        $region49: #{tpu_custom_call.1} parent=11 // pred_check
          %p581 = pneg %p345
        $region50: #{tpu_custom_call.1} parent=11 // pred_check_branch
          %583 = sbr.rel (%p581) target = $region52
        $region51: #{tpu_custom_call.1} parent=11 // pred_region
          _
        $region52: #{tpu_custom_call.1} parent=11 // pred_fallthru
          _
        // Predicated region
        $region53: #{tpu_custom_call.1} parent=11 // pred_check
          %p584 = pneg %p366
        $region54: #{tpu_custom_call.1} parent=11 // pred_check_branch
          %586 = sbr.rel (%p584) target = $region56
        $region55: #{tpu_custom_call.1} parent=11 // pred_region
          _
        $region56: #{tpu_custom_call.1} parent=11 // pred_fallthru
          _
        // Predicated region
        $region57: #{tpu_custom_call.1} parent=11 // pred_check
          %p587 = pneg %p387
        $region58: #{tpu_custom_call.1} parent=11 // pred_check_branch
          %589 = sbr.rel (%p587) target = $region60
        $region59: #{tpu_custom_call.1} parent=11 // pred_region
          _
        $region60: #{tpu_custom_call.1} parent=11 // pred_fallthru
          _
        // Predicated region
        $region61: #{tpu_custom_call.1} parent=11 // pred_check
          %p590 = pneg %p408
        $region62: #{tpu_custom_call.1} parent=11 // pred_check_branch
          %592 = sbr.rel (%p590) target = $region64
        $region63: #{tpu_custom_call.1} parent=11 // pred_region
          _
        $region64: #{tpu_custom_call.1} parent=11 // pred_fallthru
          _
        // Predicated region
        $region65: #{tpu_custom_call.1} parent=11 // pred_check
          %p593 = pneg %p429
        $region66: #{tpu_custom_call.1} parent=11 // pred_check_branch
          %595 = sbr.rel (%p593) target = $region68
        $region67: #{tpu_custom_call.1} parent=11 // pred_region
          _
        $region68: #{tpu_custom_call.1} parent=11 // pred_fallthru
          _
        // Predicated region
        $region69: #{tpu_custom_call.1} parent=11 // pred_check
          %p596 = pneg %p450
        $region70: #{tpu_custom_call.1} parent=11 // pred_check_branch
          %598 = sbr.rel (%p596) target = $region72
        $region71: #{tpu_custom_call.1} parent=11 // pred_region
          _
        $region72: #{tpu_custom_call.1} parent=11 // pred_fallthru
          _
        // Predicated region
        $region73: #{tpu_custom_call.1} parent=11 // pred_check
          %p599 = pneg %p471
        $region74: #{tpu_custom_call.1} parent=11 // pred_check_branch
          %601 = sbr.rel (%p599) target = $region76
        $region75: #{tpu_custom_call.1} parent=11 // pred_region
          _
        $region76: #{tpu_custom_call.1} parent=11 // pred_fallthru
          _
        // Predicated region
        $region77: #{tpu_custom_call.1} parent=11 // pred_check
          %p602 = pneg %p492
        $region78: #{tpu_custom_call.1} parent=11 // pred_check_branch
          %604 = sbr.rel (%p602) target = $region80
        $region79: #{tpu_custom_call.1} parent=11 // pred_region
          _
        $region80: #{tpu_custom_call.1} parent=11 // pred_fallthru
          _
        // Predicated region
        $region81: #{tpu_custom_call.1} parent=11 // pred_check
          %p605 = pneg %p513
        $region82: #{tpu_custom_call.1} parent=11 // pred_check_branch
          %607 = sbr.rel (%p605) target = $region84
        $region83: #{tpu_custom_call.1} parent=11 // pred_region
          _
        $region84: #{tpu_custom_call.1} parent=11 // pred_fallthru
          _
      $region12: #{tpu_custom_call.1} parent=5 // pred_fallthru
        _
      %p608 = scmp.lt.s32.totalorder %s31, 2
      // Predicated region
      $region85: #{tpu_custom_call.1} parent=5 // pred_check
        %p609 = pneg %p608
      $region86: #{tpu_custom_call.1} parent=5 // pred_check_branch
        %611 = sbr.rel (%p609) target = $region88
      $region87: #{tpu_custom_call.1} parent=5 // pred_region
        // Predicated region
        $region89: #{tpu_custom_call.1} parent=87 // pred_check
          %p612 = pneg %p51
        $region90: #{tpu_custom_call.1} parent=87 // pred_check_branch
          %614 = sbr.rel (%p612) target = $region92
        $region91: #{tpu_custom_call.1} parent=87 // pred_region
          %p615 = scmp.lt.s32.totalorder %s31, 1
          %s616 = scalar_select %p615, %s31, 1
          %s617 = smul.addr %s616, 8
          %s618 = scalar_lea.vmem %s0, %s617
        $region92: #{tpu_custom_call.1} parent=87 // pred_fallthru
          _
        // Predicated region
        $region93: #{tpu_custom_call.1} parent=87 // pred_check
          %p619 = pneg %p77
        $region94: #{tpu_custom_call.1} parent=87 // pred_check_branch
          %621 = sbr.rel (%p619) target = $region96
        $region95: #{tpu_custom_call.1} parent=87 // pred_region
          %p622 = scmp.lt.s32.totalorder %s31, 1
          %s623 = scalar_select %p622, %s31, 1
          %s624 = smul.addr %s623, 8
          %s625 = scalar_lea.vmem %s1, %s624
        $region96: #{tpu_custom_call.1} parent=87 // pred_fallthru
          _
        // Predicated region
        $region97: #{tpu_custom_call.1} parent=87 // pred_check
          %p626 = pneg %p103
        $region98: #{tpu_custom_call.1} parent=87 // pred_check_branch
          %628 = sbr.rel (%p626) target = $region100
        $region99: #{tpu_custom_call.1} parent=87 // pred_region
          %p629 = scmp.lt.s32.totalorder %s31, 1
          %s630 = scalar_select %p629, %s31, 1
          %s631 = smul.addr %s630, 8
          %s632 = scalar_lea.vmem %s2, %s631
        $region100: #{tpu_custom_call.1} parent=87 // pred_fallthru
          _
        // Predicated region
        $region101: #{tpu_custom_call.1} parent=87 // pred_check
          %p633 = pneg %p129
        $region102: #{tpu_custom_call.1} parent=87 // pred_check_branch
          %635 = sbr.rel (%p633) target = $region104
        $region103: #{tpu_custom_call.1} parent=87 // pred_region
          %p636 = scmp.lt.s32.totalorder %s31, 1
          %s637 = scalar_select %p636, %s31, 1
          %s638 = smul.addr %s637, 8
          %s639 = scalar_lea.vmem %s3, %s638
        $region104: #{tpu_custom_call.1} parent=87 // pred_fallthru
          _
      $region88: #{tpu_custom_call.1} parent=5 // pred_fallthru
        _
      %p640 = scmp.le.s32.totalorder 1, %s31
      %p641 = scmp.lt.s32.totalorder %s31, 3
      %p642 = pnand %p640, %p641
      %p643 = pneg %p642
      // Predicated region
      $region105: #{tpu_custom_call.1} parent=5 // pred_check
        _
      $region106: #{tpu_custom_call.1} parent=5 // pred_check_branch
        %645 = sbr.rel (%p642) target = $region108
      $region107: #{tpu_custom_call.1} parent=5 // pred_region
        %s646 = ssub.s32 %s31, 1
        %p647 = scmp.lt.s32.totalorder %s36, 1
        %s648 = scalar_select %p647, %s36, 1
        %s649 = smul.addr %s648, 8
        %s650 = scalar_lea.vmem %s0, %s649
        %p651 = pneg %p57
        %p652 = pneg %p54
        %p653 = scmp.lt.s32.totalorder %s36, 1
        %s654 = scalar_select %p653, %s36, 1
        %s655 = smul.addr %s654, 8
        %s656 = scalar_lea.vmem %s1, %s655
        %p657 = pneg %p83
        %p658 = pneg %p80
        %p659 = scmp.lt.s32.totalorder %s36, 1
        %s660 = scalar_select %p659, %s36, 1
        %s661 = smul.addr %s660, 8
        %s662 = scalar_lea.vmem %s2, %s661
        %p663 = pneg %p109
        %p664 = pneg %p106
        %p665 = scmp.lt.s32.totalorder %s36, 1
        %s666 = scalar_select %p665, %s36, 1
        %s667 = smul.addr %s666, 8
        %s668 = scalar_lea.vmem %s3, %s667
        %p669 = pneg %p135
        %p670 = pneg %p132
        %p671 = pneg %p156
        %p672 = pneg %p153
        %p673 = pneg %p177
        %p674 = pneg %p174
        %p675 = pneg %p198
        %p676 = pneg %p195
        %p677 = pneg %p219
        %p678 = pneg %p216
        %p679 = pneg %p240
        %p680 = pneg %p237
        %p681 = pneg %p261
        %p682 = pneg %p258
        %p683 = pneg %p282
        %p684 = pneg %p279
        %p685 = pneg %p303
        %p686 = pneg %p300
        %p687 = pneg %p324
        %p688 = pneg %p321
        %p689 = pneg %p345
        %p690 = pneg %p342
        %p691 = pneg %p366
        %p692 = pneg %p363
        %p693 = pneg %p387
        %p694 = pneg %p384
        %p695 = pneg %p408
        %p696 = pneg %p405
        %p697 = pneg %p429
        %p698 = pneg %p426
        %p699 = pneg %p450
        %p700 = pneg %p447
        %p701 = pneg %p471
        %p702 = pneg %p468
        %p703 = pneg %p492
        %p704 = pneg %p489
        %p705 = pneg %p513
        %p706 = pneg %p510
        %p707 = pneg %p539
        %p708 = pneg %p536
        %s709 = sand.u32 %s526, 1
        %s710 = scalar_lea.sflag [#allocation3], %s709
        %s711 = sand.u32 %s526, 1
        %s712 = smul.addr %s711, 8
        %s713 = scalar_lea.vmem [#allocation2], %s712
        %p714 = scmp.lt.s32.totalorder %s36, 1
        %s715 = scalar_select %p714, %s36, 1
        %s716 = smul.addr %s715, 8
        %s717 = scalar_lea.vmem %s0, %s716
        %p718 = scmp.lt.s32.totalorder %s36, 1
        %s719 = scalar_select %p718, %s36, 1
        %s720 = smul.addr %s719, 8
        %s721 = scalar_lea.vmem %s1, %s720
        %p722 = scmp.lt.s32.totalorder %s36, 1
        %s723 = scalar_select %p722, %s36, 1
        %s724 = smul.addr %s723, 8
        %s725 = scalar_lea.vmem %s2, %s724
        %p726 = scmp.lt.s32.totalorder %s36, 1
        %s727 = scalar_select %p726, %s36, 1
        %s728 = smul.addr %s727, 8
        %s729 = scalar_lea.vmem %s3, %s728
        %v731 = vld [vmem:[%s717] sm:$0xff]
        %v732 = vld [vmem:[%s721] sm:$0xff]
        %v733 = vld [vmem:[%s725] sm:$0xff]
        %v734 = vld [vmem:[%s729] sm:$0xff]
        %v735 = vpack.c.bf16 %v731, %v731
        %v736 = vld [vmem:[%s4] sm:$0x7]
        %v737 = vld [vmem:[%s5] sm:$0x1]
        %v739 = vlaneseq
        %v740 = vshrl.u32 %v739, 7
        %v741 = vsub.s32 0, %v740
        %v742 = vrot.slane %v737, %v741
        %vm744 = vcmask 48128
        %v746 = vsel %vm744, %v735, 0
        %vm748 = vcmask 1042432
        %v750 = vsel %vm748, %v736, 0
        %752 = vmatprep.subr.bf16.mxu0 0
        %753 = vmatpush1.bf16.msra.mxu0 %v750
        %754 = vmatprep.subr.bf16.mxu0 0
        %755 = vmatpush1.bf16.msra.mxu0 0
        %756 = vmatprep.subr.bf16.mxu0 0
        %757 = vmatpush1.bf16.msra.mxu0 0
        %758 = vmatprep.subr.bf16.mxu0 0
        %759 = vmatpush1.bf16.msra.mxu0 0
        %760 = vmatprep.subr.bf16.mxu0 0
        %761 = vmatpush1.bf16.msra.mxu0 0
        %762 = vmatprep.subr.bf16.mxu0 0
        %763 = vmatpush1.bf16.msra.mxu0 0
        %764 = vmatprep.subr.bf16.mxu0 0
        %765 = vmatpush1.bf16.msra.mxu0 0
        %766 = vmatprep.subr.bf16.mxu0 0
        %767 = vmatpush1.bf16.msra.mxu0 0
        %768 = vmatprep.subr.bf16.mxu0 0
        %769 = vmatpush1.bf16.msra.mxu0 0
        %770 = vmatprep.subr.bf16.mxu0 0
        %771 = vmatpush1.bf16.msra.mxu0 0
        %772 = vmatprep.subr.bf16.mxu0 0
        %773 = vmatpush1.bf16.msra.mxu0 0
        %774 = vmatprep.subr.bf16.mxu0 0
        %775 = vmatpush1.bf16.msra.mxu0 0
        %776 = vmatprep.subr.bf16.mxu0 0
        %777 = vmatpush1.bf16.msra.mxu0 0
        %778 = vmatprep.subr.bf16.mxu0 0
        %779 = vmatpush1.bf16.msra.mxu0 0
        %780 = vmatprep.subr.bf16.mxu0 0
        %781 = vmatpush1.bf16.msra.mxu0 0
        %782 = vmatprep.subr.bf16.mxu0 0
        %783 = vmatpush1.bf16.msra.mxu0 0
        %784 = vmatprep.mubr.bf16.mxu0 0
        %785 = vmatmul.mubr.bf16.gmra.mrb[0].mxu0 %v746
        %v786 = vpop.f32.mrb[0].mxu0
        %v787 = vadd.f32 %v742, %v786
        %v788 = vpop.f32.mrb[0].mxu0
        %v789 = vpop.f32.mrb[0].mxu0
        %v790 = vpop.f32.mrb[0].mxu0
        %791 = vdwg.mxu0
        %v792 = vlaneseq
        %v793 = vshrl.u32 %v792, 7
        %v794 = vlaneseq
        %v795 = vand.u32 %v794, 127
        %vm796 = vcmp.eq.s32.totalorder %v793, %v795
        %v797 = vsel %vm796, inf, %v732
        %vm798 = vcmp.lt.f32.partialorder %v797, 1e-06
        %vm799 = vcmp.eq.f32.partialorder %v733, 1.0
        %vm800 = vmand %vm798, %vm799
        %v801 = vsel %vm800, 0.0, %v733
        %vm802 = vcmp.gt.f32.partialorder %v797, 1e-06
        %vm803 = vcmp.lt.f32.partialorder %v797, 0.9
        %vm804 = vmand %vm802, %vm803
        %vm805 = vcmp.eq.f32.partialorder %v801, 1.0
        %vm806 = vmor %vm804, %vm805
        %v807 = vsel %vm806, 1, 0
        %v808 = vcvt.s32.f32 %v807
        %v809 = vpack.c.bf16 %v808, %v808
        %vm810 = vcmask 64512
        %v811 = vsel %vm810, %v808, 0.0
        %812 = vadd.xlane.f32.xlu0 %v811
        %v813 = vpop.xlane.xlu0 %812
        %v814 = vmax.f32 %v813, 1.0
        %v815 = vrcp.pop %v814
        %vm816 = vcmp.eq.f32.partialorder %v734, 0.0
        %v817 = vsel %vm816, 1, 0
        %vm818 = vcmp.eq.s32.totalorder %v817, 1
        %v819 = vpack.c.bf16 %v787, %v787
        %v821 = vsel %vm810, %v809, 0
        %vm823 = vcmask 1043456
        %v825 = vsel %vm823, %v819, 0
        %827 = vmatprep.subr.bf16.mxu0 0
        %828 = vmatpush1.bf16.msra.mxu0 %v825
        %829 = vmatprep.subr.bf16.mxu0 0
        %830 = vmatpush1.bf16.msra.mxu0 0
        %831 = vmatprep.subr.bf16.mxu0 0
        %832 = vmatpush1.bf16.msra.mxu0 0
        %833 = vmatprep.subr.bf16.mxu0 0
        %834 = vmatpush1.bf16.msra.mxu0 0
        %835 = vmatprep.subr.bf16.mxu0 0
        %836 = vmatpush1.bf16.msra.mxu0 0
        %837 = vmatprep.subr.bf16.mxu0 0
        %838 = vmatpush1.bf16.msra.mxu0 0
        %839 = vmatprep.subr.bf16.mxu0 0
        %840 = vmatpush1.bf16.msra.mxu0 0
        %841 = vmatprep.subr.bf16.mxu0 0
        %842 = vmatpush1.bf16.msra.mxu0 0
        %843 = vmatprep.subr.bf16.mxu0 0
        %844 = vmatpush1.bf16.msra.mxu0 0
        %845 = vmatprep.subr.bf16.mxu0 0
        %846 = vmatpush1.bf16.msra.mxu0 0
        %847 = vmatprep.subr.bf16.mxu0 0
        %848 = vmatpush1.bf16.msra.mxu0 0
        %849 = vmatprep.subr.bf16.mxu0 0
        %850 = vmatpush1.bf16.msra.mxu0 0
        %851 = vmatprep.subr.bf16.mxu0 0
        %852 = vmatpush1.bf16.msra.mxu0 0
        %853 = vmatprep.subr.bf16.mxu0 0
        %854 = vmatpush1.bf16.msra.mxu0 0
        %855 = vmatprep.subr.bf16.mxu0 0
        %856 = vmatpush1.bf16.msra.mxu0 0
        %857 = vmatprep.subr.bf16.mxu0 0
        %858 = vmatpush1.bf16.msra.mxu0 0
        %859 = vmatprep.mubr.bf16.mxu0 0
        %860 = vmatmul.mubr.bf16.gmra.mrb[0].mxu0 %v821
        %v861 = vpop.f32.mrb[0].mxu0
        %v862 = vadd.f32 0.0, %v861
        %v863 = vpop.f32.mrb[0].mxu0
        %v864 = vpop.f32.mrb[0].mxu0
        %v865 = vpop.f32.mrb[0].mxu0
        %866 = vdwg.mxu0
        %v867 = vmul.f32 %v862, %v815
        %v868 = vpack.c.bf16 %v867, %v867
        %v869 = vld [vmem:[%s6] sm:$0xf]
        %v870 = vld [vmem:[%s6 + $0x4] sm:$0xf]
        %v871 = vld [vmem:[%s6 + $0x8] sm:$0xf]
        %v872 = vld [vmem:[%s6 + $0xc] sm:$0xf]
        %v873 = vld [vmem:[%s6 + $0x10] sm:$0xf]
        %v874 = vld [vmem:[%s6 + $0x14] sm:$0xf]
        %v875 = vld [vmem:[%s6 + $0x18] sm:$0xf]
        %v876 = vld [vmem:[%s6 + $0x1c] sm:$0xf]
        %v877 = vld [vmem:[%s6 + $0x20] sm:$0xf]
        %v878 = vld [vmem:[%s6 + $0x24] sm:$0xf]
        %v879 = vld [vmem:[%s6 + $0x28] sm:$0xf]
        %v880 = vld [vmem:[%s6 + $0x2c] sm:$0xf]
        %v881 = vld [vmem:[%s6 + $0x30] sm:$0xf]
        %v882 = vld [vmem:[%s6 + $0x34] sm:$0xf]
        %v883 = vld [vmem:[%s6 + $0x38] sm:$0xf]
        %v884 = vld [vmem:[%s6 + $0x3c] sm:$0xf]
        %v885 = vld [vmem:[%s7] sm:$0x1]
        %v886 = vld [vmem:[%s7 + $0x1] sm:$0x1]
        %v887 = vld [vmem:[%s7 + $0x2] sm:$0x1]
        %v888 = vld [vmem:[%s7 + $0x3] sm:$0x1]
        %v893 = vlaneseq
        %v894 = vshrl.u32 %v893, 7
        %v895 = vsub.s32 0, %v894
        %v896 = vrot.slane %v885, %v895
        %v897 = vlaneseq
        %v898 = vshrl.u32 %v897, 7
        %v899 = vsub.s32 0, %v898
        %v900 = vrot.slane %v886, %v899
        %v901 = vlaneseq
        %v902 = vshrl.u32 %v901, 7
        %v903 = vsub.s32 0, %v902
        %v904 = vrot.slane %v887, %v903
        %v905 = vlaneseq
        %v906 = vshrl.u32 %v905, 7
        %v907 = vsub.s32 0, %v906
        %v908 = vrot.slane %v888, %v907
        %v917 = vunpack.c.l.b16 %v869
        %v918 = vunpack.c.l.b16 %v870
        %v919 = vunpack.c.l.b16 %v871
        %v920 = vunpack.c.l.b16 %v872
        %v921 = vpack.c.b16 %v918, %v917
        %v922 = vpack.c.b16 %v920, %v919
        %vm925 = vcmask 261120
        %v926 = vsel %vm925, %v819, 0
        %928 = vmatprep.subr.bf16.mxu0 0
        %929 = vmatpush1.bf16.msra.mxu0 %v921
        %930 = vmatprep.subr.bf16.mxu0 0
        %931 = vmatpush1.bf16.msra.mxu0 %v922
        %932 = vmatprep.subr.bf16.mxu0 0
        %933 = vmatpush1.bf16.msra.mxu0 0
        %934 = vmatprep.subr.bf16.mxu0 0
        %935 = vmatpush1.bf16.msra.mxu0 0
        %936 = vmatprep.subr.bf16.mxu0 0
        %937 = vmatpush1.bf16.msra.mxu0 0
        %938 = vmatprep.subr.bf16.mxu0 0
        %939 = vmatpush1.bf16.msra.mxu0 0
        %940 = vmatprep.subr.bf16.mxu0 0
        %941 = vmatpush1.bf16.msra.mxu0 0
        %942 = vmatprep.subr.bf16.mxu0 0
        %943 = vmatpush1.bf16.msra.mxu0 0
        %944 = vmatprep.subr.bf16.mxu0 0
        %945 = vmatpush1.bf16.msra.mxu0 0
        %946 = vmatprep.subr.bf16.mxu0 0
        %947 = vmatpush1.bf16.msra.mxu0 0
        %948 = vmatprep.subr.bf16.mxu0 0
        %949 = vmatpush1.bf16.msra.mxu0 0
        %950 = vmatprep.subr.bf16.mxu0 0
        %951 = vmatpush1.bf16.msra.mxu0 0
        %952 = vmatprep.subr.bf16.mxu0 0
        %953 = vmatpush1.bf16.msra.mxu0 0
        %954 = vmatprep.subr.bf16.mxu0 0
        %955 = vmatpush1.bf16.msra.mxu0 0
        %956 = vmatprep.subr.bf16.mxu0 0
        %957 = vmatpush1.bf16.msra.mxu0 0
        %958 = vmatprep.subr.bf16.mxu0 0
        %959 = vmatpush1.bf16.msra.mxu0 0
        %960 = vmatprep.mubr.bf16.mxu0 0
        %961 = vmatmul.mubr.bf16.gmra.mrb[0].mxu0 %v926
        %v962 = vpop.f32.mrb[0].mxu0
        %v963 = vadd.f32 %v896, %v962
        %v964 = vpop.f32.mrb[0].mxu0
        %v965 = vpop.f32.mrb[0].mxu0
        %v966 = vpop.f32.mrb[0].mxu0
        %967 = vdwg.mxu0
        %v972 = vunpack.c.l.b16 %v873
        %v973 = vunpack.c.l.b16 %v874
        %v974 = vunpack.c.l.b16 %v875
        %v975 = vunpack.c.l.b16 %v876
        %v976 = vpack.c.b16 %v973, %v972
        %v977 = vpack.c.b16 %v975, %v974
        %980 = vmatprep.subr.bf16.mxu0 0
        %981 = vmatpush1.bf16.msra.mxu0 %v976
        %982 = vmatprep.subr.bf16.mxu0 0
        %983 = vmatpush1.bf16.msra.mxu0 %v977
        %984 = vmatprep.subr.bf16.mxu0 0
        %985 = vmatpush1.bf16.msra.mxu0 0
        %986 = vmatprep.subr.bf16.mxu0 0
        %987 = vmatpush1.bf16.msra.mxu0 0
        %988 = vmatprep.subr.bf16.mxu0 0
        %989 = vmatpush1.bf16.msra.mxu0 0
        %990 = vmatprep.subr.bf16.mxu0 0
        %991 = vmatpush1.bf16.msra.mxu0 0
        %992 = vmatprep.subr.bf16.mxu0 0
        %993 = vmatpush1.bf16.msra.mxu0 0
        %994 = vmatprep.subr.bf16.mxu0 0
        %995 = vmatpush1.bf16.msra.mxu0 0
        %996 = vmatprep.subr.bf16.mxu0 0
        %997 = vmatpush1.bf16.msra.mxu0 0
        %998 = vmatprep.subr.bf16.mxu0 0
        %999 = vmatpush1.bf16.msra.mxu0 0
        %1000 = vmatprep.subr.bf16.mxu0 0
        %1001 = vmatpush1.bf16.msra.mxu0 0
        %1002 = vmatprep.subr.bf16.mxu0 0
        %1003 = vmatpush1.bf16.msra.mxu0 0
        %1004 = vmatprep.subr.bf16.mxu0 0
        %1005 = vmatpush1.bf16.msra.mxu0 0
        %1006 = vmatprep.subr.bf16.mxu0 0
        %1007 = vmatpush1.bf16.msra.mxu0 0
        %1008 = vmatprep.subr.bf16.mxu0 0
        %1009 = vmatpush1.bf16.msra.mxu0 0
        %1010 = vmatprep.subr.bf16.mxu0 0
        %1011 = vmatpush1.bf16.msra.mxu0 0
        %1012 = vmatprep.mubr.bf16.mxu0 0
        %1013 = vmatmul.mubr.bf16.gmra.mrb[0].mxu0 %v926
        %v1014 = vpop.f32.mrb[0].mxu0
        %v1015 = vadd.f32 %v900, %v1014
        %v1016 = vpop.f32.mrb[0].mxu0
        %v1017 = vpop.f32.mrb[0].mxu0
        %v1018 = vpop.f32.mrb[0].mxu0
        %1019 = vdwg.mxu0
        %v1024 = vunpack.c.l.b16 %v877
        %v1025 = vunpack.c.l.b16 %v878
        %v1026 = vunpack.c.l.b16 %v879
        %v1027 = vunpack.c.l.b16 %v880
        %v1028 = vpack.c.b16 %v1025, %v1024
        %v1029 = vpack.c.b16 %v1027, %v1026
        %1032 = vmatprep.subr.bf16.mxu0 0
        %1033 = vmatpush1.bf16.msra.mxu0 %v1028
        %1034 = vmatprep.subr.bf16.mxu0 0
        %1035 = vmatpush1.bf16.msra.mxu0 %v1029
        %1036 = vmatprep.subr.bf16.mxu0 0
        %1037 = vmatpush1.bf16.msra.mxu0 0
        %1038 = vmatprep.subr.bf16.mxu0 0
        %1039 = vmatpush1.bf16.msra.mxu0 0
        %1040 = vmatprep.subr.bf16.mxu0 0
        %1041 = vmatpush1.bf16.msra.mxu0 0
        %1042 = vmatprep.subr.bf16.mxu0 0
        %1043 = vmatpush1.bf16.msra.mxu0 0
        %1044 = vmatprep.subr.bf16.mxu0 0
        %1045 = vmatpush1.bf16.msra.mxu0 0
        %1046 = vmatprep.subr.bf16.mxu0 0
        %1047 = vmatpush1.bf16.msra.mxu0 0
        %1048 = vmatprep.subr.bf16.mxu0 0
        %1049 = vmatpush1.bf16.msra.mxu0 0
        %1050 = vmatprep.subr.bf16.mxu0 0
        %1051 = vmatpush1.bf16.msra.mxu0 0
        %1052 = vmatprep.subr.bf16.mxu0 0
        %1053 = vmatpush1.bf16.msra.mxu0 0
        %1054 = vmatprep.subr.bf16.mxu0 0
        %1055 = vmatpush1.bf16.msra.mxu0 0
        %1056 = vmatprep.subr.bf16.mxu0 0
        %1057 = vmatpush1.bf16.msra.mxu0 0
        %1058 = vmatprep.subr.bf16.mxu0 0
        %1059 = vmatpush1.bf16.msra.mxu0 0
        %1060 = vmatprep.subr.bf16.mxu0 0
        %1061 = vmatpush1.bf16.msra.mxu0 0
        %1062 = vmatprep.subr.bf16.mxu0 0
        %1063 = vmatpush1.bf16.msra.mxu0 0
        %1064 = vmatprep.mubr.bf16.mxu0 0
        %1065 = vmatmul.mubr.bf16.gmra.mrb[0].mxu0 %v926
        %v1066 = vpop.f32.mrb[0].mxu0
        %v1067 = vadd.f32 %v904, %v1066
        %v1068 = vpop.f32.mrb[0].mxu0
        %v1069 = vpop.f32.mrb[0].mxu0
        %v1070 = vpop.f32.mrb[0].mxu0
        %1071 = vdwg.mxu0
        %v1076 = vunpack.c.l.b16 %v881
        %v1077 = vunpack.c.l.b16 %v882
        %v1078 = vunpack.c.l.b16 %v883
        %v1079 = vunpack.c.l.b16 %v884
        %v1080 = vpack.c.b16 %v1077, %v1076
        %v1081 = vpack.c.b16 %v1079, %v1078
        %1084 = vmatprep.subr.bf16.mxu0 0
        %1085 = vmatpush1.bf16.msra.mxu0 %v1080
        %1086 = vmatprep.subr.bf16.mxu0 0
        %1087 = vmatpush1.bf16.msra.mxu0 %v1081
        %1088 = vmatprep.subr.bf16.mxu0 0
        %1089 = vmatpush1.bf16.msra.mxu0 0
        %1090 = vmatprep.subr.bf16.mxu0 0
        %1091 = vmatpush1.bf16.msra.mxu0 0
        %1092 = vmatprep.subr.bf16.mxu0 0
        %1093 = vmatpush1.bf16.msra.mxu0 0
        %1094 = vmatprep.subr.bf16.mxu0 0
        %1095 = vmatpush1.bf16.msra.mxu0 0
        %1096 = vmatprep.subr.bf16.mxu0 0
        %1097 = vmatpush1.bf16.msra.mxu0 0
        %1098 = vmatprep.subr.bf16.mxu0 0
        %1099 = vmatpush1.bf16.msra.mxu0 0
        %1100 = vmatprep.subr.bf16.mxu0 0
        %1101 = vmatpush1.bf16.msra.mxu0 0
        %1102 = vmatprep.subr.bf16.mxu0 0
        %1103 = vmatpush1.bf16.msra.mxu0 0
        %1104 = vmatprep.subr.bf16.mxu0 0
        %1105 = vmatpush1.bf16.msra.mxu0 0
        %1106 = vmatprep.subr.bf16.mxu0 0
        %1107 = vmatpush1.bf16.msra.mxu0 0
        %1108 = vmatprep.subr.bf16.mxu0 0
        %1109 = vmatpush1.bf16.msra.mxu0 0
        %1110 = vmatprep.subr.bf16.mxu0 0
        %1111 = vmatpush1.bf16.msra.mxu0 0
        %1112 = vmatprep.subr.bf16.mxu0 0
        %1113 = vmatpush1.bf16.msra.mxu0 0
        %1114 = vmatprep.subr.bf16.mxu0 0
        %1115 = vmatpush1.bf16.msra.mxu0 0
        %1116 = vmatprep.mubr.bf16.mxu0 0
        %1117 = vmatmul.mubr.bf16.gmra.mrb[0].mxu0 %v926
        %v1118 = vpop.f32.mrb[0].mxu0
        %v1119 = vadd.f32 %v908, %v1118
        %v1120 = vpop.f32.mrb[0].mxu0
        %v1121 = vpop.f32.mrb[0].mxu0
        %v1122 = vpop.f32.mrb[0].mxu0
        %1123 = vdwg.mxu0
        %v1124 = vld [vmem:[%s8] sm:$0xf]
        %v1125 = vld [vmem:[%s8 + $0x4] sm:$0xf]
        %v1126 = vld [vmem:[%s8 + $0x8] sm:$0xf]
        %v1127 = vld [vmem:[%s8 + $0xc] sm:$0xf]
        %v1128 = vld [vmem:[%s8 + $0x10] sm:$0xf]
        %v1129 = vld [vmem:[%s8 + $0x14] sm:$0xf]
        %v1130 = vld [vmem:[%s8 + $0x18] sm:$0xf]
        %v1131 = vld [vmem:[%s8 + $0x1c] sm:$0xf]
        %v1132 = vld [vmem:[%s8 + $0x20] sm:$0xf]
        %v1133 = vld [vmem:[%s8 + $0x24] sm:$0xf]
        %v1134 = vld [vmem:[%s8 + $0x28] sm:$0xf]
        %v1135 = vld [vmem:[%s8 + $0x2c] sm:$0xf]
        %v1136 = vld [vmem:[%s8 + $0x30] sm:$0xf]
        %v1137 = vld [vmem:[%s8 + $0x34] sm:$0xf]
        %v1138 = vld [vmem:[%s8 + $0x38] sm:$0xf]
        %v1139 = vld [vmem:[%s8 + $0x3c] sm:$0xf]
        %v1140 = vld [vmem:[%s9] sm:$0x1]
        %v1141 = vld [vmem:[%s9 + $0x1] sm:$0x1]
        %v1142 = vld [vmem:[%s9 + $0x2] sm:$0x1]
        %v1143 = vld [vmem:[%s9 + $0x3] sm:$0x1]
        %v1148 = vlaneseq
        %v1149 = vshrl.u32 %v1148, 7
        %v1150 = vsub.s32 0, %v1149
        %v1151 = vrot.slane %v1140, %v1150
        %v1152 = vlaneseq
        %v1153 = vshrl.u32 %v1152, 7
        %v1154 = vsub.s32 0, %v1153
        %v1155 = vrot.slane %v1141, %v1154
        %v1156 = vlaneseq
        %v1157 = vshrl.u32 %v1156, 7
        %v1158 = vsub.s32 0, %v1157
        %v1159 = vrot.slane %v1142, %v1158
        %v1160 = vlaneseq
        %v1161 = vshrl.u32 %v1160, 7
        %v1162 = vsub.s32 0, %v1161
        %v1163 = vrot.slane %v1143, %v1162
        %v1172 = vunpack.c.l.b16 %v1124
        %v1173 = vunpack.c.l.b16 %v1125
        %v1174 = vunpack.c.l.b16 %v1126
        %v1175 = vunpack.c.l.b16 %v1127
        %v1176 = vpack.c.b16 %v1173, %v1172
        %v1177 = vpack.c.b16 %v1175, %v1174
        %v1181 = vsel %vm925, %v868, 0
        %1183 = vmatprep.subr.bf16.mxu0 0
        %1184 = vmatpush1.bf16.msra.mxu0 %v1176
        %1185 = vmatprep.subr.bf16.mxu0 0
        %1186 = vmatpush1.bf16.msra.mxu0 %v1177
        %1187 = vmatprep.subr.bf16.mxu0 0
        %1188 = vmatpush1.bf16.msra.mxu0 0
        %1189 = vmatprep.subr.bf16.mxu0 0
        %1190 = vmatpush1.bf16.msra.mxu0 0
        %1191 = vmatprep.subr.bf16.mxu0 0
        %1192 = vmatpush1.bf16.msra.mxu0 0
        %1193 = vmatprep.subr.bf16.mxu0 0
        %1194 = vmatpush1.bf16.msra.mxu0 0
        %1195 = vmatprep.subr.bf16.mxu0 0
        %1196 = vmatpush1.bf16.msra.mxu0 0
        %1197 = vmatprep.subr.bf16.mxu0 0
        %1198 = vmatpush1.bf16.msra.mxu0 0
        %1199 = vmatprep.subr.bf16.mxu0 0
        %1200 = vmatpush1.bf16.msra.mxu0 0
        %1201 = vmatprep.subr.bf16.mxu0 0
        %1202 = vmatpush1.bf16.msra.mxu0 0
        %1203 = vmatprep.subr.bf16.mxu0 0
        %1204 = vmatpush1.bf16.msra.mxu0 0
        %1205 = vmatprep.subr.bf16.mxu0 0
        %1206 = vmatpush1.bf16.msra.mxu0 0
        %1207 = vmatprep.subr.bf16.mxu0 0
        %1208 = vmatpush1.bf16.msra.mxu0 0
        %1209 = vmatprep.subr.bf16.mxu0 0
        %1210 = vmatpush1.bf16.msra.mxu0 0
        %1211 = vmatprep.subr.bf16.mxu0 0
        %1212 = vmatpush1.bf16.msra.mxu0 0
        %1213 = vmatprep.subr.bf16.mxu0 0
        %1214 = vmatpush1.bf16.msra.mxu0 0
        %1215 = vmatprep.mubr.bf16.mxu0 0
        %1216 = vmatmul.mubr.bf16.gmra.mrb[0].mxu0 %v1181
        %v1217 = vpop.f32.mrb[0].mxu0
        %v1218 = vadd.f32 %v1151, %v1217
        %v1219 = vpop.f32.mrb[0].mxu0
        %v1220 = vpop.f32.mrb[0].mxu0
        %v1221 = vpop.f32.mrb[0].mxu0
        %1222 = vdwg.mxu0
        %v1227 = vunpack.c.l.b16 %v1128
        %v1228 = vunpack.c.l.b16 %v1129
        %v1229 = vunpack.c.l.b16 %v1130
        %v1230 = vunpack.c.l.b16 %v1131
        %v1231 = vpack.c.b16 %v1228, %v1227
        %v1232 = vpack.c.b16 %v1230, %v1229
        %1235 = vmatprep.subr.bf16.mxu0 0
        %1236 = vmatpush1.bf16.msra.mxu0 %v1231
        %1237 = vmatprep.subr.bf16.mxu0 0
        %1238 = vmatpush1.bf16.msra.mxu0 %v1232
        %1239 = vmatprep.subr.bf16.mxu0 0
        %1240 = vmatpush1.bf16.msra.mxu0 0
        %1241 = vmatprep.subr.bf16.mxu0 0
        %1242 = vmatpush1.bf16.msra.mxu0 0
        %1243 = vmatprep.subr.bf16.mxu0 0
        %1244 = vmatpush1.bf16.msra.mxu0 0
        %1245 = vmatprep.subr.bf16.mxu0 0
        %1246 = vmatpush1.bf16.msra.mxu0 0
        %1247 = vmatprep.subr.bf16.mxu0 0
        %1248 = vmatpush1.bf16.msra.mxu0 0
        %1249 = vmatprep.subr.bf16.mxu0 0
        %1250 = vmatpush1.bf16.msra.mxu0 0
        %1251 = vmatprep.subr.bf16.mxu0 0
        %1252 = vmatpush1.bf16.msra.mxu0 0
        %1253 = vmatprep.subr.bf16.mxu0 0
        %1254 = vmatpush1.bf16.msra.mxu0 0
        %1255 = vmatprep.subr.bf16.mxu0 0
        %1256 = vmatpush1.bf16.msra.mxu0 0
        %1257 = vmatprep.subr.bf16.mxu0 0
        %1258 = vmatpush1.bf16.msra.mxu0 0
        %1259 = vmatprep.subr.bf16.mxu0 0
        %1260 = vmatpush1.bf16.msra.mxu0 0
        %1261 = vmatprep.subr.bf16.mxu0 0
        %1262 = vmatpush1.bf16.msra.mxu0 0
        %1263 = vmatprep.subr.bf16.mxu0 0
        %1264 = vmatpush1.bf16.msra.mxu0 0
        %1265 = vmatprep.subr.bf16.mxu0 0
        %1266 = vmatpush1.bf16.msra.mxu0 0
        %1267 = vmatprep.mubr.bf16.mxu0 0
        %1268 = vmatmul.mubr.bf16.gmra.mrb[0].mxu0 %v1181
        %v1269 = vpop.f32.mrb[0].mxu0
        %v1270 = vadd.f32 %v1155, %v1269
        %v1271 = vpop.f32.mrb[0].mxu0
        %v1272 = vpop.f32.mrb[0].mxu0
        %v1273 = vpop.f32.mrb[0].mxu0
        %1274 = vdwg.mxu0
        %v1279 = vunpack.c.l.b16 %v1132
        %v1280 = vunpack.c.l.b16 %v1133
        %v1281 = vunpack.c.l.b16 %v1134
        %v1282 = vunpack.c.l.b16 %v1135
        %v1283 = vpack.c.b16 %v1280, %v1279
        %v1284 = vpack.c.b16 %v1282, %v1281
        %1287 = vmatprep.subr.bf16.mxu0 0
        %1288 = vmatpush1.bf16.msra.mxu0 %v1283
        %1289 = vmatprep.subr.bf16.mxu0 0
        %1290 = vmatpush1.bf16.msra.mxu0 %v1284
        %1291 = vmatprep.subr.bf16.mxu0 0
        %1292 = vmatpush1.bf16.msra.mxu0 0
        %1293 = vmatprep.subr.bf16.mxu0 0
        %1294 = vmatpush1.bf16.msra.mxu0 0
        %1295 = vmatprep.subr.bf16.mxu0 0
        %1296 = vmatpush1.bf16.msra.mxu0 0
        %1297 = vmatprep.subr.bf16.mxu0 0
        %1298 = vmatpush1.bf16.msra.mxu0 0
        %1299 = vmatprep.subr.bf16.mxu0 0
        %1300 = vmatpush1.bf16.msra.mxu0 0
        %1301 = vmatprep.subr.bf16.mxu0 0
        %1302 = vmatpush1.bf16.msra.mxu0 0
        %1303 = vmatprep.subr.bf16.mxu0 0
        %1304 = vmatpush1.bf16.msra.mxu0 0
        %1305 = vmatprep.subr.bf16.mxu0 0
        %1306 = vmatpush1.bf16.msra.mxu0 0
        %1307 = vmatprep.subr.bf16.mxu0 0
        %1308 = vmatpush1.bf16.msra.mxu0 0
        %1309 = vmatprep.subr.bf16.mxu0 0
        %1310 = vmatpush1.bf16.msra.mxu0 0
        %1311 = vmatprep.subr.bf16.mxu0 0
        %1312 = vmatpush1.bf16.msra.mxu0 0
        %1313 = vmatprep.subr.bf16.mxu0 0
        %1314 = vmatpush1.bf16.msra.mxu0 0
        %1315 = vmatprep.subr.bf16.mxu0 0
        %1316 = vmatpush1.bf16.msra.mxu0 0
        %1317 = vmatprep.subr.bf16.mxu0 0
        %1318 = vmatpush1.bf16.msra.mxu0 0
        %1319 = vmatprep.mubr.bf16.mxu0 0
        %1320 = vmatmul.mubr.bf16.gmra.mrb[0].mxu0 %v1181
        %v1321 = vpop.f32.mrb[0].mxu0
        %v1322 = vadd.f32 %v1159, %v1321
        %v1323 = vpop.f32.mrb[0].mxu0
        %v1324 = vpop.f32.mrb[0].mxu0
        %v1325 = vpop.f32.mrb[0].mxu0
        %1326 = vdwg.mxu0
        %v1331 = vunpack.c.l.b16 %v1136
        %v1332 = vunpack.c.l.b16 %v1137
        %v1333 = vunpack.c.l.b16 %v1138
        %v1334 = vunpack.c.l.b16 %v1139
        %v1335 = vpack.c.b16 %v1332, %v1331
        %v1336 = vpack.c.b16 %v1334, %v1333
        %1339 = vmatprep.subr.bf16.mxu0 0
        %1340 = vmatpush1.bf16.msra.mxu0 %v1335
        %1341 = vmatprep.subr.bf16.mxu0 0
        %1342 = vmatpush1.bf16.msra.mxu0 %v1336
        %1343 = vmatprep.subr.bf16.mxu0 0
        %1344 = vmatpush1.bf16.msra.mxu0 0
        %1345 = vmatprep.subr.bf16.mxu0 0
        %1346 = vmatpush1.bf16.msra.mxu0 0
        %1347 = vmatprep.subr.bf16.mxu0 0
        %1348 = vmatpush1.bf16.msra.mxu0 0
        %1349 = vmatprep.subr.bf16.mxu0 0
        %1350 = vmatpush1.bf16.msra.mxu0 0
        %1351 = vmatprep.subr.bf16.mxu0 0
        %1352 = vmatpush1.bf16.msra.mxu0 0
        %1353 = vmatprep.subr.bf16.mxu0 0
        %1354 = vmatpush1.bf16.msra.mxu0 0
        %1355 = vmatprep.subr.bf16.mxu0 0
        %1356 = vmatpush1.bf16.msra.mxu0 0
        %1357 = vmatprep.subr.bf16.mxu0 0
        %1358 = vmatpush1.bf16.msra.mxu0 0
        %1359 = vmatprep.subr.bf16.mxu0 0
        %1360 = vmatpush1.bf16.msra.mxu0 0
        %1361 = vmatprep.subr.bf16.mxu0 0
        %1362 = vmatpush1.bf16.msra.mxu0 0
        %1363 = vmatprep.subr.bf16.mxu0 0
        %1364 = vmatpush1.bf16.msra.mxu0 0
        %1365 = vmatprep.subr.bf16.mxu0 0
        %1366 = vmatpush1.bf16.msra.mxu0 0
        %1367 = vmatprep.subr.bf16.mxu0 0
        %1368 = vmatpush1.bf16.msra.mxu0 0
        %1369 = vmatprep.subr.bf16.mxu0 0
        %1370 = vmatpush1.bf16.msra.mxu0 0
        %1371 = vmatprep.mubr.bf16.mxu0 0
        %1372 = vmatmul.mubr.bf16.gmra.mrb[0].mxu0 %v1181
        %v1373 = vpop.f32.mrb[0].mxu0
        %v1374 = vadd.f32 %v1163, %v1373
        %v1375 = vpop.f32.mrb[0].mxu0
        %v1376 = vpop.f32.mrb[0].mxu0
        %v1377 = vpop.f32.mrb[0].mxu0
        %1378 = vdwg.mxu0
        %v1379 = vld [vmem:[%s10] sm:$0xf]
        %v1380 = vld [vmem:[%s10 + $0x4] sm:$0xf]
        %v1381 = vld [vmem:[%s10 + $0x8] sm:$0xf]
        %v1382 = vld [vmem:[%s10 + $0xc] sm:$0xf]
        %v1383 = vld [vmem:[%s10 + $0x10] sm:$0xf]
        %v1384 = vld [vmem:[%s10 + $0x14] sm:$0xf]
        %v1385 = vld [vmem:[%s10 + $0x18] sm:$0xf]
        %v1386 = vld [vmem:[%s10 + $0x1c] sm:$0xf]
        %v1387 = vld [vmem:[%s10 + $0x20] sm:$0xf]
        %v1388 = vld [vmem:[%s10 + $0x24] sm:$0xf]
        %v1389 = vld [vmem:[%s10 + $0x28] sm:$0xf]
        %v1390 = vld [vmem:[%s10 + $0x2c] sm:$0xf]
        %v1391 = vld [vmem:[%s10 + $0x30] sm:$0xf]
        %v1392 = vld [vmem:[%s10 + $0x34] sm:$0xf]
        %v1393 = vld [vmem:[%s10 + $0x38] sm:$0xf]
        %v1394 = vld [vmem:[%s10 + $0x3c] sm:$0xf]
        %v1395 = vld [vmem:[%s11] sm:$0x1]
        %v1396 = vld [vmem:[%s11 + $0x1] sm:$0x1]
        %v1397 = vld [vmem:[%s11 + $0x2] sm:$0x1]
        %v1398 = vld [vmem:[%s11 + $0x3] sm:$0x1]
        %v1403 = vlaneseq
        %v1404 = vshrl.u32 %v1403, 7
        %v1405 = vsub.s32 0, %v1404
        %v1406 = vrot.slane %v1395, %v1405
        %v1407 = vlaneseq
        %v1408 = vshrl.u32 %v1407, 7
        %v1409 = vsub.s32 0, %v1408
        %v1410 = vrot.slane %v1396, %v1409
        %v1411 = vlaneseq
        %v1412 = vshrl.u32 %v1411, 7
        %v1413 = vsub.s32 0, %v1412
        %v1414 = vrot.slane %v1397, %v1413
        %v1415 = vlaneseq
        %v1416 = vshrl.u32 %v1415, 7
        %v1417 = vsub.s32 0, %v1416
        %v1418 = vrot.slane %v1398, %v1417
        %v1427 = vunpack.c.l.b16 %v1379
        %v1428 = vunpack.c.l.b16 %v1380
        %v1429 = vunpack.c.l.b16 %v1381
        %v1430 = vunpack.c.l.b16 %v1382
        %v1431 = vpack.c.b16 %v1428, %v1427
        %v1432 = vpack.c.b16 %v1430, %v1429
        %1435 = vmatprep.subr.bf16.mxu0 0
        %1436 = vmatpush1.bf16.msra.mxu0 %v1431
        %1437 = vmatprep.subr.bf16.mxu0 0
        %1438 = vmatpush1.bf16.msra.mxu0 %v1432
        %1439 = vmatprep.subr.bf16.mxu0 0
        %1440 = vmatpush1.bf16.msra.mxu0 0
        %1441 = vmatprep.subr.bf16.mxu0 0
        %1442 = vmatpush1.bf16.msra.mxu0 0
        %1443 = vmatprep.subr.bf16.mxu0 0
        %1444 = vmatpush1.bf16.msra.mxu0 0
        %1445 = vmatprep.subr.bf16.mxu0 0
        %1446 = vmatpush1.bf16.msra.mxu0 0
        %1447 = vmatprep.subr.bf16.mxu0 0
        %1448 = vmatpush1.bf16.msra.mxu0 0
        %1449 = vmatprep.subr.bf16.mxu0 0
        %1450 = vmatpush1.bf16.msra.mxu0 0
        %1451 = vmatprep.subr.bf16.mxu0 0
        %1452 = vmatpush1.bf16.msra.mxu0 0
        %1453 = vmatprep.subr.bf16.mxu0 0
        %1454 = vmatpush1.bf16.msra.mxu0 0
        %1455 = vmatprep.subr.bf16.mxu0 0
        %1456 = vmatpush1.bf16.msra.mxu0 0
        %1457 = vmatprep.subr.bf16.mxu0 0
        %1458 = vmatpush1.bf16.msra.mxu0 0
        %1459 = vmatprep.subr.bf16.mxu0 0
        %1460 = vmatpush1.bf16.msra.mxu0 0
        %1461 = vmatprep.subr.bf16.mxu0 0
        %1462 = vmatpush1.bf16.msra.mxu0 0
        %1463 = vmatprep.subr.bf16.mxu0 0
        %1464 = vmatpush1.bf16.msra.mxu0 0
        %1465 = vmatprep.subr.bf16.mxu0 0
        %1466 = vmatpush1.bf16.msra.mxu0 0
        %1467 = vmatprep.mubr.bf16.mxu0 0
        %1468 = vmatmul.mubr.bf16.gmra.mrb[0].mxu0 %v1181
        %v1469 = vpop.f32.mrb[0].mxu0
        %v1470 = vadd.f32 %v1406, %v1469
        %v1471 = vpop.f32.mrb[0].mxu0
        %v1472 = vpop.f32.mrb[0].mxu0
        %v1473 = vpop.f32.mrb[0].mxu0
        %1474 = vdwg.mxu0
        %v1479 = vunpack.c.l.b16 %v1383
        %v1480 = vunpack.c.l.b16 %v1384
        %v1481 = vunpack.c.l.b16 %v1385
        %v1482 = vunpack.c.l.b16 %v1386
        %v1483 = vpack.c.b16 %v1480, %v1479
        %v1484 = vpack.c.b16 %v1482, %v1481
        %1487 = vmatprep.subr.bf16.mxu0 0
        %1488 = vmatpush1.bf16.msra.mxu0 %v1483
        %1489 = vmatprep.subr.bf16.mxu0 0
        %1490 = vmatpush1.bf16.msra.mxu0 %v1484
        %1491 = vmatprep.subr.bf16.mxu0 0
        %1492 = vmatpush1.bf16.msra.mxu0 0
        %1493 = vmatprep.subr.bf16.mxu0 0
        %1494 = vmatpush1.bf16.msra.mxu0 0
        %1495 = vmatprep.subr.bf16.mxu0 0
        %1496 = vmatpush1.bf16.msra.mxu0 0
        %1497 = vmatprep.subr.bf16.mxu0 0
        %1498 = vmatpush1.bf16.msra.mxu0 0
        %1499 = vmatprep.subr.bf16.mxu0 0
        %1500 = vmatpush1.bf16.msra.mxu0 0
        %1501 = vmatprep.subr.bf16.mxu0 0
        %1502 = vmatpush1.bf16.msra.mxu0 0
        %1503 = vmatprep.subr.bf16.mxu0 0
        %1504 = vmatpush1.bf16.msra.mxu0 0
        %1505 = vmatprep.subr.bf16.mxu0 0
        %1506 = vmatpush1.bf16.msra.mxu0 0
        %1507 = vmatprep.subr.bf16.mxu0 0
        %1508 = vmatpush1.bf16.msra.mxu0 0
        %1509 = vmatprep.subr.bf16.mxu0 0
        %1510 = vmatpush1.bf16.msra.mxu0 0
        %1511 = vmatprep.subr.bf16.mxu0 0
        %1512 = vmatpush1.bf16.msra.mxu0 0
        %1513 = vmatprep.subr.bf16.mxu0 0
        %1514 = vmatpush1.bf16.msra.mxu0 0
        %1515 = vmatprep.subr.bf16.mxu0 0
        %1516 = vmatpush1.bf16.msra.mxu0 0
        %1517 = vmatprep.subr.bf16.mxu0 0
        %1518 = vmatpush1.bf16.msra.mxu0 0
        %1519 = vmatprep.mubr.bf16.mxu0 0
        %1520 = vmatmul.mubr.bf16.gmra.mrb[0].mxu0 %v1181
        %v1521 = vpop.f32.mrb[0].mxu0
        %v1522 = vadd.f32 %v1410, %v1521
        %v1523 = vpop.f32.mrb[0].mxu0
        %v1524 = vpop.f32.mrb[0].mxu0
        %v1525 = vpop.f32.mrb[0].mxu0
        %1526 = vdwg.mxu0
        %v1531 = vunpack.c.l.b16 %v1387
        %v1532 = vunpack.c.l.b16 %v1388
        %v1533 = vunpack.c.l.b16 %v1389
        %v1534 = vunpack.c.l.b16 %v1390
        %v1535 = vpack.c.b16 %v1532, %v1531
        %v1536 = vpack.c.b16 %v1534, %v1533
        %1539 = vmatprep.subr.bf16.mxu0 0
        %1540 = vmatpush1.bf16.msra.mxu0 %v1535
        %1541 = vmatprep.subr.bf16.mxu0 0
        %1542 = vmatpush1.bf16.msra.mxu0 %v1536
        %1543 = vmatprep.subr.bf16.mxu0 0
        %1544 = vmatpush1.bf16.msra.mxu0 0
        %1545 = vmatprep.subr.bf16.mxu0 0
        %1546 = vmatpush1.bf16.msra.mxu0 0
        %1547 = vmatprep.subr.bf16.mxu0 0
        %1548 = vmatpush1.bf16.msra.mxu0 0
        %1549 = vmatprep.subr.bf16.mxu0 0
        %1550 = vmatpush1.bf16.msra.mxu0 0
        %1551 = vmatprep.subr.bf16.mxu0 0
        %1552 = vmatpush1.bf16.msra.mxu0 0
        %1553 = vmatprep.subr.bf16.mxu0 0
        %1554 = vmatpush1.bf16.msra.mxu0 0
        %1555 = vmatprep.subr.bf16.mxu0 0
        %1556 = vmatpush1.bf16.msra.mxu0 0
        %1557 = vmatprep.subr.bf16.mxu0 0
        %1558 = vmatpush1.bf16.msra.mxu0 0
        %1559 = vmatprep.subr.bf16.mxu0 0
        %1560 = vmatpush1.bf16.msra.mxu0 0
        %1561 = vmatprep.subr.bf16.mxu0 0
        %1562 = vmatpush1.bf16.msra.mxu0 0
        %1563 = vmatprep.subr.bf16.mxu0 0
        %1564 = vmatpush1.bf16.msra.mxu0 0
        %1565 = vmatprep.subr.bf16.mxu0 0
        %1566 = vmatpush1.bf16.msra.mxu0 0
        %1567 = vmatprep.subr.bf16.mxu0 0
        %1568 = vmatpush1.bf16.msra.mxu0 0
        %1569 = vmatprep.subr.bf16.mxu0 0
        %1570 = vmatpush1.bf16.msra.mxu0 0
        %1571 = vmatprep.mubr.bf16.mxu0 0
        %1572 = vmatmul.mubr.bf16.gmra.mrb[0].mxu0 %v1181
        %v1573 = vpop.f32.mrb[0].mxu0
        %v1574 = vadd.f32 %v1414, %v1573
        %v1575 = vpop.f32.mrb[0].mxu0
        %v1576 = vpop.f32.mrb[0].mxu0
        %v1577 = vpop.f32.mrb[0].mxu0
        %1578 = vdwg.mxu0
        %v1583 = vunpack.c.l.b16 %v1391
        %v1584 = vunpack.c.l.b16 %v1392
        %v1585 = vunpack.c.l.b16 %v1393
        %v1586 = vunpack.c.l.b16 %v1394
        %v1587 = vpack.c.b16 %v1584, %v1583
        %v1588 = vpack.c.b16 %v1586, %v1585
        %1591 = vmatprep.subr.bf16.mxu0 0
        %1592 = vmatpush1.bf16.msra.mxu0 %v1587
        %1593 = vmatprep.subr.bf16.mxu0 0
        %1594 = vmatpush1.bf16.msra.mxu0 %v1588
        %1595 = vmatprep.subr.bf16.mxu0 0
        %1596 = vmatpush1.bf16.msra.mxu0 0
        %1597 = vmatprep.subr.bf16.mxu0 0
        %1598 = vmatpush1.bf16.msra.mxu0 0
        %1599 = vmatprep.subr.bf16.mxu0 0
        %1600 = vmatpush1.bf16.msra.mxu0 0
        %1601 = vmatprep.subr.bf16.mxu0 0
        %1602 = vmatpush1.bf16.msra.mxu0 0
        %1603 = vmatprep.subr.bf16.mxu0 0
        %1604 = vmatpush1.bf16.msra.mxu0 0
        %1605 = vmatprep.subr.bf16.mxu0 0
        %1606 = vmatpush1.bf16.msra.mxu0 0
        %1607 = vmatprep.subr.bf16.mxu0 0
        %1608 = vmatpush1.bf16.msra.mxu0 0
        %1609 = vmatprep.subr.bf16.mxu0 0
        %1610 = vmatpush1.bf16.msra.mxu0 0
        %1611 = vmatprep.subr.bf16.mxu0 0
        %1612 = vmatpush1.bf16.msra.mxu0 0
        %1613 = vmatprep.subr.bf16.mxu0 0
        %1614 = vmatpush1.bf16.msra.mxu0 0
        %1615 = vmatprep.subr.bf16.mxu0 0
        %1616 = vmatpush1.bf16.msra.mxu0 0
        %1617 = vmatprep.subr.bf16.mxu0 0
        %1618 = vmatpush1.bf16.msra.mxu0 0
        %1619 = vmatprep.subr.bf16.mxu0 0
        %1620 = vmatpush1.bf16.msra.mxu0 0
        %1621 = vmatprep.subr.bf16.mxu0 0
        %1622 = vmatpush1.bf16.msra.mxu0 0
        %1623 = vmatprep.mubr.bf16.mxu0 0
        %1624 = vmatmul.mubr.bf16.gmra.mrb[0].mxu0 %v1181
        %v1625 = vpop.f32.mrb[0].mxu0
        %v1626 = vadd.f32 %v1418, %v1625
        %v1627 = vpop.f32.mrb[0].mxu0
        %v1628 = vpop.f32.mrb[0].mxu0
        %v1629 = vpop.f32.mrb[0].mxu0
        %1630 = vdwg.mxu0
        %v1631 = vpack.c.bf16 %v963, %v963
        %v1632 = vpack.c.bf16 %v1015, %v1015
        %v1633 = vpack.c.bf16 %v1067, %v1067
        %v1634 = vpack.c.bf16 %v1119, %v1119
        %v1635 = vpack.c.bf16 %v1218, %v1218
        %v1636 = vpack.c.bf16 %v1270, %v1270
        %v1637 = vpack.c.bf16 %v1322, %v1322
        %v1638 = vpack.c.bf16 %v1374, %v1374
        %v1640 = vsel %vm810, %v1631, 0
        %v1643 = vsel %vm810, %v1635, 0
        %1645 = vmatprep.subr.bf16.mxu0 0
        %1646 = vmatpush1.bf16.xpose.msra.mxu0 %v1643
        %1647 = vmatprep.subr.bf16.mxu0 0
        %1648 = vmatpush1.bf16.xpose.msra.mxu0 0
        %1649 = vmatprep.subr.bf16.mxu0 0
        %1650 = vmatpush1.bf16.xpose.msra.mxu0 0
        %1651 = vmatprep.subr.bf16.mxu0 0
        %1652 = vmatpush1.bf16.xpose.msra.mxu0 0
        %1653 = vmatprep.subr.bf16.mxu0 0
        %1654 = vmatpush1.bf16.xpose.msra.mxu0 0
        %1655 = vmatprep.subr.bf16.mxu0 0
        %1656 = vmatpush1.bf16.xpose.msra.mxu0 0
        %1657 = vmatprep.subr.bf16.mxu0 0
        %1658 = vmatpush1.bf16.xpose.msra.mxu0 0
        %1659 = vmatprep.subr.bf16.mxu0 0
        %1660 = vmatpush1.bf16.xpose.msra.mxu0 0
        %1661 = vmatprep.subr.bf16.mxu0 0
        %1662 = vmatpush1.bf16.xpose.msra.mxu0 0
        %1663 = vmatprep.subr.bf16.mxu0 0
        %1664 = vmatpush1.bf16.xpose.msra.mxu0 0
        %1665 = vmatprep.subr.bf16.mxu0 0
        %1666 = vmatpush1.bf16.xpose.msra.mxu0 0
        %1667 = vmatprep.subr.bf16.mxu0 0
        %1668 = vmatpush1.bf16.xpose.msra.mxu0 0
        %1669 = vmatprep.subr.bf16.mxu0 0
        %1670 = vmatpush1.bf16.xpose.msra.mxu0 0
        %1671 = vmatprep.subr.bf16.mxu0 0
        %1672 = vmatpush1.bf16.xpose.msra.mxu0 0
        %1673 = vmatprep.subr.bf16.mxu0 0
        %1674 = vmatpush1.bf16.xpose.msra.mxu0 0
        %1675 = vmatprep.subr.bf16.mxu0 0
        %1676 = vmatpush1.bf16.xpose.msra.mxu0 0
        %1677 = vmatprep.mubr.bf16.mxu0 0
        %1678 = vmatmul.mubr.bf16.gmra.mrb[0].mxu0 %v1640
        %v1679 = vpop.f32.mrb[0].mxu0
        %v1680 = vadd.f32 0.0, %v1679
        %v1681 = vpop.f32.mrb[0].mxu0
        %v1682 = vpop.f32.mrb[0].mxu0
        %v1683 = vpop.f32.mrb[0].mxu0
        %1684 = vdwg.mxu0
        %v1686 = vsel %vm810, %v1632, 0
        %v1689 = vsel %vm810, %v1636, 0
        %1691 = vmatprep.subr.bf16.mxu0 0
        %1692 = vmatpush1.bf16.xpose.msra.mxu0 %v1689
        %1693 = vmatprep.subr.bf16.mxu0 0
        %1694 = vmatpush1.bf16.xpose.msra.mxu0 0
        %1695 = vmatprep.subr.bf16.mxu0 0
        %1696 = vmatpush1.bf16.xpose.msra.mxu0 0
        %1697 = vmatprep.subr.bf16.mxu0 0
        %1698 = vmatpush1.bf16.xpose.msra.mxu0 0
        %1699 = vmatprep.subr.bf16.mxu0 0
        %1700 = vmatpush1.bf16.xpose.msra.mxu0 0
        %1701 = vmatprep.subr.bf16.mxu0 0
        %1702 = vmatpush1.bf16.xpose.msra.mxu0 0
        %1703 = vmatprep.subr.bf16.mxu0 0
        %1704 = vmatpush1.bf16.xpose.msra.mxu0 0
        %1705 = vmatprep.subr.bf16.mxu0 0
        %1706 = vmatpush1.bf16.xpose.msra.mxu0 0
        %1707 = vmatprep.subr.bf16.mxu0 0
        %1708 = vmatpush1.bf16.xpose.msra.mxu0 0
        %1709 = vmatprep.subr.bf16.mxu0 0
        %1710 = vmatpush1.bf16.xpose.msra.mxu0 0
        %1711 = vmatprep.subr.bf16.mxu0 0
        %1712 = vmatpush1.bf16.xpose.msra.mxu0 0
        %1713 = vmatprep.subr.bf16.mxu0 0
        %1714 = vmatpush1.bf16.xpose.msra.mxu0 0
        %1715 = vmatprep.subr.bf16.mxu0 0
        %1716 = vmatpush1.bf16.xpose.msra.mxu0 0
        %1717 = vmatprep.subr.bf16.mxu0 0
        %1718 = vmatpush1.bf16.xpose.msra.mxu0 0
        %1719 = vmatprep.subr.bf16.mxu0 0
        %1720 = vmatpush1.bf16.xpose.msra.mxu0 0
        %1721 = vmatprep.subr.bf16.mxu0 0
        %1722 = vmatpush1.bf16.xpose.msra.mxu0 0
        %1723 = vmatprep.mubr.bf16.mxu0 0
        %1724 = vmatmul.mubr.bf16.gmra.mrb[0].mxu0 %v1686
        %v1725 = vpop.f32.mrb[0].mxu0
        %v1726 = vadd.f32 0.0, %v1725
        %v1727 = vpop.f32.mrb[0].mxu0
        %v1728 = vpop.f32.mrb[0].mxu0
        %v1729 = vpop.f32.mrb[0].mxu0
        %1730 = vdwg.mxu0
        %v1732 = vsel %vm810, %v1633, 0
        %v1735 = vsel %vm810, %v1637, 0
        %1737 = vmatprep.subr.bf16.mxu0 0
        %1738 = vmatpush1.bf16.xpose.msra.mxu0 %v1735
        %1739 = vmatprep.subr.bf16.mxu0 0
        %1740 = vmatpush1.bf16.xpose.msra.mxu0 0
        %1741 = vmatprep.subr.bf16.mxu0 0
        %1742 = vmatpush1.bf16.xpose.msra.mxu0 0
        %1743 = vmatprep.subr.bf16.mxu0 0
        %1744 = vmatpush1.bf16.xpose.msra.mxu0 0
        %1745 = vmatprep.subr.bf16.mxu0 0
        %1746 = vmatpush1.bf16.xpose.msra.mxu0 0
        %1747 = vmatprep.subr.bf16.mxu0 0
        %1748 = vmatpush1.bf16.xpose.msra.mxu0 0
        %1749 = vmatprep.subr.bf16.mxu0 0
        %1750 = vmatpush1.bf16.xpose.msra.mxu0 0
        %1751 = vmatprep.subr.bf16.mxu0 0
        %1752 = vmatpush1.bf16.xpose.msra.mxu0 0
        %1753 = vmatprep.subr.bf16.mxu0 0
        %1754 = vmatpush1.bf16.xpose.msra.mxu0 0
        %1755 = vmatprep.subr.bf16.mxu0 0
        %1756 = vmatpush1.bf16.xpose.msra.mxu0 0
        %1757 = vmatprep.subr.bf16.mxu0 0
        %1758 = vmatpush1.bf16.xpose.msra.mxu0 0
        %1759 = vmatprep.subr.bf16.mxu0 0
        %1760 = vmatpush1.bf16.xpose.msra.mxu0 0
        %1761 = vmatprep.subr.bf16.mxu0 0
        %1762 = vmatpush1.bf16.xpose.msra.mxu0 0
        %1763 = vmatprep.subr.bf16.mxu0 0
        %1764 = vmatpush1.bf16.xpose.msra.mxu0 0
        %1765 = vmatprep.subr.bf16.mxu0 0
        %1766 = vmatpush1.bf16.xpose.msra.mxu0 0
        %1767 = vmatprep.subr.bf16.mxu0 0
        %1768 = vmatpush1.bf16.xpose.msra.mxu0 0
        %1769 = vmatprep.mubr.bf16.mxu0 0
        %1770 = vmatmul.mubr.bf16.gmra.mrb[0].mxu0 %v1732
        %v1771 = vpop.f32.mrb[0].mxu0
        %v1772 = vadd.f32 0.0, %v1771
        %v1773 = vpop.f32.mrb[0].mxu0
        %v1774 = vpop.f32.mrb[0].mxu0
        %v1775 = vpop.f32.mrb[0].mxu0
        %1776 = vdwg.mxu0
        %v1778 = vsel %vm810, %v1634, 0
        %v1781 = vsel %vm810, %v1638, 0
        %1783 = vmatprep.subr.bf16.mxu0 0
        %1784 = vmatpush1.bf16.xpose.msra.mxu0 %v1781
        %1785 = vmatprep.subr.bf16.mxu0 0
        %1786 = vmatpush1.bf16.xpose.msra.mxu0 0
        %1787 = vmatprep.subr.bf16.mxu0 0
        %1788 = vmatpush1.bf16.xpose.msra.mxu0 0
        %1789 = vmatprep.subr.bf16.mxu0 0
        %1790 = vmatpush1.bf16.xpose.msra.mxu0 0
        %1791 = vmatprep.subr.bf16.mxu0 0
        %1792 = vmatpush1.bf16.xpose.msra.mxu0 0
        %1793 = vmatprep.subr.bf16.mxu0 0
        %1794 = vmatpush1.bf16.xpose.msra.mxu0 0
        %1795 = vmatprep.subr.bf16.mxu0 0
        %1796 = vmatpush1.bf16.xpose.msra.mxu0 0
        %1797 = vmatprep.subr.bf16.mxu0 0
        %1798 = vmatpush1.bf16.xpose.msra.mxu0 0
        %1799 = vmatprep.subr.bf16.mxu0 0
        %1800 = vmatpush1.bf16.xpose.msra.mxu0 0
        %1801 = vmatprep.subr.bf16.mxu0 0
        %1802 = vmatpush1.bf16.xpose.msra.mxu0 0
        %1803 = vmatprep.subr.bf16.mxu0 0
        %1804 = vmatpush1.bf16.xpose.msra.mxu0 0
        %1805 = vmatprep.subr.bf16.mxu0 0
        %1806 = vmatpush1.bf16.xpose.msra.mxu0 0
        %1807 = vmatprep.subr.bf16.mxu0 0
        %1808 = vmatpush1.bf16.xpose.msra.mxu0 0
        %1809 = vmatprep.subr.bf16.mxu0 0
        %1810 = vmatpush1.bf16.xpose.msra.mxu0 0
        %1811 = vmatprep.subr.bf16.mxu0 0
        %1812 = vmatpush1.bf16.xpose.msra.mxu0 0
        %1813 = vmatprep.subr.bf16.mxu0 0
        %1814 = vmatpush1.bf16.xpose.msra.mxu0 0
        %1815 = vmatprep.mubr.bf16.mxu0 0
        %1816 = vmatmul.mubr.bf16.gmra.mrb[0].mxu0 %v1778
        %v1817 = vpop.f32.mrb[0].mxu0
        %v1818 = vadd.f32 0.0, %v1817
        %v1819 = vpop.f32.mrb[0].mxu0
        %v1820 = vpop.f32.mrb[0].mxu0
        %v1821 = vpop.f32.mrb[0].mxu0
        %1822 = vdwg.mxu0
        %v1823 = vmul.f32 %v1680, 0.35355338
        %v1824 = vmul.f32 %v1726, 0.35355338
        %v1825 = vmul.f32 %v1772, 0.35355338
        %v1826 = vmul.f32 %v1818, 0.35355338
        %v1827 = vsel %vm818, -10000.0, %v1823
        %v1828 = vsel %vm818, -10000.0, %v1824
        %v1829 = vsel %vm818, -10000.0, %v1825
        %v1830 = vsel %vm818, -10000.0, %v1826
        %v1831 = vsel %vm810, %v1827, -inf
        %1832 = vmax.xlane.f32.xlu0 %v1831
        %v1833 = vpop.xlane.xlu0 %1832
        %v1834 = vsel %vm810, %v1828, -inf
        %1835 = vmax.xlane.f32.xlu0 %v1834
        %v1836 = vpop.xlane.xlu0 %1835
        %v1837 = vsel %vm810, %v1829, -inf
        %1838 = vmax.xlane.f32.xlu0 %v1837
        %v1839 = vpop.xlane.xlu0 %1838
        %v1840 = vsel %vm810, %v1830, -inf
        %1841 = vmax.xlane.f32.xlu0 %v1840
        %v1842 = vpop.xlane.xlu0 %1841
        %v1843 = vsub.f32 %v1827, %v1833
        %v1844 = vsub.f32 %v1828, %v1836
        %v1845 = vsub.f32 %v1829, %v1839
        %v1846 = vsub.f32 %v1830, %v1842
        %v1847 = vmul.f32 %v1843, 1.442695
        %v1848 = vpow.pop %v1847
        %v1849 = vmul.f32 %v1844, 1.442695
        %v1850 = vpow.pop %v1849
        %v1851 = vmul.f32 %v1845, 1.442695
        %v1852 = vpow.pop %v1851
        %v1853 = vmul.f32 %v1846, 1.442695
        %v1854 = vpow.pop %v1853
        %v1855 = vsel %vm810, %v1848, 0.0
        %1856 = vadd.xlane.f32.xlu0 %v1855
        %v1857 = vpop.xlane.xlu0 %1856
        %v1858 = vsel %vm810, %v1850, 0.0
        %1859 = vadd.xlane.f32.xlu0 %v1858
        %v1860 = vpop.xlane.xlu0 %1859
        %v1861 = vsel %vm810, %v1852, 0.0
        %1862 = vadd.xlane.f32.xlu0 %v1861
        %v1863 = vpop.xlane.xlu0 %1862
        %v1864 = vsel %vm810, %v1854, 0.0
        %1865 = vadd.xlane.f32.xlu0 %v1864
        %v1866 = vpop.xlane.xlu0 %1865
        %v1867 = vrcp.pop %v1857
        %v1868 = vrcp.pop %v1860
        %v1869 = vrcp.pop %v1863
        %v1870 = vrcp.pop %v1866
        %v1871 = vmul.f32 %v1848, %v1867
        %v1872 = vmul.f32 %v1850, %v1868
        %v1873 = vmul.f32 %v1852, %v1869
        %v1874 = vmul.f32 %v1854, %v1870
        %v1875 = vpack.c.bf16 %v1871, %v1871
        %v1876 = vpack.c.bf16 %v1872, %v1872
        %v1877 = vpack.c.bf16 %v1873, %v1873
        %v1878 = vpack.c.bf16 %v1874, %v1874
        %v1879 = vpack.c.bf16 %v1470, %v1470
        %v1880 = vpack.c.bf16 %v1522, %v1522
        %v1881 = vpack.c.bf16 %v1574, %v1574
        %v1882 = vpack.c.bf16 %v1626, %v1626
        %v1884 = vsel %vm810, %v1875, 0
        %v1887 = vsel %vm823, %v1879, 0
        %1889 = vmatprep.subr.bf16.mxu0 0
        %1890 = vmatpush1.bf16.msra.mxu0 %v1887
        %1891 = vmatprep.subr.bf16.mxu0 0
        %1892 = vmatpush1.bf16.msra.mxu0 0
        %1893 = vmatprep.subr.bf16.mxu0 0
        %1894 = vmatpush1.bf16.msra.mxu0 0
        %1895 = vmatprep.subr.bf16.mxu0 0
        %1896 = vmatpush1.bf16.msra.mxu0 0
        %1897 = vmatprep.subr.bf16.mxu0 0
        %1898 = vmatpush1.bf16.msra.mxu0 0
        %1899 = vmatprep.subr.bf16.mxu0 0
        %1900 = vmatpush1.bf16.msra.mxu0 0
        %1901 = vmatprep.subr.bf16.mxu0 0
        %1902 = vmatpush1.bf16.msra.mxu0 0
        %1903 = vmatprep.subr.bf16.mxu0 0
        %1904 = vmatpush1.bf16.msra.mxu0 0
        %1905 = vmatprep.subr.bf16.mxu0 0
        %1906 = vmatpush1.bf16.msra.mxu0 0
        %1907 = vmatprep.subr.bf16.mxu0 0
        %1908 = vmatpush1.bf16.msra.mxu0 0
        %1909 = vmatprep.subr.bf16.mxu0 0
        %1910 = vmatpush1.bf16.msra.mxu0 0
        %1911 = vmatprep.subr.bf16.mxu0 0
        %1912 = vmatpush1.bf16.msra.mxu0 0
        %1913 = vmatprep.subr.bf16.mxu0 0
        %1914 = vmatpush1.bf16.msra.mxu0 0
        %1915 = vmatprep.subr.bf16.mxu0 0
        %1916 = vmatpush1.bf16.msra.mxu0 0
        %1917 = vmatprep.subr.bf16.mxu0 0
        %1918 = vmatpush1.bf16.msra.mxu0 0
        %1919 = vmatprep.subr.bf16.mxu0 0
        %1920 = vmatpush1.bf16.msra.mxu0 0
        %1921 = vmatprep.mubr.bf16.mxu0 0
        %1922 = vmatmul.mubr.bf16.gmra.mrb[0].mxu0 %v1884
        %v1923 = vpop.f32.mrb[0].mxu0
        %v1924 = vadd.f32 0.0, %v1923
        %v1925 = vpop.f32.mrb[0].mxu0
        %v1926 = vpop.f32.mrb[0].mxu0
        %v1927 = vpop.f32.mrb[0].mxu0
        %1928 = vdwg.mxu0
        %v1930 = vsel %vm810, %v1876, 0
        %v1933 = vsel %vm823, %v1880, 0
        %1935 = vmatprep.subr.bf16.mxu0 0
        %1936 = vmatpush1.bf16.msra.mxu0 %v1933
        %1937 = vmatprep.subr.bf16.mxu0 0
        %1938 = vmatpush1.bf16.msra.mxu0 0
        %1939 = vmatprep.subr.bf16.mxu0 0
        %1940 = vmatpush1.bf16.msra.mxu0 0
        %1941 = vmatprep.subr.bf16.mxu0 0
        %1942 = vmatpush1.bf16.msra.mxu0 0
        %1943 = vmatprep.subr.bf16.mxu0 0
        %1944 = vmatpush1.bf16.msra.mxu0 0
        %1945 = vmatprep.subr.bf16.mxu0 0
        %1946 = vmatpush1.bf16.msra.mxu0 0
        %1947 = vmatprep.subr.bf16.mxu0 0
        %1948 = vmatpush1.bf16.msra.mxu0 0
        %1949 = vmatprep.subr.bf16.mxu0 0
        %1950 = vmatpush1.bf16.msra.mxu0 0
        %1951 = vmatprep.subr.bf16.mxu0 0
        %1952 = vmatpush1.bf16.msra.mxu0 0
        %1953 = vmatprep.subr.bf16.mxu0 0
        %1954 = vmatpush1.bf16.msra.mxu0 0
        %1955 = vmatprep.subr.bf16.mxu0 0
        %1956 = vmatpush1.bf16.msra.mxu0 0
        %1957 = vmatprep.subr.bf16.mxu0 0
        %1958 = vmatpush1.bf16.msra.mxu0 0
        %1959 = vmatprep.subr.bf16.mxu0 0
        %1960 = vmatpush1.bf16.msra.mxu0 0
        %1961 = vmatprep.subr.bf16.mxu0 0
        %1962 = vmatpush1.bf16.msra.mxu0 0
        %1963 = vmatprep.subr.bf16.mxu0 0
        %1964 = vmatpush1.bf16.msra.mxu0 0
        %1965 = vmatprep.subr.bf16.mxu0 0
        %1966 = vmatpush1.bf16.msra.mxu0 0
        %1967 = vmatprep.mubr.bf16.mxu0 0
        %1968 = vmatmul.mubr.bf16.gmra.mrb[0].mxu0 %v1930
        %v1969 = vpop.f32.mrb[0].mxu0
        %v1970 = vadd.f32 0.0, %v1969
        %v1971 = vpop.f32.mrb[0].mxu0
        %v1972 = vpop.f32.mrb[0].mxu0
        %v1973 = vpop.f32.mrb[0].mxu0
        %1974 = vdwg.mxu0
        %v1976 = vsel %vm810, %v1877, 0
        %v1979 = vsel %vm823, %v1881, 0
        %1981 = vmatprep.subr.bf16.mxu0 0
        %1982 = vmatpush1.bf16.msra.mxu0 %v1979
        %1983 = vmatprep.subr.bf16.mxu0 0
        %1984 = vmatpush1.bf16.msra.mxu0 0
        %1985 = vmatprep.subr.bf16.mxu0 0
        %1986 = vmatpush1.bf16.msra.mxu0 0
        %1987 = vmatprep.subr.bf16.mxu0 0
        %1988 = vmatpush1.bf16.msra.mxu0 0
        %1989 = vmatprep.subr.bf16.mxu0 0
        %1990 = vmatpush1.bf16.msra.mxu0 0
        %1991 = vmatprep.subr.bf16.mxu0 0
        %1992 = vmatpush1.bf16.msra.mxu0 0
        %1993 = vmatprep.subr.bf16.mxu0 0
        %1994 = vmatpush1.bf16.msra.mxu0 0
        %1995 = vmatprep.subr.bf16.mxu0 0
        %1996 = vmatpush1.bf16.msra.mxu0 0
        %1997 = vmatprep.subr.bf16.mxu0 0
        %1998 = vmatpush1.bf16.msra.mxu0 0
        %1999 = vmatprep.subr.bf16.mxu0 0
        %2000 = vmatpush1.bf16.msra.mxu0 0
        %2001 = vmatprep.subr.bf16.mxu0 0
        %2002 = vmatpush1.bf16.msra.mxu0 0
        %2003 = vmatprep.subr.bf16.mxu0 0
        %2004 = vmatpush1.bf16.msra.mxu0 0
        %2005 = vmatprep.subr.bf16.mxu0 0
        %2006 = vmatpush1.bf16.msra.mxu0 0
        %2007 = vmatprep.subr.bf16.mxu0 0
        %2008 = vmatpush1.bf16.msra.mxu0 0
        %2009 = vmatprep.subr.bf16.mxu0 0
        %2010 = vmatpush1.bf16.msra.mxu0 0
        %2011 = vmatprep.subr.bf16.mxu0 0
        %2012 = vmatpush1.bf16.msra.mxu0 0
        %2013 = vmatprep.mubr.bf16.mxu0 0
        %2014 = vmatmul.mubr.bf16.gmra.mrb[0].mxu0 %v1976
        %v2015 = vpop.f32.mrb[0].mxu0
        %v2016 = vadd.f32 0.0, %v2015
        %v2017 = vpop.f32.mrb[0].mxu0
        %v2018 = vpop.f32.mrb[0].mxu0
        %v2019 = vpop.f32.mrb[0].mxu0
        %2020 = vdwg.mxu0
        %v2022 = vsel %vm810, %v1878, 0
        %v2025 = vsel %vm823, %v1882, 0
        %2027 = vmatprep.subr.bf16.mxu0 0
        %2028 = vmatpush1.bf16.msra.mxu0 %v2025
        %2029 = vmatprep.subr.bf16.mxu0 0
        %2030 = vmatpush1.bf16.msra.mxu0 0
        %2031 = vmatprep.subr.bf16.mxu0 0
        %2032 = vmatpush1.bf16.msra.mxu0 0
        %2033 = vmatprep.subr.bf16.mxu0 0
        %2034 = vmatpush1.bf16.msra.mxu0 0
        %2035 = vmatprep.subr.bf16.mxu0 0
        %2036 = vmatpush1.bf16.msra.mxu0 0
        %2037 = vmatprep.subr.bf16.mxu0 0
        %2038 = vmatpush1.bf16.msra.mxu0 0
        %2039 = vmatprep.subr.bf16.mxu0 0
        %2040 = vmatpush1.bf16.msra.mxu0 0
        %2041 = vmatprep.subr.bf16.mxu0 0
        %2042 = vmatpush1.bf16.msra.mxu0 0
        %2043 = vmatprep.subr.bf16.mxu0 0
        %2044 = vmatpush1.bf16.msra.mxu0 0
        %2045 = vmatprep.subr.bf16.mxu0 0
        %2046 = vmatpush1.bf16.msra.mxu0 0
        %2047 = vmatprep.subr.bf16.mxu0 0
        %2048 = vmatpush1.bf16.msra.mxu0 0
        %2049 = vmatprep.subr.bf16.mxu0 0
        %2050 = vmatpush1.bf16.msra.mxu0 0
        %2051 = vmatprep.subr.bf16.mxu0 0
        %2052 = vmatpush1.bf16.msra.mxu0 0
        %2053 = vmatprep.subr.bf16.mxu0 0
        %2054 = vmatpush1.bf16.msra.mxu0 0
        %2055 = vmatprep.subr.bf16.mxu0 0
        %2056 = vmatpush1.bf16.msra.mxu0 0
        %2057 = vmatprep.subr.bf16.mxu0 0
        %2058 = vmatpush1.bf16.msra.mxu0 0
        %2059 = vmatprep.mubr.bf16.mxu0 0
        %2060 = vmatmul.mubr.bf16.gmra.mrb[0].mxu0 %v2022
        %v2061 = vpop.f32.mrb[0].mxu0
        %v2062 = vadd.f32 0.0, %v2061
        %v2063 = vpop.f32.mrb[0].mxu0
        %v2064 = vpop.f32.mrb[0].mxu0
        %v2065 = vpop.f32.mrb[0].mxu0
        %2066 = vdwg.mxu0
        %v2067 = vpack.c.bf16 %v1924, %v1924
        %v2068 = vpack.c.bf16 %v1970, %v1970
        %v2069 = vpack.c.bf16 %v2016, %v2016
        %v2070 = vpack.c.bf16 %v2062, %v2062
        %v2071 = vld [vmem:[%s12] sm:$0xf]
        %v2072 = vld [vmem:[%s12 + $0x4] sm:$0xf]
        %v2073 = vld [vmem:[%s12 + $0x8] sm:$0xf]
        %v2074 = vld [vmem:[%s12 + $0xc] sm:$0xf]
        %v2076 = vsel %vm810, %v2067, 0
        %v2079 = vsel %vm823, %v2071, 0
        %2081 = vmatprep.subr.bf16.mxu0 0
        %2082 = vmatpush1.bf16.msra.mxu0 %v2079
        %2083 = vmatprep.subr.bf16.mxu0 0
        %2084 = vmatpush1.bf16.msra.mxu0 0
        %2085 = vmatprep.subr.bf16.mxu0 0
        %2086 = vmatpush1.bf16.msra.mxu0 0
        %2087 = vmatprep.subr.bf16.mxu0 0
        %2088 = vmatpush1.bf16.msra.mxu0 0
        %2089 = vmatprep.subr.bf16.mxu0 0
        %2090 = vmatpush1.bf16.msra.mxu0 0
        %2091 = vmatprep.subr.bf16.mxu0 0
        %2092 = vmatpush1.bf16.msra.mxu0 0
        %2093 = vmatprep.subr.bf16.mxu0 0
        %2094 = vmatpush1.bf16.msra.mxu0 0
        %2095 = vmatprep.subr.bf16.mxu0 0
        %2096 = vmatpush1.bf16.msra.mxu0 0
        %2097 = vmatprep.subr.bf16.mxu0 0
        %2098 = vmatpush1.bf16.msra.mxu0 0
        %2099 = vmatprep.subr.bf16.mxu0 0
        %2100 = vmatpush1.bf16.msra.mxu0 0
        %2101 = vmatprep.subr.bf16.mxu0 0
        %2102 = vmatpush1.bf16.msra.mxu0 0
        %2103 = vmatprep.subr.bf16.mxu0 0
        %2104 = vmatpush1.bf16.msra.mxu0 0
        %2105 = vmatprep.subr.bf16.mxu0 0
        %2106 = vmatpush1.bf16.msra.mxu0 0
        %2107 = vmatprep.subr.bf16.mxu0 0
        %2108 = vmatpush1.bf16.msra.mxu0 0
        %2109 = vmatprep.subr.bf16.mxu0 0
        %2110 = vmatpush1.bf16.msra.mxu0 0
        %2111 = vmatprep.subr.bf16.mxu0 0
        %2112 = vmatpush1.bf16.msra.mxu0 0
        %2113 = vmatprep.mubr.bf16.mxu0 0
        %2114 = vmatmul.mubr.bf16.gmra.mrb[0].mxu0 %v2076
        %v2115 = vpop.f32.mrb[0].mxu0
        %v2116 = vadd.f32 0.0, %v2115
        %v2117 = vpop.f32.mrb[0].mxu0
        %v2118 = vpop.f32.mrb[0].mxu0
        %v2119 = vpop.f32.mrb[0].mxu0
        %2120 = vdwg.mxu0
        %v2122 = vsel %vm810, %v2068, 0
        %v2125 = vsel %vm823, %v2072, 0
        %2127 = vmatprep.subr.bf16.mxu0 0
        %2128 = vmatpush1.bf16.msra.mxu0 %v2125
        %2129 = vmatprep.subr.bf16.mxu0 0
        %2130 = vmatpush1.bf16.msra.mxu0 0
        %2131 = vmatprep.subr.bf16.mxu0 0
        %2132 = vmatpush1.bf16.msra.mxu0 0
        %2133 = vmatprep.subr.bf16.mxu0 0
        %2134 = vmatpush1.bf16.msra.mxu0 0
        %2135 = vmatprep.subr.bf16.mxu0 0
        %2136 = vmatpush1.bf16.msra.mxu0 0
        %2137 = vmatprep.subr.bf16.mxu0 0
        %2138 = vmatpush1.bf16.msra.mxu0 0
        %2139 = vmatprep.subr.bf16.mxu0 0
        %2140 = vmatpush1.bf16.msra.mxu0 0
        %2141 = vmatprep.subr.bf16.mxu0 0
        %2142 = vmatpush1.bf16.msra.mxu0 0
        %2143 = vmatprep.subr.bf16.mxu0 0
        %2144 = vmatpush1.bf16.msra.mxu0 0
        %2145 = vmatprep.subr.bf16.mxu0 0
        %2146 = vmatpush1.bf16.msra.mxu0 0
        %2147 = vmatprep.subr.bf16.mxu0 0
        %2148 = vmatpush1.bf16.msra.mxu0 0
        %2149 = vmatprep.subr.bf16.mxu0 0
        %2150 = vmatpush1.bf16.msra.mxu0 0
        %2151 = vmatprep.subr.bf16.mxu0 0
        %2152 = vmatpush1.bf16.msra.mxu0 0
        %2153 = vmatprep.subr.bf16.mxu0 0
        %2154 = vmatpush1.bf16.msra.mxu0 0
        %2155 = vmatprep.subr.bf16.mxu0 0
        %2156 = vmatpush1.bf16.msra.mxu0 0
        %2157 = vmatprep.subr.bf16.mxu0 0
        %2158 = vmatpush1.bf16.msra.mxu0 0
        %2159 = vmatprep.mubr.bf16.mxu0 0
        %2160 = vmatmul.mubr.bf16.gmra.mrb[0].mxu0 %v2122
        %v2161 = vpop.f32.mrb[0].mxu0
        %v2162 = vadd.f32 0.0, %v2161
        %v2163 = vpop.f32.mrb[0].mxu0
        %v2164 = vpop.f32.mrb[0].mxu0
        %v2165 = vpop.f32.mrb[0].mxu0
        %2166 = vdwg.mxu0
        %v2168 = vsel %vm810, %v2069, 0
        %v2171 = vsel %vm823, %v2073, 0
        %2173 = vmatprep.subr.bf16.mxu0 0
        %2174 = vmatpush1.bf16.msra.mxu0 %v2171
        %2175 = vmatprep.subr.bf16.mxu0 0
        %2176 = vmatpush1.bf16.msra.mxu0 0
        %2177 = vmatprep.subr.bf16.mxu0 0
        %2178 = vmatpush1.bf16.msra.mxu0 0
        %2179 = vmatprep.subr.bf16.mxu0 0
        %2180 = vmatpush1.bf16.msra.mxu0 0
        %2181 = vmatprep.subr.bf16.mxu0 0
        %2182 = vmatpush1.bf16.msra.mxu0 0
        %2183 = vmatprep.subr.bf16.mxu0 0
        %2184 = vmatpush1.bf16.msra.mxu0 0
        %2185 = vmatprep.subr.bf16.mxu0 0
        %2186 = vmatpush1.bf16.msra.mxu0 0
        %2187 = vmatprep.subr.bf16.mxu0 0
        %2188 = vmatpush1.bf16.msra.mxu0 0
        %2189 = vmatprep.subr.bf16.mxu0 0
        %2190 = vmatpush1.bf16.msra.mxu0 0
        %2191 = vmatprep.subr.bf16.mxu0 0
        %2192 = vmatpush1.bf16.msra.mxu0 0
        %2193 = vmatprep.subr.bf16.mxu0 0
        %2194 = vmatpush1.bf16.msra.mxu0 0
        %2195 = vmatprep.subr.bf16.mxu0 0
        %2196 = vmatpush1.bf16.msra.mxu0 0
        %2197 = vmatprep.subr.bf16.mxu0 0
        %2198 = vmatpush1.bf16.msra.mxu0 0
        %2199 = vmatprep.subr.bf16.mxu0 0
        %2200 = vmatpush1.bf16.msra.mxu0 0
        %2201 = vmatprep.subr.bf16.mxu0 0
        %2202 = vmatpush1.bf16.msra.mxu0 0
        %2203 = vmatprep.subr.bf16.mxu0 0
        %2204 = vmatpush1.bf16.msra.mxu0 0
        %2205 = vmatprep.mubr.bf16.mxu0 0
        %2206 = vmatmul.mubr.bf16.gmra.mrb[0].mxu0 %v2168
        %v2207 = vpop.f32.mrb[0].mxu0
        %v2208 = vadd.f32 0.0, %v2207
        %v2209 = vpop.f32.mrb[0].mxu0
        %v2210 = vpop.f32.mrb[0].mxu0
        %v2211 = vpop.f32.mrb[0].mxu0
        %2212 = vdwg.mxu0
        %v2214 = vsel %vm810, %v2070, 0
        %v2217 = vsel %vm823, %v2074, 0
        %2219 = vmatprep.subr.bf16.mxu0 0
        %2220 = vmatpush1.bf16.msra.mxu0 %v2217
        %2221 = vmatprep.subr.bf16.mxu0 0
        %2222 = vmatpush1.bf16.msra.mxu0 0
        %2223 = vmatprep.subr.bf16.mxu0 0
        %2224 = vmatpush1.bf16.msra.mxu0 0
        %2225 = vmatprep.subr.bf16.mxu0 0
        %2226 = vmatpush1.bf16.msra.mxu0 0
        %2227 = vmatprep.subr.bf16.mxu0 0
        %2228 = vmatpush1.bf16.msra.mxu0 0
        %2229 = vmatprep.subr.bf16.mxu0 0
        %2230 = vmatpush1.bf16.msra.mxu0 0
        %2231 = vmatprep.subr.bf16.mxu0 0
        %2232 = vmatpush1.bf16.msra.mxu0 0
        %2233 = vmatprep.subr.bf16.mxu0 0
        %2234 = vmatpush1.bf16.msra.mxu0 0
        %2235 = vmatprep.subr.bf16.mxu0 0
        %2236 = vmatpush1.bf16.msra.mxu0 0
        %2237 = vmatprep.subr.bf16.mxu0 0
        %2238 = vmatpush1.bf16.msra.mxu0 0
        %2239 = vmatprep.subr.bf16.mxu0 0
        %2240 = vmatpush1.bf16.msra.mxu0 0
        %2241 = vmatprep.subr.bf16.mxu0 0
        %2242 = vmatpush1.bf16.msra.mxu0 0
        %2243 = vmatprep.subr.bf16.mxu0 0
        %2244 = vmatpush1.bf16.msra.mxu0 0
        %2245 = vmatprep.subr.bf16.mxu0 0
        %2246 = vmatpush1.bf16.msra.mxu0 0
        %2247 = vmatprep.subr.bf16.mxu0 0
        %2248 = vmatpush1.bf16.msra.mxu0 0
        %2249 = vmatprep.subr.bf16.mxu0 0
        %2250 = vmatpush1.bf16.msra.mxu0 0
        %2251 = vmatprep.mubr.bf16.mxu0 0
        %2252 = vmatmul.mubr.bf16.gmra.mrb[0].mxu0 %v2214
        %v2253 = vpop.f32.mrb[0].mxu0
        %v2254 = vadd.f32 0.0, %v2253
        %v2255 = vpop.f32.mrb[0].mxu0
        %v2256 = vpop.f32.mrb[0].mxu0
        %v2257 = vpop.f32.mrb[0].mxu0
        %2258 = vdwg.mxu0
        %v2259 = vsel %vm925, %v2116, 0.0
        %v2260 = vsel %vm925, %v2162, 0.0
        %v2261 = vadd.f32 %v2259, %v2260
        %v2262 = vsel %vm925, %v2208, 0.0
        %v2263 = vadd.f32 %v2261, %v2262
        %v2264 = vsel %vm925, %v2254, 0.0
        %v2265 = vadd.f32 %v2263, %v2264
        %v2266 = vld [vmem:[%s13] sm:$0x1]
        %v2268 = vlaneseq
        %v2269 = vshrl.u32 %v2268, 7
        %v2270 = vsub.s32 0, %v2269
        %v2271 = vrot.slane %v2266, %v2270
        %v2273 = vadd.f32 %v2265, %v2271
        %v2274 = vadd.f32 %v2273, %v787
        %v2275 = vsel %vm925, %v2274, 0.0
        %2276 = vadd.xlane.f32.xlu0 %v2275
        %v2277 = vpop.xlane.xlu0 %2276
        %v2278 = vrcp.pop 32.0
        %v2279 = vmul.f32 %v2277, %v2278
        %v2280 = vsub.f32 %v2274, %v2279
        %v2281 = vmul.f32 %v2280, %v2280
        %v2282 = vsel %vm925, %v2281, 0.0
        %2283 = vadd.xlane.f32.xlu0 %v2282
        %v2284 = vpop.xlane.xlu0 %2283
        %v2285 = vmul.f32 %v2284, %v2278
        %v2286 = vadd.f32 %v2285, 1e-12
        %v2287 = vrsqrt.pop %v2286
        %v2288 = vmul.f32 %v2280, %v2287
        %v2289 = vld [vmem:[%s14] sm:$0x1]
        %v2291 = vlaneseq
        %v2292 = vshrl.u32 %v2291, 7
        %v2293 = vsub.s32 0, %v2292
        %v2294 = vrot.slane %v2289, %v2293
        %v2296 = vmul.f32 %v2294, %v2288
        %v2297 = vld [vmem:[%s15] sm:$0x1]
        %v2299 = vlaneseq
        %v2300 = vshrl.u32 %v2299, 7
        %v2301 = vsub.s32 0, %v2300
        %v2302 = vrot.slane %v2297, %v2301
        %v2304 = vadd.f32 %v2296, %v2302
        %v2305 = vpack.c.bf16 %v2304, %v2304
        %v2306 = vld [vmem:[%s16] sm:$0xf]
        %v2307 = vld [vmem:[%s16 + $0x4] sm:$0xf]
        %v2308 = vld [vmem:[%s16 + $0x8] sm:$0xf]
        %v2309 = vld [vmem:[%s16 + $0xc] sm:$0xf]
        %v2310 = vld [vmem:[%s17] sm:$0x1]
        %v2312 = vlaneseq
        %v2313 = vshrl.u32 %v2312, 7
        %v2314 = vsub.s32 0, %v2313
        %v2315 = vrot.slane %v2310, %v2314
        %v2321 = vunpack.c.l.b16 %v2306
        %v2322 = vunpack.c.l.b16 %v2307
        %v2323 = vunpack.c.l.b16 %v2308
        %v2324 = vunpack.c.l.b16 %v2309
        %v2325 = vpack.c.b16 %v2322, %v2321
        %v2326 = vpack.c.b16 %v2324, %v2323
        %v2330 = vsel %vm925, %v2305, 0
        %2332 = vmatprep.subr.bf16.mxu0 0
        %2333 = vmatpush1.bf16.msra.mxu0 %v2325
        %2334 = vmatprep.subr.bf16.mxu0 0
        %2335 = vmatpush1.bf16.msra.mxu0 %v2326
        %2336 = vmatprep.subr.bf16.mxu0 0
        %2337 = vmatpush1.bf16.msra.mxu0 0
        %2338 = vmatprep.subr.bf16.mxu0 0
        %2339 = vmatpush1.bf16.msra.mxu0 0
        %2340 = vmatprep.subr.bf16.mxu0 0
        %2341 = vmatpush1.bf16.msra.mxu0 0
        %2342 = vmatprep.subr.bf16.mxu0 0
        %2343 = vmatpush1.bf16.msra.mxu0 0
        %2344 = vmatprep.subr.bf16.mxu0 0
        %2345 = vmatpush1.bf16.msra.mxu0 0
        %2346 = vmatprep.subr.bf16.mxu0 0
        %2347 = vmatpush1.bf16.msra.mxu0 0
        %2348 = vmatprep.subr.bf16.mxu0 0
        %2349 = vmatpush1.bf16.msra.mxu0 0
        %2350 = vmatprep.subr.bf16.mxu0 0
        %2351 = vmatpush1.bf16.msra.mxu0 0
        %2352 = vmatprep.subr.bf16.mxu0 0
        %2353 = vmatpush1.bf16.msra.mxu0 0
        %2354 = vmatprep.subr.bf16.mxu0 0
        %2355 = vmatpush1.bf16.msra.mxu0 0
        %2356 = vmatprep.subr.bf16.mxu0 0
        %2357 = vmatpush1.bf16.msra.mxu0 0
        %2358 = vmatprep.subr.bf16.mxu0 0
        %2359 = vmatpush1.bf16.msra.mxu0 0
        %2360 = vmatprep.subr.bf16.mxu0 0
        %2361 = vmatpush1.bf16.msra.mxu0 0
        %2362 = vmatprep.subr.bf16.mxu0 0
        %2363 = vmatpush1.bf16.msra.mxu0 0
        %2364 = vmatprep.mubr.bf16.mxu0 0
        %2365 = vmatmul.mubr.bf16.gmra.mrb[0].mxu0 %v2330
        %v2366 = vpop.f32.mrb[0].mxu0
        %v2367 = vadd.f32 %v2315, %v2366
        %v2368 = vpop.f32.mrb[0].mxu0
        %v2369 = vpop.f32.mrb[0].mxu0
        %v2370 = vpop.f32.mrb[0].mxu0
        %2371 = vdwg.mxu0
        %v2372 = vmax.f32 %v2367, 0.0
        %v2373 = vpack.c.bf16 %v2372, %v2372
        %v2374 = vld [vmem:[%s18] sm:$0xf]
        %v2375 = vld [vmem:[%s18 + $0x4] sm:$0xf]
        %v2376 = vld [vmem:[%s18 + $0x8] sm:$0xf]
        %v2377 = vld [vmem:[%s18 + $0xc] sm:$0xf]
        %v2378 = vld [vmem:[%s18 + $0x10] sm:$0xf]
        %v2379 = vld [vmem:[%s18 + $0x14] sm:$0xf]
        %v2380 = vld [vmem:[%s18 + $0x18] sm:$0xf]
        %v2381 = vld [vmem:[%s18 + $0x1c] sm:$0xf]
        %v2382 = vld [vmem:[%s19] sm:$0x1]
        %v2384 = vlaneseq
        %v2385 = vshrl.u32 %v2384, 7
        %v2386 = vsub.s32 0, %v2385
        %v2387 = vrot.slane %v2382, %v2386
        %v2397 = vunpack.c.l.b16 %v2374
        %v2398 = vunpack.c.l.b16 %v2375
        %v2399 = vunpack.c.l.b16 %v2376
        %v2400 = vunpack.c.l.b16 %v2377
        %v2401 = vunpack.c.l.b16 %v2378
        %v2402 = vunpack.c.l.b16 %v2379
        %v2403 = vunpack.c.l.b16 %v2380
        %v2404 = vunpack.c.l.b16 %v2381
        %v2405 = vpack.c.b16 %v2398, %v2397
        %v2406 = vpack.c.b16 %v2400, %v2399
        %v2407 = vpack.c.b16 %v2402, %v2401
        %v2408 = vpack.c.b16 %v2404, %v2403
        %vm2413 = vcmask 523264
        %v2415 = vsel %vm2413, %v2373, 0
        %2417 = vmatprep.subr.bf16.mxu0 0
        %2418 = vmatpush1.bf16.msra.mxu0 %v2405
        %2419 = vmatprep.subr.bf16.mxu0 0
        %2420 = vmatpush1.bf16.msra.mxu0 %v2406
        %2421 = vmatprep.subr.bf16.mxu0 0
        %2422 = vmatpush1.bf16.msra.mxu0 %v2407
        %2423 = vmatprep.subr.bf16.mxu0 0
        %2424 = vmatpush1.bf16.msra.mxu0 %v2408
        %2425 = vmatprep.subr.bf16.mxu0 0
        %2426 = vmatpush1.bf16.msra.mxu0 0
        %2427 = vmatprep.subr.bf16.mxu0 0
        %2428 = vmatpush1.bf16.msra.mxu0 0
        %2429 = vmatprep.subr.bf16.mxu0 0
        %2430 = vmatpush1.bf16.msra.mxu0 0
        %2431 = vmatprep.subr.bf16.mxu0 0
        %2432 = vmatpush1.bf16.msra.mxu0 0
        %2433 = vmatprep.subr.bf16.mxu0 0
        %2434 = vmatpush1.bf16.msra.mxu0 0
        %2435 = vmatprep.subr.bf16.mxu0 0
        %2436 = vmatpush1.bf16.msra.mxu0 0
        %2437 = vmatprep.subr.bf16.mxu0 0
        %2438 = vmatpush1.bf16.msra.mxu0 0
        %2439 = vmatprep.subr.bf16.mxu0 0
        %2440 = vmatpush1.bf16.msra.mxu0 0
        %2441 = vmatprep.subr.bf16.mxu0 0
        %2442 = vmatpush1.bf16.msra.mxu0 0
        %2443 = vmatprep.subr.bf16.mxu0 0
        %2444 = vmatpush1.bf16.msra.mxu0 0
        %2445 = vmatprep.subr.bf16.mxu0 0
        %2446 = vmatpush1.bf16.msra.mxu0 0
        %2447 = vmatprep.subr.bf16.mxu0 0
        %2448 = vmatpush1.bf16.msra.mxu0 0
        %2449 = vmatprep.mubr.bf16.mxu0 0
        %2450 = vmatmul.mubr.bf16.gmra.mrb[0].mxu0 %v2415
        %v2451 = vpop.f32.mrb[0].mxu0
        %v2452 = vadd.f32 %v2387, %v2451
        %v2453 = vpop.f32.mrb[0].mxu0
        %v2454 = vpop.f32.mrb[0].mxu0
        %v2455 = vpop.f32.mrb[0].mxu0
        %2456 = vdwg.mxu0
        %v2457 = vadd.f32 %v2452, %v2304
        %v2458 = vsel %vm925, %v2457, 0.0
        %2459 = vadd.xlane.f32.xlu0 %v2458
        %v2460 = vpop.xlane.xlu0 %2459
        %v2461 = vmul.f32 %v2460, %v2278
        %v2462 = vsub.f32 %v2457, %v2461
        %v2463 = vmul.f32 %v2462, %v2462
        %v2464 = vsel %vm925, %v2463, 0.0
        %2465 = vadd.xlane.f32.xlu0 %v2464
        %v2466 = vpop.xlane.xlu0 %2465
        %v2467 = vmul.f32 %v2466, %v2278
        %v2468 = vadd.f32 %v2467, 1e-12
        %v2469 = vrsqrt.pop %v2468
        %v2470 = vmul.f32 %v2462, %v2469
        %v2471 = vld [vmem:[%s20] sm:$0x1]
        %v2473 = vlaneseq
        %v2474 = vshrl.u32 %v2473, 7
        %v2475 = vsub.s32 0, %v2474
        %v2476 = vrot.slane %v2471, %v2475
        %v2478 = vmul.f32 %v2476, %v2470
        %v2479 = vld [vmem:[%s21] sm:$0x1]
        %v2481 = vlaneseq
        %v2482 = vshrl.u32 %v2481, 7
        %v2483 = vsub.s32 0, %v2482
        %v2484 = vrot.slane %v2479, %v2483
        %v2486 = vadd.f32 %v2478, %v2484
        %v2487 = vpack.c.bf16 %v2486, %v2486
        %v2489 = vsel %vm823, %v2487, 0
        %2491 = vmatprep.subr.bf16.mxu0 0
        %2492 = vmatpush1.bf16.msra.mxu0 %v2489
        %2493 = vmatprep.subr.bf16.mxu0 0
        %2494 = vmatpush1.bf16.msra.mxu0 0
        %2495 = vmatprep.subr.bf16.mxu0 0
        %2496 = vmatpush1.bf16.msra.mxu0 0
        %2497 = vmatprep.subr.bf16.mxu0 0
        %2498 = vmatpush1.bf16.msra.mxu0 0
        %2499 = vmatprep.subr.bf16.mxu0 0
        %2500 = vmatpush1.bf16.msra.mxu0 0
        %2501 = vmatprep.subr.bf16.mxu0 0
        %2502 = vmatpush1.bf16.msra.mxu0 0
        %2503 = vmatprep.subr.bf16.mxu0 0
        %2504 = vmatpush1.bf16.msra.mxu0 0
        %2505 = vmatprep.subr.bf16.mxu0 0
        %2506 = vmatpush1.bf16.msra.mxu0 0
        %2507 = vmatprep.subr.bf16.mxu0 0
        %2508 = vmatpush1.bf16.msra.mxu0 0
        %2509 = vmatprep.subr.bf16.mxu0 0
        %2510 = vmatpush1.bf16.msra.mxu0 0
        %2511 = vmatprep.subr.bf16.mxu0 0
        %2512 = vmatpush1.bf16.msra.mxu0 0
        %2513 = vmatprep.subr.bf16.mxu0 0
        %2514 = vmatpush1.bf16.msra.mxu0 0
        %2515 = vmatprep.subr.bf16.mxu0 0
        %2516 = vmatpush1.bf16.msra.mxu0 0
        %2517 = vmatprep.subr.bf16.mxu0 0
        %2518 = vmatpush1.bf16.msra.mxu0 0
        %2519 = vmatprep.subr.bf16.mxu0 0
        %2520 = vmatpush1.bf16.msra.mxu0 0
        %2521 = vmatprep.subr.bf16.mxu0 0
        %2522 = vmatpush1.bf16.msra.mxu0 0
        %2523 = vmatprep.mubr.bf16.mxu0 0
        %2524 = vmatmul.mubr.bf16.gmra.mrb[0].mxu0 %v821
        %v2525 = vpop.f32.mrb[0].mxu0
        %v2526 = vadd.f32 0.0, %v2525
        %v2527 = vpop.f32.mrb[0].mxu0
        %v2528 = vpop.f32.mrb[0].mxu0
        %v2529 = vpop.f32.mrb[0].mxu0
        %2530 = vdwg.mxu0
        %v2531 = vmul.f32 %v2526, %v815
        %v2532 = vpack.c.bf16 %v2531, %v2531
        %s2533 = scalar_lea.vmem %s6, 64
        %v2534 = vld [vmem:[%s2533] sm:$0xf]
        %v2535 = vld [vmem:[%s2533 + $0x4] sm:$0xf]
        %v2536 = vld [vmem:[%s2533 + $0x8] sm:$0xf]
        %v2537 = vld [vmem:[%s2533 + $0xc] sm:$0xf]
        %v2538 = vld [vmem:[%s2533 + $0x10] sm:$0xf]
        %v2539 = vld [vmem:[%s2533 + $0x14] sm:$0xf]
        %v2540 = vld [vmem:[%s2533 + $0x18] sm:$0xf]
        %v2541 = vld [vmem:[%s2533 + $0x1c] sm:$0xf]
        %v2542 = vld [vmem:[%s2533 + $0x20] sm:$0xf]
        %v2543 = vld [vmem:[%s2533 + $0x24] sm:$0xf]
        %v2544 = vld [vmem:[%s2533 + $0x28] sm:$0xf]
        %v2545 = vld [vmem:[%s2533 + $0x2c] sm:$0xf]
        %v2546 = vld [vmem:[%s2533 + $0x30] sm:$0xf]
        %v2547 = vld [vmem:[%s2533 + $0x34] sm:$0xf]
        %v2548 = vld [vmem:[%s2533 + $0x38] sm:$0xf]
        %v2549 = vld [vmem:[%s2533 + $0x3c] sm:$0xf]
        %s2550 = scalar_lea.vmem %s7, 4
        %v2551 = vld [vmem:[%s2550] sm:$0x1]
        %v2552 = vld [vmem:[%s2550 + $0x1] sm:$0x1]
        %v2553 = vld [vmem:[%s2550 + $0x2] sm:$0x1]
        %v2554 = vld [vmem:[%s2550 + $0x3] sm:$0x1]
        %v2559 = vlaneseq
        %v2560 = vshrl.u32 %v2559, 7
        %v2561 = vsub.s32 0, %v2560
        %v2562 = vrot.slane %v2551, %v2561
        %v2563 = vlaneseq
        %v2564 = vshrl.u32 %v2563, 7
        %v2565 = vsub.s32 0, %v2564
        %v2566 = vrot.slane %v2552, %v2565
        %v2567 = vlaneseq
        %v2568 = vshrl.u32 %v2567, 7
        %v2569 = vsub.s32 0, %v2568
        %v2570 = vrot.slane %v2553, %v2569
        %v2571 = vlaneseq
        %v2572 = vshrl.u32 %v2571, 7
        %v2573 = vsub.s32 0, %v2572
        %v2574 = vrot.slane %v2554, %v2573
        %v2583 = vunpack.c.l.b16 %v2534
        %v2584 = vunpack.c.l.b16 %v2535
        %v2585 = vunpack.c.l.b16 %v2536
        %v2586 = vunpack.c.l.b16 %v2537
        %v2587 = vpack.c.b16 %v2584, %v2583
        %v2588 = vpack.c.b16 %v2586, %v2585
        %v2591 = vsel %vm925, %v2487, 0
        %2593 = vmatprep.subr.bf16.mxu0 0
        %2594 = vmatpush1.bf16.msra.mxu0 %v2587
        %2595 = vmatprep.subr.bf16.mxu0 0
        %2596 = vmatpush1.bf16.msra.mxu0 %v2588
        %2597 = vmatprep.subr.bf16.mxu0 0
        %2598 = vmatpush1.bf16.msra.mxu0 0
        %2599 = vmatprep.subr.bf16.mxu0 0
        %2600 = vmatpush1.bf16.msra.mxu0 0
        %2601 = vmatprep.subr.bf16.mxu0 0
        %2602 = vmatpush1.bf16.msra.mxu0 0
        %2603 = vmatprep.subr.bf16.mxu0 0
        %2604 = vmatpush1.bf16.msra.mxu0 0
        %2605 = vmatprep.subr.bf16.mxu0 0
        %2606 = vmatpush1.bf16.msra.mxu0 0
        %2607 = vmatprep.subr.bf16.mxu0 0
        %2608 = vmatpush1.bf16.msra.mxu0 0
        %2609 = vmatprep.subr.bf16.mxu0 0
        %2610 = vmatpush1.bf16.msra.mxu0 0
        %2611 = vmatprep.subr.bf16.mxu0 0
        %2612 = vmatpush1.bf16.msra.mxu0 0
        %2613 = vmatprep.subr.bf16.mxu0 0
        %2614 = vmatpush1.bf16.msra.mxu0 0
        %2615 = vmatprep.subr.bf16.mxu0 0
        %2616 = vmatpush1.bf16.msra.mxu0 0
        %2617 = vmatprep.subr.bf16.mxu0 0
        %2618 = vmatpush1.bf16.msra.mxu0 0
        %2619 = vmatprep.subr.bf16.mxu0 0
        %2620 = vmatpush1.bf16.msra.mxu0 0
        %2621 = vmatprep.subr.bf16.mxu0 0
        %2622 = vmatpush1.bf16.msra.mxu0 0
        %2623 = vmatprep.subr.bf16.mxu0 0
        %2624 = vmatpush1.bf16.msra.mxu0 0
        %2625 = vmatprep.mubr.bf16.mxu0 0
        %2626 = vmatmul.mubr.bf16.gmra.mrb[0].mxu0 %v2591
        %v2627 = vpop.f32.mrb[0].mxu0
        %v2628 = vadd.f32 %v2562, %v2627
        %v2629 = vpop.f32.mrb[0].mxu0
        %v2630 = vpop.f32.mrb[0].mxu0
        %v2631 = vpop.f32.mrb[0].mxu0
        %2632 = vdwg.mxu0
        %v2637 = vunpack.c.l.b16 %v2538
        %v2638 = vunpack.c.l.b16 %v2539
        %v2639 = vunpack.c.l.b16 %v2540
        %v2640 = vunpack.c.l.b16 %v2541
        %v2641 = vpack.c.b16 %v2638, %v2637
        %v2642 = vpack.c.b16 %v2640, %v2639
        %2645 = vmatprep.subr.bf16.mxu0 0
        %2646 = vmatpush1.bf16.msra.mxu0 %v2641
        %2647 = vmatprep.subr.bf16.mxu0 0
        %2648 = vmatpush1.bf16.msra.mxu0 %v2642
        %2649 = vmatprep.subr.bf16.mxu0 0
        %2650 = vmatpush1.bf16.msra.mxu0 0
        %2651 = vmatprep.subr.bf16.mxu0 0
        %2652 = vmatpush1.bf16.msra.mxu0 0
        %2653 = vmatprep.subr.bf16.mxu0 0
        %2654 = vmatpush1.bf16.msra.mxu0 0
        %2655 = vmatprep.subr.bf16.mxu0 0
        %2656 = vmatpush1.bf16.msra.mxu0 0
        %2657 = vmatprep.subr.bf16.mxu0 0
        %2658 = vmatpush1.bf16.msra.mxu0 0
        %2659 = vmatprep.subr.bf16.mxu0 0
        %2660 = vmatpush1.bf16.msra.mxu0 0
        %2661 = vmatprep.subr.bf16.mxu0 0
        %2662 = vmatpush1.bf16.msra.mxu0 0
        %2663 = vmatprep.subr.bf16.mxu0 0
        %2664 = vmatpush1.bf16.msra.mxu0 0
        %2665 = vmatprep.subr.bf16.mxu0 0
        %2666 = vmatpush1.bf16.msra.mxu0 0
        %2667 = vmatprep.subr.bf16.mxu0 0
        %2668 = vmatpush1.bf16.msra.mxu0 0
        %2669 = vmatprep.subr.bf16.mxu0 0
        %2670 = vmatpush1.bf16.msra.mxu0 0
        %2671 = vmatprep.subr.bf16.mxu0 0
        %2672 = vmatpush1.bf16.msra.mxu0 0
        %2673 = vmatprep.subr.bf16.mxu0 0
        %2674 = vmatpush1.bf16.msra.mxu0 0
        %2675 = vmatprep.subr.bf16.mxu0 0
        %2676 = vmatpush1.bf16.msra.mxu0 0
        %2677 = vmatprep.mubr.bf16.mxu0 0
        %2678 = vmatmul.mubr.bf16.gmra.mrb[0].mxu0 %v2591
        %v2679 = vpop.f32.mrb[0].mxu0
        %v2680 = vadd.f32 %v2566, %v2679
        %v2681 = vpop.f32.mrb[0].mxu0
        %v2682 = vpop.f32.mrb[0].mxu0
        %v2683 = vpop.f32.mrb[0].mxu0
        %2684 = vdwg.mxu0
        %v2689 = vunpack.c.l.b16 %v2542
        %v2690 = vunpack.c.l.b16 %v2543
        %v2691 = vunpack.c.l.b16 %v2544
        %v2692 = vunpack.c.l.b16 %v2545
        %v2693 = vpack.c.b16 %v2690, %v2689
        %v2694 = vpack.c.b16 %v2692, %v2691
        %2697 = vmatprep.subr.bf16.mxu0 0
        %2698 = vmatpush1.bf16.msra.mxu0 %v2693
        %2699 = vmatprep.subr.bf16.mxu0 0
        %2700 = vmatpush1.bf16.msra.mxu0 %v2694
        %2701 = vmatprep.subr.bf16.mxu0 0
        %2702 = vmatpush1.bf16.msra.mxu0 0
        %2703 = vmatprep.subr.bf16.mxu0 0
        %2704 = vmatpush1.bf16.msra.mxu0 0
        %2705 = vmatprep.subr.bf16.mxu0 0
        %2706 = vmatpush1.bf16.msra.mxu0 0
        %2707 = vmatprep.subr.bf16.mxu0 0
        %2708 = vmatpush1.bf16.msra.mxu0 0
        %2709 = vmatprep.subr.bf16.mxu0 0
        %2710 = vmatpush1.bf16.msra.mxu0 0
        %2711 = vmatprep.subr.bf16.mxu0 0
        %2712 = vmatpush1.bf16.msra.mxu0 0
        %2713 = vmatprep.subr.bf16.mxu0 0
        %2714 = vmatpush1.bf16.msra.mxu0 0
        %2715 = vmatprep.subr.bf16.mxu0 0
        %2716 = vmatpush1.bf16.msra.mxu0 0
        %2717 = vmatprep.subr.bf16.mxu0 0
        %2718 = vmatpush1.bf16.msra.mxu0 0
        %2719 = vmatprep.subr.bf16.mxu0 0
        %2720 = vmatpush1.bf16.msra.mxu0 0
        %2721 = vmatprep.subr.bf16.mxu0 0
        %2722 = vmatpush1.bf16.msra.mxu0 0
        %2723 = vmatprep.subr.bf16.mxu0 0
        %2724 = vmatpush1.bf16.msra.mxu0 0
        %2725 = vmatprep.subr.bf16.mxu0 0
        %2726 = vmatpush1.bf16.msra.mxu0 0
        %2727 = vmatprep.subr.bf16.mxu0 0
        %2728 = vmatpush1.bf16.msra.mxu0 0
        %2729 = vmatprep.mubr.bf16.mxu0 0
        %2730 = vmatmul.mubr.bf16.gmra.mrb[0].mxu0 %v2591
        %v2731 = vpop.f32.mrb[0].mxu0
        %v2732 = vadd.f32 %v2570, %v2731
        %v2733 = vpop.f32.mrb[0].mxu0
        %v2734 = vpop.f32.mrb[0].mxu0
        %v2735 = vpop.f32.mrb[0].mxu0
        %2736 = vdwg.mxu0
        %v2741 = vunpack.c.l.b16 %v2546
        %v2742 = vunpack.c.l.b16 %v2547
        %v2743 = vunpack.c.l.b16 %v2548
        %v2744 = vunpack.c.l.b16 %v2549
        %v2745 = vpack.c.b16 %v2742, %v2741
        %v2746 = vpack.c.b16 %v2744, %v2743
        %2749 = vmatprep.subr.bf16.mxu0 0
        %2750 = vmatpush1.bf16.msra.mxu0 %v2745
        %2751 = vmatprep.subr.bf16.mxu0 0
        %2752 = vmatpush1.bf16.msra.mxu0 %v2746
        %2753 = vmatprep.subr.bf16.mxu0 0
        %2754 = vmatpush1.bf16.msra.mxu0 0
        %2755 = vmatprep.subr.bf16.mxu0 0
        %2756 = vmatpush1.bf16.msra.mxu0 0
        %2757 = vmatprep.subr.bf16.mxu0 0
        %2758 = vmatpush1.bf16.msra.mxu0 0
        %2759 = vmatprep.subr.bf16.mxu0 0
        %2760 = vmatpush1.bf16.msra.mxu0 0
        %2761 = vmatprep.subr.bf16.mxu0 0
        %2762 = vmatpush1.bf16.msra.mxu0 0
        %2763 = vmatprep.subr.bf16.mxu0 0
        %2764 = vmatpush1.bf16.msra.mxu0 0
        %2765 = vmatprep.subr.bf16.mxu0 0
        %2766 = vmatpush1.bf16.msra.mxu0 0
        %2767 = vmatprep.subr.bf16.mxu0 0
        %2768 = vmatpush1.bf16.msra.mxu0 0
        %2769 = vmatprep.subr.bf16.mxu0 0
        %2770 = vmatpush1.bf16.msra.mxu0 0
        %2771 = vmatprep.subr.bf16.mxu0 0
        %2772 = vmatpush1.bf16.msra.mxu0 0
        %2773 = vmatprep.subr.bf16.mxu0 0
        %2774 = vmatpush1.bf16.msra.mxu0 0
        %2775 = vmatprep.subr.bf16.mxu0 0
        %2776 = vmatpush1.bf16.msra.mxu0 0
        %2777 = vmatprep.subr.bf16.mxu0 0
        %2778 = vmatpush1.bf16.msra.mxu0 0
        %2779 = vmatprep.subr.bf16.mxu0 0
        %2780 = vmatpush1.bf16.msra.mxu0 0
        %2781 = vmatprep.mubr.bf16.mxu0 0
        %2782 = vmatmul.mubr.bf16.gmra.mrb[0].mxu0 %v2591
        %v2783 = vpop.f32.mrb[0].mxu0
        %v2784 = vadd.f32 %v2574, %v2783
        %v2785 = vpop.f32.mrb[0].mxu0
        %v2786 = vpop.f32.mrb[0].mxu0
        %v2787 = vpop.f32.mrb[0].mxu0
        %2788 = vdwg.mxu0
        %s2789 = scalar_lea.vmem %s8, 64
        %v2790 = vld [vmem:[%s2789] sm:$0xf]
        %v2791 = vld [vmem:[%s2789 + $0x4] sm:$0xf]
        %v2792 = vld [vmem:[%s2789 + $0x8] sm:$0xf]
        %v2793 = vld [vmem:[%s2789 + $0xc] sm:$0xf]
        %v2794 = vld [vmem:[%s2789 + $0x10] sm:$0xf]
        %v2795 = vld [vmem:[%s2789 + $0x14] sm:$0xf]
        %v2796 = vld [vmem:[%s2789 + $0x18] sm:$0xf]
        %v2797 = vld [vmem:[%s2789 + $0x1c] sm:$0xf]
        %v2798 = vld [vmem:[%s2789 + $0x20] sm:$0xf]
        %v2799 = vld [vmem:[%s2789 + $0x24] sm:$0xf]
        %v2800 = vld [vmem:[%s2789 + $0x28] sm:$0xf]
        %v2801 = vld [vmem:[%s2789 + $0x2c] sm:$0xf]
        %v2802 = vld [vmem:[%s2789 + $0x30] sm:$0xf]
        %v2803 = vld [vmem:[%s2789 + $0x34] sm:$0xf]
        %v2804 = vld [vmem:[%s2789 + $0x38] sm:$0xf]
        %v2805 = vld [vmem:[%s2789 + $0x3c] sm:$0xf]
        %s2806 = scalar_lea.vmem %s9, 4
        %v2807 = vld [vmem:[%s2806] sm:$0x1]
        %v2808 = vld [vmem:[%s2806 + $0x1] sm:$0x1]
        %v2809 = vld [vmem:[%s2806 + $0x2] sm:$0x1]
        %v2810 = vld [vmem:[%s2806 + $0x3] sm:$0x1]
        %v2815 = vlaneseq
        %v2816 = vshrl.u32 %v2815, 7
        %v2817 = vsub.s32 0, %v2816
        %v2818 = vrot.slane %v2807, %v2817
        %v2819 = vlaneseq
        %v2820 = vshrl.u32 %v2819, 7
        %v2821 = vsub.s32 0, %v2820
        %v2822 = vrot.slane %v2808, %v2821
        %v2823 = vlaneseq
        %v2824 = vshrl.u32 %v2823, 7
        %v2825 = vsub.s32 0, %v2824
        %v2826 = vrot.slane %v2809, %v2825
        %v2827 = vlaneseq
        %v2828 = vshrl.u32 %v2827, 7
        %v2829 = vsub.s32 0, %v2828
        %v2830 = vrot.slane %v2810, %v2829
        %v2839 = vunpack.c.l.b16 %v2790
        %v2840 = vunpack.c.l.b16 %v2791
        %v2841 = vunpack.c.l.b16 %v2792
        %v2842 = vunpack.c.l.b16 %v2793
        %v2843 = vpack.c.b16 %v2840, %v2839
        %v2844 = vpack.c.b16 %v2842, %v2841
        %v2848 = vsel %vm925, %v2532, 0
        %2850 = vmatprep.subr.bf16.mxu0 0
        %2851 = vmatpush1.bf16.msra.mxu0 %v2843
        %2852 = vmatprep.subr.bf16.mxu0 0
        %2853 = vmatpush1.bf16.msra.mxu0 %v2844
        %2854 = vmatprep.subr.bf16.mxu0 0
        %2855 = vmatpush1.bf16.msra.mxu0 0
        %2856 = vmatprep.subr.bf16.mxu0 0
        %2857 = vmatpush1.bf16.msra.mxu0 0
        %2858 = vmatprep.subr.bf16.mxu0 0
        %2859 = vmatpush1.bf16.msra.mxu0 0
        %2860 = vmatprep.subr.bf16.mxu0 0
        %2861 = vmatpush1.bf16.msra.mxu0 0
        %2862 = vmatprep.subr.bf16.mxu0 0
        %2863 = vmatpush1.bf16.msra.mxu0 0
        %2864 = vmatprep.subr.bf16.mxu0 0
        %2865 = vmatpush1.bf16.msra.mxu0 0
        %2866 = vmatprep.subr.bf16.mxu0 0
        %2867 = vmatpush1.bf16.msra.mxu0 0
        %2868 = vmatprep.subr.bf16.mxu0 0
        %2869 = vmatpush1.bf16.msra.mxu0 0
        %2870 = vmatprep.subr.bf16.mxu0 0
        %2871 = vmatpush1.bf16.msra.mxu0 0
        %2872 = vmatprep.subr.bf16.mxu0 0
        %2873 = vmatpush1.bf16.msra.mxu0 0
        %2874 = vmatprep.subr.bf16.mxu0 0
        %2875 = vmatpush1.bf16.msra.mxu0 0
        %2876 = vmatprep.subr.bf16.mxu0 0
        %2877 = vmatpush1.bf16.msra.mxu0 0
        %2878 = vmatprep.subr.bf16.mxu0 0
        %2879 = vmatpush1.bf16.msra.mxu0 0
        %2880 = vmatprep.subr.bf16.mxu0 0
        %2881 = vmatpush1.bf16.msra.mxu0 0
        %2882 = vmatprep.mubr.bf16.mxu0 0
        %2883 = vmatmul.mubr.bf16.gmra.mrb[0].mxu0 %v2848
        %v2884 = vpop.f32.mrb[0].mxu0
        %v2885 = vadd.f32 %v2818, %v2884
        %v2886 = vpop.f32.mrb[0].mxu0
        %v2887 = vpop.f32.mrb[0].mxu0
        %v2888 = vpop.f32.mrb[0].mxu0
        %2889 = vdwg.mxu0
        %v2894 = vunpack.c.l.b16 %v2794
        %v2895 = vunpack.c.l.b16 %v2795
        %v2896 = vunpack.c.l.b16 %v2796
        %v2897 = vunpack.c.l.b16 %v2797
        %v2898 = vpack.c.b16 %v2895, %v2894
        %v2899 = vpack.c.b16 %v2897, %v2896
        %2902 = vmatprep.subr.bf16.mxu0 0
        %2903 = vmatpush1.bf16.msra.mxu0 %v2898
        %2904 = vmatprep.subr.bf16.mxu0 0
        %2905 = vmatpush1.bf16.msra.mxu0 %v2899
        %2906 = vmatprep.subr.bf16.mxu0 0
        %2907 = vmatpush1.bf16.msra.mxu0 0
        %2908 = vmatprep.subr.bf16.mxu0 0
        %2909 = vmatpush1.bf16.msra.mxu0 0
        %2910 = vmatprep.subr.bf16.mxu0 0
        %2911 = vmatpush1.bf16.msra.mxu0 0
        %2912 = vmatprep.subr.bf16.mxu0 0
        %2913 = vmatpush1.bf16.msra.mxu0 0
        %2914 = vmatprep.subr.bf16.mxu0 0
        %2915 = vmatpush1.bf16.msra.mxu0 0
        %2916 = vmatprep.subr.bf16.mxu0 0
        %2917 = vmatpush1.bf16.msra.mxu0 0
        %2918 = vmatprep.subr.bf16.mxu0 0
        %2919 = vmatpush1.bf16.msra.mxu0 0
        %2920 = vmatprep.subr.bf16.mxu0 0
        %2921 = vmatpush1.bf16.msra.mxu0 0
        %2922 = vmatprep.subr.bf16.mxu0 0
        %2923 = vmatpush1.bf16.msra.mxu0 0
        %2924 = vmatprep.subr.bf16.mxu0 0
        %2925 = vmatpush1.bf16.msra.mxu0 0
        %2926 = vmatprep.subr.bf16.mxu0 0
        %2927 = vmatpush1.bf16.msra.mxu0 0
        %2928 = vmatprep.subr.bf16.mxu0 0
        %2929 = vmatpush1.bf16.msra.mxu0 0
        %2930 = vmatprep.subr.bf16.mxu0 0
        %2931 = vmatpush1.bf16.msra.mxu0 0
        %2932 = vmatprep.subr.bf16.mxu0 0
        %2933 = vmatpush1.bf16.msra.mxu0 0
        %2934 = vmatprep.mubr.bf16.mxu0 0
        %2935 = vmatmul.mubr.bf16.gmra.mrb[0].mxu0 %v2848
        %v2936 = vpop.f32.mrb[0].mxu0
        %v2937 = vadd.f32 %v2822, %v2936
        %v2938 = vpop.f32.mrb[0].mxu0
        %v2939 = vpop.f32.mrb[0].mxu0
        %v2940 = vpop.f32.mrb[0].mxu0
        %2941 = vdwg.mxu0
        %v2946 = vunpack.c.l.b16 %v2798
        %v2947 = vunpack.c.l.b16 %v2799
        %v2948 = vunpack.c.l.b16 %v2800
        %v2949 = vunpack.c.l.b16 %v2801
        %v2950 = vpack.c.b16 %v2947, %v2946
        %v2951 = vpack.c.b16 %v2949, %v2948
        %2954 = vmatprep.subr.bf16.mxu0 0
        %2955 = vmatpush1.bf16.msra.mxu0 %v2950
        %2956 = vmatprep.subr.bf16.mxu0 0
        %2957 = vmatpush1.bf16.msra.mxu0 %v2951
        %2958 = vmatprep.subr.bf16.mxu0 0
        %2959 = vmatpush1.bf16.msra.mxu0 0
        %2960 = vmatprep.subr.bf16.mxu0 0
        %2961 = vmatpush1.bf16.msra.mxu0 0
        %2962 = vmatprep.subr.bf16.mxu0 0
        %2963 = vmatpush1.bf16.msra.mxu0 0
        %2964 = vmatprep.subr.bf16.mxu0 0
        %2965 = vmatpush1.bf16.msra.mxu0 0
        %2966 = vmatprep.subr.bf16.mxu0 0
        %2967 = vmatpush1.bf16.msra.mxu0 0
        %2968 = vmatprep.subr.bf16.mxu0 0
        %2969 = vmatpush1.bf16.msra.mxu0 0
        %2970 = vmatprep.subr.bf16.mxu0 0
        %2971 = vmatpush1.bf16.msra.mxu0 0
        %2972 = vmatprep.subr.bf16.mxu0 0
        %2973 = vmatpush1.bf16.msra.mxu0 0
        %2974 = vmatprep.subr.bf16.mxu0 0
        %2975 = vmatpush1.bf16.msra.mxu0 0
        %2976 = vmatprep.subr.bf16.mxu0 0
        %2977 = vmatpush1.bf16.msra.mxu0 0
        %2978 = vmatprep.subr.bf16.mxu0 0
        %2979 = vmatpush1.bf16.msra.mxu0 0
        %2980 = vmatprep.subr.bf16.mxu0 0
        %2981 = vmatpush1.bf16.msra.mxu0 0
        %2982 = vmatprep.subr.bf16.mxu0 0
        %2983 = vmatpush1.bf16.msra.mxu0 0
        %2984 = vmatprep.subr.bf16.mxu0 0
        %2985 = vmatpush1.bf16.msra.mxu0 0
        %2986 = vmatprep.mubr.bf16.mxu0 0
        %2987 = vmatmul.mubr.bf16.gmra.mrb[0].mxu0 %v2848
        %v2988 = vpop.f32.mrb[0].mxu0
        %v2989 = vadd.f32 %v2826, %v2988
        %v2990 = vpop.f32.mrb[0].mxu0
        %v2991 = vpop.f32.mrb[0].mxu0
        %v2992 = vpop.f32.mrb[0].mxu0
        %2993 = vdwg.mxu0
        %v2998 = vunpack.c.l.b16 %v2802
        %v2999 = vunpack.c.l.b16 %v2803
        %v3000 = vunpack.c.l.b16 %v2804
        %v3001 = vunpack.c.l.b16 %v2805
        %v3002 = vpack.c.b16 %v2999, %v2998
        %v3003 = vpack.c.b16 %v3001, %v3000
        %3006 = vmatprep.subr.bf16.mxu0 0
        %3007 = vmatpush1.bf16.msra.mxu0 %v3002
        %3008 = vmatprep.subr.bf16.mxu0 0
        %3009 = vmatpush1.bf16.msra.mxu0 %v3003
        %3010 = vmatprep.subr.bf16.mxu0 0
        %3011 = vmatpush1.bf16.msra.mxu0 0
        %3012 = vmatprep.subr.bf16.mxu0 0
        %3013 = vmatpush1.bf16.msra.mxu0 0
        %3014 = vmatprep.subr.bf16.mxu0 0
        %3015 = vmatpush1.bf16.msra.mxu0 0
        %3016 = vmatprep.subr.bf16.mxu0 0
        %3017 = vmatpush1.bf16.msra.mxu0 0
        %3018 = vmatprep.subr.bf16.mxu0 0
        %3019 = vmatpush1.bf16.msra.mxu0 0
        %3020 = vmatprep.subr.bf16.mxu0 0
        %3021 = vmatpush1.bf16.msra.mxu0 0
        %3022 = vmatprep.subr.bf16.mxu0 0
        %3023 = vmatpush1.bf16.msra.mxu0 0
        %3024 = vmatprep.subr.bf16.mxu0 0
        %3025 = vmatpush1.bf16.msra.mxu0 0
        %3026 = vmatprep.subr.bf16.mxu0 0
        %3027 = vmatpush1.bf16.msra.mxu0 0
        %3028 = vmatprep.subr.bf16.mxu0 0
        %3029 = vmatpush1.bf16.msra.mxu0 0
        %3030 = vmatprep.subr.bf16.mxu0 0
        %3031 = vmatpush1.bf16.msra.mxu0 0
        %3032 = vmatprep.subr.bf16.mxu0 0
        %3033 = vmatpush1.bf16.msra.mxu0 0
        %3034 = vmatprep.subr.bf16.mxu0 0
        %3035 = vmatpush1.bf16.msra.mxu0 0
        %3036 = vmatprep.subr.bf16.mxu0 0
        %3037 = vmatpush1.bf16.msra.mxu0 0
        %3038 = vmatprep.mubr.bf16.mxu0 0
        %3039 = vmatmul.mubr.bf16.gmra.mrb[0].mxu0 %v2848
        %v3040 = vpop.f32.mrb[0].mxu0
        %v3041 = vadd.f32 %v2830, %v3040
        %v3042 = vpop.f32.mrb[0].mxu0
        %v3043 = vpop.f32.mrb[0].mxu0
        %v3044 = vpop.f32.mrb[0].mxu0
        %3045 = vdwg.mxu0
        %s3046 = scalar_lea.vmem %s10, 64
        %v3047 = vld [vmem:[%s3046] sm:$0xf]
        %v3048 = vld [vmem:[%s3046 + $0x4] sm:$0xf]
        %v3049 = vld [vmem:[%s3046 + $0x8] sm:$0xf]
        %v3050 = vld [vmem:[%s3046 + $0xc] sm:$0xf]
        %v3051 = vld [vmem:[%s3046 + $0x10] sm:$0xf]
        %v3052 = vld [vmem:[%s3046 + $0x14] sm:$0xf]
        %v3053 = vld [vmem:[%s3046 + $0x18] sm:$0xf]
        %v3054 = vld [vmem:[%s3046 + $0x1c] sm:$0xf]
        %v3055 = vld [vmem:[%s3046 + $0x20] sm:$0xf]
        %v3056 = vld [vmem:[%s3046 + $0x24] sm:$0xf]
        %v3057 = vld [vmem:[%s3046 + $0x28] sm:$0xf]
        %v3058 = vld [vmem:[%s3046 + $0x2c] sm:$0xf]
        %v3059 = vld [vmem:[%s3046 + $0x30] sm:$0xf]
        %v3060 = vld [vmem:[%s3046 + $0x34] sm:$0xf]
        %v3061 = vld [vmem:[%s3046 + $0x38] sm:$0xf]
        %v3062 = vld [vmem:[%s3046 + $0x3c] sm:$0xf]
        %s3063 = scalar_lea.vmem %s11, 4
        %v3064 = vld [vmem:[%s3063] sm:$0x1]
        %v3065 = vld [vmem:[%s3063 + $0x1] sm:$0x1]
        %v3066 = vld [vmem:[%s3063 + $0x2] sm:$0x1]
        %v3067 = vld [vmem:[%s3063 + $0x3] sm:$0x1]
        %v3072 = vlaneseq
        %v3073 = vshrl.u32 %v3072, 7
        %v3074 = vsub.s32 0, %v3073
        %v3075 = vrot.slane %v3064, %v3074
        %v3076 = vlaneseq
        %v3077 = vshrl.u32 %v3076, 7
        %v3078 = vsub.s32 0, %v3077
        %v3079 = vrot.slane %v3065, %v3078
        %v3080 = vlaneseq
        %v3081 = vshrl.u32 %v3080, 7
        %v3082 = vsub.s32 0, %v3081
        %v3083 = vrot.slane %v3066, %v3082
        %v3084 = vlaneseq
        %v3085 = vshrl.u32 %v3084, 7
        %v3086 = vsub.s32 0, %v3085
        %v3087 = vrot.slane %v3067, %v3086
        %v3096 = vunpack.c.l.b16 %v3047
        %v3097 = vunpack.c.l.b16 %v3048
        %v3098 = vunpack.c.l.b16 %v3049
        %v3099 = vunpack.c.l.b16 %v3050
        %v3100 = vpack.c.b16 %v3097, %v3096
        %v3101 = vpack.c.b16 %v3099, %v3098
        %3104 = vmatprep.subr.bf16.mxu0 0
        %3105 = vmatpush1.bf16.msra.mxu0 %v3100
        %3106 = vmatprep.subr.bf16.mxu0 0
        %3107 = vmatpush1.bf16.msra.mxu0 %v3101
        %3108 = vmatprep.subr.bf16.mxu0 0
        %3109 = vmatpush1.bf16.msra.mxu0 0
        %3110 = vmatprep.subr.bf16.mxu0 0
        %3111 = vmatpush1.bf16.msra.mxu0 0
        %3112 = vmatprep.subr.bf16.mxu0 0
        %3113 = vmatpush1.bf16.msra.mxu0 0
        %3114 = vmatprep.subr.bf16.mxu0 0
        %3115 = vmatpush1.bf16.msra.mxu0 0
        %3116 = vmatprep.subr.bf16.mxu0 0
        %3117 = vmatpush1.bf16.msra.mxu0 0
        %3118 = vmatprep.subr.bf16.mxu0 0
        %3119 = vmatpush1.bf16.msra.mxu0 0
        %3120 = vmatprep.subr.bf16.mxu0 0
        %3121 = vmatpush1.bf16.msra.mxu0 0
        %3122 = vmatprep.subr.bf16.mxu0 0
        %3123 = vmatpush1.bf16.msra.mxu0 0
        %3124 = vmatprep.subr.bf16.mxu0 0
        %3125 = vmatpush1.bf16.msra.mxu0 0
        %3126 = vmatprep.subr.bf16.mxu0 0
        %3127 = vmatpush1.bf16.msra.mxu0 0
        %3128 = vmatprep.subr.bf16.mxu0 0
        %3129 = vmatpush1.bf16.msra.mxu0 0
        %3130 = vmatprep.subr.bf16.mxu0 0
        %3131 = vmatpush1.bf16.msra.mxu0 0
        %3132 = vmatprep.subr.bf16.mxu0 0
        %3133 = vmatpush1.bf16.msra.mxu0 0
        %3134 = vmatprep.subr.bf16.mxu0 0
        %3135 = vmatpush1.bf16.msra.mxu0 0
        %3136 = vmatprep.mubr.bf16.mxu0 0
        %3137 = vmatmul.mubr.bf16.gmra.mrb[0].mxu0 %v2848
        %v3138 = vpop.f32.mrb[0].mxu0
        %v3139 = vadd.f32 %v3075, %v3138
        %v3140 = vpop.f32.mrb[0].mxu0
        %v3141 = vpop.f32.mrb[0].mxu0
        %v3142 = vpop.f32.mrb[0].mxu0
        %3143 = vdwg.mxu0
        %v3148 = vunpack.c.l.b16 %v3051
        %v3149 = vunpack.c.l.b16 %v3052
        %v3150 = vunpack.c.l.b16 %v3053
        %v3151 = vunpack.c.l.b16 %v3054
        %v3152 = vpack.c.b16 %v3149, %v3148
        %v3153 = vpack.c.b16 %v3151, %v3150
        %3156 = vmatprep.subr.bf16.mxu0 0
        %3157 = vmatpush1.bf16.msra.mxu0 %v3152
        %3158 = vmatprep.subr.bf16.mxu0 0
        %3159 = vmatpush1.bf16.msra.mxu0 %v3153
        %3160 = vmatprep.subr.bf16.mxu0 0
        %3161 = vmatpush1.bf16.msra.mxu0 0
        %3162 = vmatprep.subr.bf16.mxu0 0
        %3163 = vmatpush1.bf16.msra.mxu0 0
        %3164 = vmatprep.subr.bf16.mxu0 0
        %3165 = vmatpush1.bf16.msra.mxu0 0
        %3166 = vmatprep.subr.bf16.mxu0 0
        %3167 = vmatpush1.bf16.msra.mxu0 0
        %3168 = vmatprep.subr.bf16.mxu0 0
        %3169 = vmatpush1.bf16.msra.mxu0 0
        %3170 = vmatprep.subr.bf16.mxu0 0
        %3171 = vmatpush1.bf16.msra.mxu0 0
        %3172 = vmatprep.subr.bf16.mxu0 0
        %3173 = vmatpush1.bf16.msra.mxu0 0
        %3174 = vmatprep.subr.bf16.mxu0 0
        %3175 = vmatpush1.bf16.msra.mxu0 0
        %3176 = vmatprep.subr.bf16.mxu0 0
        %3177 = vmatpush1.bf16.msra.mxu0 0
        %3178 = vmatprep.subr.bf16.mxu0 0
        %3179 = vmatpush1.bf16.msra.mxu0 0
        %3180 = vmatprep.subr.bf16.mxu0 0
        %3181 = vmatpush1.bf16.msra.mxu0 0
        %3182 = vmatprep.subr.bf16.mxu0 0
        %3183 = vmatpush1.bf16.msra.mxu0 0
        %3184 = vmatprep.subr.bf16.mxu0 0
        %3185 = vmatpush1.bf16.msra.mxu0 0
        %3186 = vmatprep.subr.bf16.mxu0 0
        %3187 = vmatpush1.bf16.msra.mxu0 0
        %3188 = vmatprep.mubr.bf16.mxu0 0
        %3189 = vmatmul.mubr.bf16.gmra.mrb[0].mxu0 %v2848
        %v3190 = vpop.f32.mrb[0].mxu0
        %v3191 = vadd.f32 %v3079, %v3190
        %v3192 = vpop.f32.mrb[0].mxu0
        %v3193 = vpop.f32.mrb[0].mxu0
        %v3194 = vpop.f32.mrb[0].mxu0
        %3195 = vdwg.mxu0
        %v3200 = vunpack.c.l.b16 %v3055
        %v3201 = vunpack.c.l.b16 %v3056
        %v3202 = vunpack.c.l.b16 %v3057
        %v3203 = vunpack.c.l.b16 %v3058
        %v3204 = vpack.c.b16 %v3201, %v3200
        %v3205 = vpack.c.b16 %v3203, %v3202
        %3208 = vmatprep.subr.bf16.mxu0 0
        %3209 = vmatpush1.bf16.msra.mxu0 %v3204
        %3210 = vmatprep.subr.bf16.mxu0 0
        %3211 = vmatpush1.bf16.msra.mxu0 %v3205
        %3212 = vmatprep.subr.bf16.mxu0 0
        %3213 = vmatpush1.bf16.msra.mxu0 0
        %3214 = vmatprep.subr.bf16.mxu0 0
        %3215 = vmatpush1.bf16.msra.mxu0 0
        %3216 = vmatprep.subr.bf16.mxu0 0
        %3217 = vmatpush1.bf16.msra.mxu0 0
        %3218 = vmatprep.subr.bf16.mxu0 0
        %3219 = vmatpush1.bf16.msra.mxu0 0
        %3220 = vmatprep.subr.bf16.mxu0 0
        %3221 = vmatpush1.bf16.msra.mxu0 0
        %3222 = vmatprep.subr.bf16.mxu0 0
        %3223 = vmatpush1.bf16.msra.mxu0 0
        %3224 = vmatprep.subr.bf16.mxu0 0
        %3225 = vmatpush1.bf16.msra.mxu0 0
        %3226 = vmatprep.subr.bf16.mxu0 0
        %3227 = vmatpush1.bf16.msra.mxu0 0
        %3228 = vmatprep.subr.bf16.mxu0 0
        %3229 = vmatpush1.bf16.msra.mxu0 0
        %3230 = vmatprep.subr.bf16.mxu0 0
        %3231 = vmatpush1.bf16.msra.mxu0 0
        %3232 = vmatprep.subr.bf16.mxu0 0
        %3233 = vmatpush1.bf16.msra.mxu0 0
        %3234 = vmatprep.subr.bf16.mxu0 0
        %3235 = vmatpush1.bf16.msra.mxu0 0
        %3236 = vmatprep.subr.bf16.mxu0 0
        %3237 = vmatpush1.bf16.msra.mxu0 0
        %3238 = vmatprep.subr.bf16.mxu0 0
        %3239 = vmatpush1.bf16.msra.mxu0 0
        %3240 = vmatprep.mubr.bf16.mxu0 0
        %3241 = vmatmul.mubr.bf16.gmra.mrb[0].mxu0 %v2848
        %v3242 = vpop.f32.mrb[0].mxu0
        %v3243 = vadd.f32 %v3083, %v3242
        %v3244 = vpop.f32.mrb[0].mxu0
        %v3245 = vpop.f32.mrb[0].mxu0
        %v3246 = vpop.f32.mrb[0].mxu0
        %3247 = vdwg.mxu0
        %v3252 = vunpack.c.l.b16 %v3059
        %v3253 = vunpack.c.l.b16 %v3060
        %v3254 = vunpack.c.l.b16 %v3061
        %v3255 = vunpack.c.l.b16 %v3062
        %v3256 = vpack.c.b16 %v3253, %v3252
        %v3257 = vpack.c.b16 %v3255, %v3254
        %3260 = vmatprep.subr.bf16.mxu0 0
        %3261 = vmatpush1.bf16.msra.mxu0 %v3256
        %3262 = vmatprep.subr.bf16.mxu0 0
        %3263 = vmatpush1.bf16.msra.mxu0 %v3257
        %3264 = vmatprep.subr.bf16.mxu0 0
        %3265 = vmatpush1.bf16.msra.mxu0 0
        %3266 = vmatprep.subr.bf16.mxu0 0
        %3267 = vmatpush1.bf16.msra.mxu0 0
        %3268 = vmatprep.subr.bf16.mxu0 0
        %3269 = vmatpush1.bf16.msra.mxu0 0
        %3270 = vmatprep.subr.bf16.mxu0 0
        %3271 = vmatpush1.bf16.msra.mxu0 0
        %3272 = vmatprep.subr.bf16.mxu0 0
        %3273 = vmatpush1.bf16.msra.mxu0 0
        %3274 = vmatprep.subr.bf16.mxu0 0
        %3275 = vmatpush1.bf16.msra.mxu0 0
        %3276 = vmatprep.subr.bf16.mxu0 0
        %3277 = vmatpush1.bf16.msra.mxu0 0
        %3278 = vmatprep.subr.bf16.mxu0 0
        %3279 = vmatpush1.bf16.msra.mxu0 0
        %3280 = vmatprep.subr.bf16.mxu0 0
        %3281 = vmatpush1.bf16.msra.mxu0 0
        %3282 = vmatprep.subr.bf16.mxu0 0
        %3283 = vmatpush1.bf16.msra.mxu0 0
        %3284 = vmatprep.subr.bf16.mxu0 0
        %3285 = vmatpush1.bf16.msra.mxu0 0
        %3286 = vmatprep.subr.bf16.mxu0 0
        %3287 = vmatpush1.bf16.msra.mxu0 0
        %3288 = vmatprep.subr.bf16.mxu0 0
        %3289 = vmatpush1.bf16.msra.mxu0 0
        %3290 = vmatprep.subr.bf16.mxu0 0
        %3291 = vmatpush1.bf16.msra.mxu0 0
        %3292 = vmatprep.mubr.bf16.mxu0 0
        %3293 = vmatmul.mubr.bf16.gmra.mrb[0].mxu0 %v2848
        %v3294 = vpop.f32.mrb[0].mxu0
        %v3295 = vadd.f32 %v3087, %v3294
        %v3296 = vpop.f32.mrb[0].mxu0
        %v3297 = vpop.f32.mrb[0].mxu0
        %v3298 = vpop.f32.mrb[0].mxu0
        %3299 = vdwg.mxu0
        %v3300 = vpack.c.bf16 %v2628, %v2628
        %v3301 = vpack.c.bf16 %v2680, %v2680
        %v3302 = vpack.c.bf16 %v2732, %v2732
        %v3303 = vpack.c.bf16 %v2784, %v2784
        %v3304 = vpack.c.bf16 %v2885, %v2885
        %v3305 = vpack.c.bf16 %v2937, %v2937
        %v3306 = vpack.c.bf16 %v2989, %v2989
        %v3307 = vpack.c.bf16 %v3041, %v3041
        %v3309 = vsel %vm810, %v3300, 0
        %v3312 = vsel %vm810, %v3304, 0
        %3314 = vmatprep.subr.bf16.mxu0 0
        %3315 = vmatpush1.bf16.xpose.msra.mxu0 %v3312
        %3316 = vmatprep.subr.bf16.mxu0 0
        %3317 = vmatpush1.bf16.xpose.msra.mxu0 0
        %3318 = vmatprep.subr.bf16.mxu0 0
        %3319 = vmatpush1.bf16.xpose.msra.mxu0 0
        %3320 = vmatprep.subr.bf16.mxu0 0
        %3321 = vmatpush1.bf16.xpose.msra.mxu0 0
        %3322 = vmatprep.subr.bf16.mxu0 0
        %3323 = vmatpush1.bf16.xpose.msra.mxu0 0
        %3324 = vmatprep.subr.bf16.mxu0 0
        %3325 = vmatpush1.bf16.xpose.msra.mxu0 0
        %3326 = vmatprep.subr.bf16.mxu0 0
        %3327 = vmatpush1.bf16.xpose.msra.mxu0 0
        %3328 = vmatprep.subr.bf16.mxu0 0
        %3329 = vmatpush1.bf16.xpose.msra.mxu0 0
        %3330 = vmatprep.subr.bf16.mxu0 0
        %3331 = vmatpush1.bf16.xpose.msra.mxu0 0
        %3332 = vmatprep.subr.bf16.mxu0 0
        %3333 = vmatpush1.bf16.xpose.msra.mxu0 0
        %3334 = vmatprep.subr.bf16.mxu0 0
        %3335 = vmatpush1.bf16.xpose.msra.mxu0 0
        %3336 = vmatprep.subr.bf16.mxu0 0
        %3337 = vmatpush1.bf16.xpose.msra.mxu0 0
        %3338 = vmatprep.subr.bf16.mxu0 0
        %3339 = vmatpush1.bf16.xpose.msra.mxu0 0
        %3340 = vmatprep.subr.bf16.mxu0 0
        %3341 = vmatpush1.bf16.xpose.msra.mxu0 0
        %3342 = vmatprep.subr.bf16.mxu0 0
        %3343 = vmatpush1.bf16.xpose.msra.mxu0 0
        %3344 = vmatprep.subr.bf16.mxu0 0
        %3345 = vmatpush1.bf16.xpose.msra.mxu0 0
        %3346 = vmatprep.mubr.bf16.mxu0 0
        %3347 = vmatmul.mubr.bf16.gmra.mrb[0].mxu0 %v3309
        %v3348 = vpop.f32.mrb[0].mxu0
        %v3349 = vadd.f32 0.0, %v3348
        %v3350 = vpop.f32.mrb[0].mxu0
        %v3351 = vpop.f32.mrb[0].mxu0
        %v3352 = vpop.f32.mrb[0].mxu0
        %3353 = vdwg.mxu0
        %v3355 = vsel %vm810, %v3301, 0
        %v3358 = vsel %vm810, %v3305, 0
        %3360 = vmatprep.subr.bf16.mxu0 0
        %3361 = vmatpush1.bf16.xpose.msra.mxu0 %v3358
        %3362 = vmatprep.subr.bf16.mxu0 0
        %3363 = vmatpush1.bf16.xpose.msra.mxu0 0
        %3364 = vmatprep.subr.bf16.mxu0 0
        %3365 = vmatpush1.bf16.xpose.msra.mxu0 0
        %3366 = vmatprep.subr.bf16.mxu0 0
        %3367 = vmatpush1.bf16.xpose.msra.mxu0 0
        %3368 = vmatprep.subr.bf16.mxu0 0
        %3369 = vmatpush1.bf16.xpose.msra.mxu0 0
        %3370 = vmatprep.subr.bf16.mxu0 0
        %3371 = vmatpush1.bf16.xpose.msra.mxu0 0
        %3372 = vmatprep.subr.bf16.mxu0 0
        %3373 = vmatpush1.bf16.xpose.msra.mxu0 0
        %3374 = vmatprep.subr.bf16.mxu0 0
        %3375 = vmatpush1.bf16.xpose.msra.mxu0 0
        %3376 = vmatprep.subr.bf16.mxu0 0
        %3377 = vmatpush1.bf16.xpose.msra.mxu0 0
        %3378 = vmatprep.subr.bf16.mxu0 0
        %3379 = vmatpush1.bf16.xpose.msra.mxu0 0
        %3380 = vmatprep.subr.bf16.mxu0 0
        %3381 = vmatpush1.bf16.xpose.msra.mxu0 0
        %3382 = vmatprep.subr.bf16.mxu0 0
        %3383 = vmatpush1.bf16.xpose.msra.mxu0 0
        %3384 = vmatprep.subr.bf16.mxu0 0
        %3385 = vmatpush1.bf16.xpose.msra.mxu0 0
        %3386 = vmatprep.subr.bf16.mxu0 0
        %3387 = vmatpush1.bf16.xpose.msra.mxu0 0
        %3388 = vmatprep.subr.bf16.mxu0 0
        %3389 = vmatpush1.bf16.xpose.msra.mxu0 0
        %3390 = vmatprep.subr.bf16.mxu0 0
        %3391 = vmatpush1.bf16.xpose.msra.mxu0 0
        %3392 = vmatprep.mubr.bf16.mxu0 0
        %3393 = vmatmul.mubr.bf16.gmra.mrb[0].mxu0 %v3355
        %v3394 = vpop.f32.mrb[0].mxu0
        %v3395 = vadd.f32 0.0, %v3394
        %v3396 = vpop.f32.mrb[0].mxu0
        %v3397 = vpop.f32.mrb[0].mxu0
        %v3398 = vpop.f32.mrb[0].mxu0
        %3399 = vdwg.mxu0
        %v3401 = vsel %vm810, %v3302, 0
        %v3404 = vsel %vm810, %v3306, 0
        %3406 = vmatprep.subr.bf16.mxu0 0
        %3407 = vmatpush1.bf16.xpose.msra.mxu0 %v3404
        %3408 = vmatprep.subr.bf16.mxu0 0
        %3409 = vmatpush1.bf16.xpose.msra.mxu0 0
        %3410 = vmatprep.subr.bf16.mxu0 0
        %3411 = vmatpush1.bf16.xpose.msra.mxu0 0
        %3412 = vmatprep.subr.bf16.mxu0 0
        %3413 = vmatpush1.bf16.xpose.msra.mxu0 0
        %3414 = vmatprep.subr.bf16.mxu0 0
        %3415 = vmatpush1.bf16.xpose.msra.mxu0 0
        %3416 = vmatprep.subr.bf16.mxu0 0
        %3417 = vmatpush1.bf16.xpose.msra.mxu0 0
        %3418 = vmatprep.subr.bf16.mxu0 0
        %3419 = vmatpush1.bf16.xpose.msra.mxu0 0
        %3420 = vmatprep.subr.bf16.mxu0 0
        %3421 = vmatpush1.bf16.xpose.msra.mxu0 0
        %3422 = vmatprep.subr.bf16.mxu0 0
        %3423 = vmatpush1.bf16.xpose.msra.mxu0 0
        %3424 = vmatprep.subr.bf16.mxu0 0
        %3425 = vmatpush1.bf16.xpose.msra.mxu0 0
        %3426 = vmatprep.subr.bf16.mxu0 0
        %3427 = vmatpush1.bf16.xpose.msra.mxu0 0
        %3428 = vmatprep.subr.bf16.mxu0 0
        %3429 = vmatpush1.bf16.xpose.msra.mxu0 0
        %3430 = vmatprep.subr.bf16.mxu0 0
        %3431 = vmatpush1.bf16.xpose.msra.mxu0 0
        %3432 = vmatprep.subr.bf16.mxu0 0
        %3433 = vmatpush1.bf16.xpose.msra.mxu0 0
        %3434 = vmatprep.subr.bf16.mxu0 0
        %3435 = vmatpush1.bf16.xpose.msra.mxu0 0
        %3436 = vmatprep.subr.bf16.mxu0 0
        %3437 = vmatpush1.bf16.xpose.msra.mxu0 0
        %3438 = vmatprep.mubr.bf16.mxu0 0
        %3439 = vmatmul.mubr.bf16.gmra.mrb[0].mxu0 %v3401
        %v3440 = vpop.f32.mrb[0].mxu0
        %v3441 = vadd.f32 0.0, %v3440
        %v3442 = vpop.f32.mrb[0].mxu0
        %v3443 = vpop.f32.mrb[0].mxu0
        %v3444 = vpop.f32.mrb[0].mxu0
        %3445 = vdwg.mxu0
        %v3447 = vsel %vm810, %v3303, 0
        %v3450 = vsel %vm810, %v3307, 0
        %3452 = vmatprep.subr.bf16.mxu0 0
        %3453 = vmatpush1.bf16.xpose.msra.mxu0 %v3450
        %3454 = vmatprep.subr.bf16.mxu0 0
        %3455 = vmatpush1.bf16.xpose.msra.mxu0 0
        %3456 = vmatprep.subr.bf16.mxu0 0
        %3457 = vmatpush1.bf16.xpose.msra.mxu0 0
        %3458 = vmatprep.subr.bf16.mxu0 0
        %3459 = vmatpush1.bf16.xpose.msra.mxu0 0
        %3460 = vmatprep.subr.bf16.mxu0 0
        %3461 = vmatpush1.bf16.xpose.msra.mxu0 0
        %3462 = vmatprep.subr.bf16.mxu0 0
        %3463 = vmatpush1.bf16.xpose.msra.mxu0 0
        %3464 = vmatprep.subr.bf16.mxu0 0
        %3465 = vmatpush1.bf16.xpose.msra.mxu0 0
        %3466 = vmatprep.subr.bf16.mxu0 0
        %3467 = vmatpush1.bf16.xpose.msra.mxu0 0
        %3468 = vmatprep.subr.bf16.mxu0 0
        %3469 = vmatpush1.bf16.xpose.msra.mxu0 0
        %3470 = vmatprep.subr.bf16.mxu0 0
        %3471 = vmatpush1.bf16.xpose.msra.mxu0 0
        %3472 = vmatprep.subr.bf16.mxu0 0
        %3473 = vmatpush1.bf16.xpose.msra.mxu0 0
        %3474 = vmatprep.subr.bf16.mxu0 0
        %3475 = vmatpush1.bf16.xpose.msra.mxu0 0
        %3476 = vmatprep.subr.bf16.mxu0 0
        %3477 = vmatpush1.bf16.xpose.msra.mxu0 0
        %3478 = vmatprep.subr.bf16.mxu0 0
        %3479 = vmatpush1.bf16.xpose.msra.mxu0 0
        %3480 = vmatprep.subr.bf16.mxu0 0
        %3481 = vmatpush1.bf16.xpose.msra.mxu0 0
        %3482 = vmatprep.subr.bf16.mxu0 0
        %3483 = vmatpush1.bf16.xpose.msra.mxu0 0
        %3484 = vmatprep.mubr.bf16.mxu0 0
        %3485 = vmatmul.mubr.bf16.gmra.mrb[0].mxu0 %v3447
        %v3486 = vpop.f32.mrb[0].mxu0
        %v3487 = vadd.f32 0.0, %v3486
        %v3488 = vpop.f32.mrb[0].mxu0
        %v3489 = vpop.f32.mrb[0].mxu0
        %v3490 = vpop.f32.mrb[0].mxu0
        %3491 = vdwg.mxu0
        %v3492 = vmul.f32 %v3349, 0.35355338
        %v3493 = vmul.f32 %v3395, 0.35355338
        %v3494 = vmul.f32 %v3441, 0.35355338
        %v3495 = vmul.f32 %v3487, 0.35355338
        %v3496 = vsel %vm818, -10000.0, %v3492
        %v3497 = vsel %vm818, -10000.0, %v3493
        %v3498 = vsel %vm818, -10000.0, %v3494
        %v3499 = vsel %vm818, -10000.0, %v3495
        %v3500 = vsel %vm810, %v3496, -inf
        %3501 = vmax.xlane.f32.xlu0 %v3500
        %v3502 = vpop.xlane.xlu0 %3501
        %v3503 = vsel %vm810, %v3497, -inf
        %3504 = vmax.xlane.f32.xlu0 %v3503
        %v3505 = vpop.xlane.xlu0 %3504
        %v3506 = vsel %vm810, %v3498, -inf
        %3507 = vmax.xlane.f32.xlu0 %v3506
        %v3508 = vpop.xlane.xlu0 %3507
        %v3509 = vsel %vm810, %v3499, -inf
        %3510 = vmax.xlane.f32.xlu0 %v3509
        %v3511 = vpop.xlane.xlu0 %3510
        %v3512 = vsub.f32 %v3496, %v3502
        %v3513 = vsub.f32 %v3497, %v3505
        %v3514 = vsub.f32 %v3498, %v3508
        %v3515 = vsub.f32 %v3499, %v3511
        %v3516 = vmul.f32 %v3512, 1.442695
        %v3517 = vpow.pop %v3516
        %v3518 = vmul.f32 %v3513, 1.442695
        %v3519 = vpow.pop %v3518
        %v3520 = vmul.f32 %v3514, 1.442695
        %v3521 = vpow.pop %v3520
        %v3522 = vmul.f32 %v3515, 1.442695
        %v3523 = vpow.pop %v3522
        %v3524 = vsel %vm810, %v3517, 0.0
        %3525 = vadd.xlane.f32.xlu0 %v3524
        %v3526 = vpop.xlane.xlu0 %3525
        %v3527 = vsel %vm810, %v3519, 0.0
        %3528 = vadd.xlane.f32.xlu0 %v3527
        %v3529 = vpop.xlane.xlu0 %3528
        %v3530 = vsel %vm810, %v3521, 0.0
        %3531 = vadd.xlane.f32.xlu0 %v3530
        %v3532 = vpop.xlane.xlu0 %3531
        %v3533 = vsel %vm810, %v3523, 0.0
        %3534 = vadd.xlane.f32.xlu0 %v3533
        %v3535 = vpop.xlane.xlu0 %3534
        %v3536 = vrcp.pop %v3526
        %v3537 = vrcp.pop %v3529
        %v3538 = vrcp.pop %v3532
        %v3539 = vrcp.pop %v3535
        %v3540 = vmul.f32 %v3517, %v3536
        %v3541 = vmul.f32 %v3519, %v3537
        %v3542 = vmul.f32 %v3521, %v3538
        %v3543 = vmul.f32 %v3523, %v3539
        %v3544 = vpack.c.bf16 %v3540, %v3540
        %v3545 = vpack.c.bf16 %v3541, %v3541
        %v3546 = vpack.c.bf16 %v3542, %v3542
        %v3547 = vpack.c.bf16 %v3543, %v3543
        %v3548 = vpack.c.bf16 %v3139, %v3139
        %v3549 = vpack.c.bf16 %v3191, %v3191
        %v3550 = vpack.c.bf16 %v3243, %v3243
        %v3551 = vpack.c.bf16 %v3295, %v3295
        %v3553 = vsel %vm810, %v3544, 0
        %v3556 = vsel %vm823, %v3548, 0
        %3558 = vmatprep.subr.bf16.mxu0 0
        %3559 = vmatpush1.bf16.msra.mxu0 %v3556
        %3560 = vmatprep.subr.bf16.mxu0 0
        %3561 = vmatpush1.bf16.msra.mxu0 0
        %3562 = vmatprep.subr.bf16.mxu0 0
        %3563 = vmatpush1.bf16.msra.mxu0 0
        %3564 = vmatprep.subr.bf16.mxu0 0
        %3565 = vmatpush1.bf16.msra.mxu0 0
        %3566 = vmatprep.subr.bf16.mxu0 0
        %3567 = vmatpush1.bf16.msra.mxu0 0
        %3568 = vmatprep.subr.bf16.mxu0 0
        %3569 = vmatpush1.bf16.msra.mxu0 0
        %3570 = vmatprep.subr.bf16.mxu0 0
        %3571 = vmatpush1.bf16.msra.mxu0 0
        %3572 = vmatprep.subr.bf16.mxu0 0
        %3573 = vmatpush1.bf16.msra.mxu0 0
        %3574 = vmatprep.subr.bf16.mxu0 0
        %3575 = vmatpush1.bf16.msra.mxu0 0
        %3576 = vmatprep.subr.bf16.mxu0 0
        %3577 = vmatpush1.bf16.msra.mxu0 0
        %3578 = vmatprep.subr.bf16.mxu0 0
        %3579 = vmatpush1.bf16.msra.mxu0 0
        %3580 = vmatprep.subr.bf16.mxu0 0
        %3581 = vmatpush1.bf16.msra.mxu0 0
        %3582 = vmatprep.subr.bf16.mxu0 0
        %3583 = vmatpush1.bf16.msra.mxu0 0
        %3584 = vmatprep.subr.bf16.mxu0 0
        %3585 = vmatpush1.bf16.msra.mxu0 0
        %3586 = vmatprep.subr.bf16.mxu0 0
        %3587 = vmatpush1.bf16.msra.mxu0 0
        %3588 = vmatprep.subr.bf16.mxu0 0
        %3589 = vmatpush1.bf16.msra.mxu0 0
        %3590 = vmatprep.mubr.bf16.mxu0 0
        %3591 = vmatmul.mubr.bf16.gmra.mrb[0].mxu0 %v3553
        %v3592 = vpop.f32.mrb[0].mxu0
        %v3593 = vadd.f32 0.0, %v3592
        %v3594 = vpop.f32.mrb[0].mxu0
        %v3595 = vpop.f32.mrb[0].mxu0
        %v3596 = vpop.f32.mrb[0].mxu0
        %3597 = vdwg.mxu0
        %v3599 = vsel %vm810, %v3545, 0
        %v3602 = vsel %vm823, %v3549, 0
        %3604 = vmatprep.subr.bf16.mxu0 0
        %3605 = vmatpush1.bf16.msra.mxu0 %v3602
        %3606 = vmatprep.subr.bf16.mxu0 0
        %3607 = vmatpush1.bf16.msra.mxu0 0
        %3608 = vmatprep.subr.bf16.mxu0 0
        %3609 = vmatpush1.bf16.msra.mxu0 0
        %3610 = vmatprep.subr.bf16.mxu0 0
        %3611 = vmatpush1.bf16.msra.mxu0 0
        %3612 = vmatprep.subr.bf16.mxu0 0
        %3613 = vmatpush1.bf16.msra.mxu0 0
        %3614 = vmatprep.subr.bf16.mxu0 0
        %3615 = vmatpush1.bf16.msra.mxu0 0
        %3616 = vmatprep.subr.bf16.mxu0 0
        %3617 = vmatpush1.bf16.msra.mxu0 0
        %3618 = vmatprep.subr.bf16.mxu0 0
        %3619 = vmatpush1.bf16.msra.mxu0 0
        %3620 = vmatprep.subr.bf16.mxu0 0
        %3621 = vmatpush1.bf16.msra.mxu0 0
        %3622 = vmatprep.subr.bf16.mxu0 0
        %3623 = vmatpush1.bf16.msra.mxu0 0
        %3624 = vmatprep.subr.bf16.mxu0 0
        %3625 = vmatpush1.bf16.msra.mxu0 0
        %3626 = vmatprep.subr.bf16.mxu0 0
        %3627 = vmatpush1.bf16.msra.mxu0 0
        %3628 = vmatprep.subr.bf16.mxu0 0
        %3629 = vmatpush1.bf16.msra.mxu0 0
        %3630 = vmatprep.subr.bf16.mxu0 0
        %3631 = vmatpush1.bf16.msra.mxu0 0
        %3632 = vmatprep.subr.bf16.mxu0 0
        %3633 = vmatpush1.bf16.msra.mxu0 0
        %3634 = vmatprep.subr.bf16.mxu0 0
        %3635 = vmatpush1.bf16.msra.mxu0 0
        %3636 = vmatprep.mubr.bf16.mxu0 0
        %3637 = vmatmul.mubr.bf16.gmra.mrb[0].mxu0 %v3599
        %v3638 = vpop.f32.mrb[0].mxu0
        %v3639 = vadd.f32 0.0, %v3638
        %v3640 = vpop.f32.mrb[0].mxu0
        %v3641 = vpop.f32.mrb[0].mxu0
        %v3642 = vpop.f32.mrb[0].mxu0
        %3643 = vdwg.mxu0
        %v3645 = vsel %vm810, %v3546, 0
        %v3648 = vsel %vm823, %v3550, 0
        %3650 = vmatprep.subr.bf16.mxu0 0
        %3651 = vmatpush1.bf16.msra.mxu0 %v3648
        %3652 = vmatprep.subr.bf16.mxu0 0
        %3653 = vmatpush1.bf16.msra.mxu0 0
        %3654 = vmatprep.subr.bf16.mxu0 0
        %3655 = vmatpush1.bf16.msra.mxu0 0
        %3656 = vmatprep.subr.bf16.mxu0 0
        %3657 = vmatpush1.bf16.msra.mxu0 0
        %3658 = vmatprep.subr.bf16.mxu0 0
        %3659 = vmatpush1.bf16.msra.mxu0 0
        %3660 = vmatprep.subr.bf16.mxu0 0
        %3661 = vmatpush1.bf16.msra.mxu0 0
        %3662 = vmatprep.subr.bf16.mxu0 0
        %3663 = vmatpush1.bf16.msra.mxu0 0
        %3664 = vmatprep.subr.bf16.mxu0 0
        %3665 = vmatpush1.bf16.msra.mxu0 0
        %3666 = vmatprep.subr.bf16.mxu0 0
        %3667 = vmatpush1.bf16.msra.mxu0 0
        %3668 = vmatprep.subr.bf16.mxu0 0
        %3669 = vmatpush1.bf16.msra.mxu0 0
        %3670 = vmatprep.subr.bf16.mxu0 0
        %3671 = vmatpush1.bf16.msra.mxu0 0
        %3672 = vmatprep.subr.bf16.mxu0 0
        %3673 = vmatpush1.bf16.msra.mxu0 0
        %3674 = vmatprep.subr.bf16.mxu0 0
        %3675 = vmatpush1.bf16.msra.mxu0 0
        %3676 = vmatprep.subr.bf16.mxu0 0
        %3677 = vmatpush1.bf16.msra.mxu0 0
        %3678 = vmatprep.subr.bf16.mxu0 0
        %3679 = vmatpush1.bf16.msra.mxu0 0
        %3680 = vmatprep.subr.bf16.mxu0 0
        %3681 = vmatpush1.bf16.msra.mxu0 0
        %3682 = vmatprep.mubr.bf16.mxu0 0
        %3683 = vmatmul.mubr.bf16.gmra.mrb[0].mxu0 %v3645
        %v3684 = vpop.f32.mrb[0].mxu0
        %v3685 = vadd.f32 0.0, %v3684
        %v3686 = vpop.f32.mrb[0].mxu0
        %v3687 = vpop.f32.mrb[0].mxu0
        %v3688 = vpop.f32.mrb[0].mxu0
        %3689 = vdwg.mxu0
        %v3691 = vsel %vm810, %v3547, 0
        %v3694 = vsel %vm823, %v3551, 0
        %3696 = vmatprep.subr.bf16.mxu0 0
        %3697 = vmatpush1.bf16.msra.mxu0 %v3694
        %3698 = vmatprep.subr.bf16.mxu0 0
        %3699 = vmatpush1.bf16.msra.mxu0 0
        %3700 = vmatprep.subr.bf16.mxu0 0
        %3701 = vmatpush1.bf16.msra.mxu0 0
        %3702 = vmatprep.subr.bf16.mxu0 0
        %3703 = vmatpush1.bf16.msra.mxu0 0
        %3704 = vmatprep.subr.bf16.mxu0 0
        %3705 = vmatpush1.bf16.msra.mxu0 0
        %3706 = vmatprep.subr.bf16.mxu0 0
        %3707 = vmatpush1.bf16.msra.mxu0 0
        %3708 = vmatprep.subr.bf16.mxu0 0
        %3709 = vmatpush1.bf16.msra.mxu0 0
        %3710 = vmatprep.subr.bf16.mxu0 0
        %3711 = vmatpush1.bf16.msra.mxu0 0
        %3712 = vmatprep.subr.bf16.mxu0 0
        %3713 = vmatpush1.bf16.msra.mxu0 0
        %3714 = vmatprep.subr.bf16.mxu0 0
        %3715 = vmatpush1.bf16.msra.mxu0 0
        %3716 = vmatprep.subr.bf16.mxu0 0
        %3717 = vmatpush1.bf16.msra.mxu0 0
        %3718 = vmatprep.subr.bf16.mxu0 0
        %3719 = vmatpush1.bf16.msra.mxu0 0
        %3720 = vmatprep.subr.bf16.mxu0 0
        %3721 = vmatpush1.bf16.msra.mxu0 0
        %3722 = vmatprep.subr.bf16.mxu0 0
        %3723 = vmatpush1.bf16.msra.mxu0 0
        %3724 = vmatprep.subr.bf16.mxu0 0
        %3725 = vmatpush1.bf16.msra.mxu0 0
        %3726 = vmatprep.subr.bf16.mxu0 0
        %3727 = vmatpush1.bf16.msra.mxu0 0
        %3728 = vmatprep.mubr.bf16.mxu0 0
        %3729 = vmatmul.mubr.bf16.gmra.mrb[0].mxu0 %v3691
        %v3730 = vpop.f32.mrb[0].mxu0
        %v3731 = vadd.f32 0.0, %v3730
        %v3732 = vpop.f32.mrb[0].mxu0
        %v3733 = vpop.f32.mrb[0].mxu0
        %v3734 = vpop.f32.mrb[0].mxu0
        %3735 = vdwg.mxu0
        %v3736 = vpack.c.bf16 %v3593, %v3593
        %v3737 = vpack.c.bf16 %v3639, %v3639
        %v3738 = vpack.c.bf16 %v3685, %v3685
        %v3739 = vpack.c.bf16 %v3731, %v3731
        %s3740 = scalar_lea.vmem %s12, 16
        %v3741 = vld [vmem:[%s3740] sm:$0xf]
        %v3742 = vld [vmem:[%s3740 + $0x4] sm:$0xf]
        %v3743 = vld [vmem:[%s3740 + $0x8] sm:$0xf]
        %v3744 = vld [vmem:[%s3740 + $0xc] sm:$0xf]
        %v3746 = vsel %vm810, %v3736, 0
        %v3749 = vsel %vm823, %v3741, 0
        %3751 = vmatprep.subr.bf16.mxu0 0
        %3752 = vmatpush1.bf16.msra.mxu0 %v3749
        %3753 = vmatprep.subr.bf16.mxu0 0
        %3754 = vmatpush1.bf16.msra.mxu0 0
        %3755 = vmatprep.subr.bf16.mxu0 0
        %3756 = vmatpush1.bf16.msra.mxu0 0
        %3757 = vmatprep.subr.bf16.mxu0 0
        %3758 = vmatpush1.bf16.msra.mxu0 0
        %3759 = vmatprep.subr.bf16.mxu0 0
        %3760 = vmatpush1.bf16.msra.mxu0 0
        %3761 = vmatprep.subr.bf16.mxu0 0
        %3762 = vmatpush1.bf16.msra.mxu0 0
        %3763 = vmatprep.subr.bf16.mxu0 0
        %3764 = vmatpush1.bf16.msra.mxu0 0
        %3765 = vmatprep.subr.bf16.mxu0 0
        %3766 = vmatpush1.bf16.msra.mxu0 0
        %3767 = vmatprep.subr.bf16.mxu0 0
        %3768 = vmatpush1.bf16.msra.mxu0 0
        %3769 = vmatprep.subr.bf16.mxu0 0
        %3770 = vmatpush1.bf16.msra.mxu0 0
        %3771 = vmatprep.subr.bf16.mxu0 0
        %3772 = vmatpush1.bf16.msra.mxu0 0
        %3773 = vmatprep.subr.bf16.mxu0 0
        %3774 = vmatpush1.bf16.msra.mxu0 0
        %3775 = vmatprep.subr.bf16.mxu0 0
        %3776 = vmatpush1.bf16.msra.mxu0 0
        %3777 = vmatprep.subr.bf16.mxu0 0
        %3778 = vmatpush1.bf16.msra.mxu0 0
        %3779 = vmatprep.subr.bf16.mxu0 0
        %3780 = vmatpush1.bf16.msra.mxu0 0
        %3781 = vmatprep.subr.bf16.mxu0 0
        %3782 = vmatpush1.bf16.msra.mxu0 0
        %3783 = vmatprep.mubr.bf16.mxu0 0
        %3784 = vmatmul.mubr.bf16.gmra.mrb[0].mxu0 %v3746
        %v3785 = vpop.f32.mrb[0].mxu0
        %v3786 = vadd.f32 0.0, %v3785
        %v3787 = vpop.f32.mrb[0].mxu0
        %v3788 = vpop.f32.mrb[0].mxu0
        %v3789 = vpop.f32.mrb[0].mxu0
        %3790 = vdwg.mxu0
        %v3792 = vsel %vm810, %v3737, 0
        %v3795 = vsel %vm823, %v3742, 0
        %3797 = vmatprep.subr.bf16.mxu0 0
        %3798 = vmatpush1.bf16.msra.mxu0 %v3795
        %3799 = vmatprep.subr.bf16.mxu0 0
        %3800 = vmatpush1.bf16.msra.mxu0 0
        %3801 = vmatprep.subr.bf16.mxu0 0
        %3802 = vmatpush1.bf16.msra.mxu0 0
        %3803 = vmatprep.subr.bf16.mxu0 0
        %3804 = vmatpush1.bf16.msra.mxu0 0
        %3805 = vmatprep.subr.bf16.mxu0 0
        %3806 = vmatpush1.bf16.msra.mxu0 0
        %3807 = vmatprep.subr.bf16.mxu0 0
        %3808 = vmatpush1.bf16.msra.mxu0 0
        %3809 = vmatprep.subr.bf16.mxu0 0
        %3810 = vmatpush1.bf16.msra.mxu0 0
        %3811 = vmatprep.subr.bf16.mxu0 0
        %3812 = vmatpush1.bf16.msra.mxu0 0
        %3813 = vmatprep.subr.bf16.mxu0 0
        %3814 = vmatpush1.bf16.msra.mxu0 0
        %3815 = vmatprep.subr.bf16.mxu0 0
        %3816 = vmatpush1.bf16.msra.mxu0 0
        %3817 = vmatprep.subr.bf16.mxu0 0
        %3818 = vmatpush1.bf16.msra.mxu0 0
        %3819 = vmatprep.subr.bf16.mxu0 0
        %3820 = vmatpush1.bf16.msra.mxu0 0
        %3821 = vmatprep.subr.bf16.mxu0 0
        %3822 = vmatpush1.bf16.msra.mxu0 0
        %3823 = vmatprep.subr.bf16.mxu0 0
        %3824 = vmatpush1.bf16.msra.mxu0 0
        %3825 = vmatprep.subr.bf16.mxu0 0
        %3826 = vmatpush1.bf16.msra.mxu0 0
        %3827 = vmatprep.subr.bf16.mxu0 0
        %3828 = vmatpush1.bf16.msra.mxu0 0
        %3829 = vmatprep.mubr.bf16.mxu0 0
        %3830 = vmatmul.mubr.bf16.gmra.mrb[0].mxu0 %v3792
        %v3831 = vpop.f32.mrb[0].mxu0
        %v3832 = vadd.f32 0.0, %v3831
        %v3833 = vpop.f32.mrb[0].mxu0
        %v3834 = vpop.f32.mrb[0].mxu0
        %v3835 = vpop.f32.mrb[0].mxu0
        %3836 = vdwg.mxu0
        %v3838 = vsel %vm810, %v3738, 0
        %v3841 = vsel %vm823, %v3743, 0
        %3843 = vmatprep.subr.bf16.mxu0 0
        %3844 = vmatpush1.bf16.msra.mxu0 %v3841
        %3845 = vmatprep.subr.bf16.mxu0 0
        %3846 = vmatpush1.bf16.msra.mxu0 0
        %3847 = vmatprep.subr.bf16.mxu0 0
        %3848 = vmatpush1.bf16.msra.mxu0 0
        %3849 = vmatprep.subr.bf16.mxu0 0
        %3850 = vmatpush1.bf16.msra.mxu0 0
        %3851 = vmatprep.subr.bf16.mxu0 0
        %3852 = vmatpush1.bf16.msra.mxu0 0
        %3853 = vmatprep.subr.bf16.mxu0 0
        %3854 = vmatpush1.bf16.msra.mxu0 0
        %3855 = vmatprep.subr.bf16.mxu0 0
        %3856 = vmatpush1.bf16.msra.mxu0 0
        %3857 = vmatprep.subr.bf16.mxu0 0
        %3858 = vmatpush1.bf16.msra.mxu0 0
        %3859 = vmatprep.subr.bf16.mxu0 0
        %3860 = vmatpush1.bf16.msra.mxu0 0
        %3861 = vmatprep.subr.bf16.mxu0 0
        %3862 = vmatpush1.bf16.msra.mxu0 0
        %3863 = vmatprep.subr.bf16.mxu0 0
        %3864 = vmatpush1.bf16.msra.mxu0 0
        %3865 = vmatprep.subr.bf16.mxu0 0
        %3866 = vmatpush1.bf16.msra.mxu0 0
        %3867 = vmatprep.subr.bf16.mxu0 0
        %3868 = vmatpush1.bf16.msra.mxu0 0
        %3869 = vmatprep.subr.bf16.mxu0 0
        %3870 = vmatpush1.bf16.msra.mxu0 0
        %3871 = vmatprep.subr.bf16.mxu0 0
        %3872 = vmatpush1.bf16.msra.mxu0 0
        %3873 = vmatprep.subr.bf16.mxu0 0
        %3874 = vmatpush1.bf16.msra.mxu0 0
        %3875 = vmatprep.mubr.bf16.mxu0 0
        %3876 = vmatmul.mubr.bf16.gmra.mrb[0].mxu0 %v3838
        %v3877 = vpop.f32.mrb[0].mxu0
        %v3878 = vadd.f32 0.0, %v3877
        %v3879 = vpop.f32.mrb[0].mxu0
        %v3880 = vpop.f32.mrb[0].mxu0
        %v3881 = vpop.f32.mrb[0].mxu0
        %3882 = vdwg.mxu0
        %v3884 = vsel %vm810, %v3739, 0
        %v3887 = vsel %vm823, %v3744, 0
        %3889 = vmatprep.subr.bf16.mxu0 0
        %3890 = vmatpush1.bf16.msra.mxu0 %v3887
        %3891 = vmatprep.subr.bf16.mxu0 0
        %3892 = vmatpush1.bf16.msra.mxu0 0
        %3893 = vmatprep.subr.bf16.mxu0 0
        %3894 = vmatpush1.bf16.msra.mxu0 0
        %3895 = vmatprep.subr.bf16.mxu0 0
        %3896 = vmatpush1.bf16.msra.mxu0 0
        %3897 = vmatprep.subr.bf16.mxu0 0
        %3898 = vmatpush1.bf16.msra.mxu0 0
        %3899 = vmatprep.subr.bf16.mxu0 0
        %3900 = vmatpush1.bf16.msra.mxu0 0
        %3901 = vmatprep.subr.bf16.mxu0 0
        %3902 = vmatpush1.bf16.msra.mxu0 0
        %3903 = vmatprep.subr.bf16.mxu0 0
        %3904 = vmatpush1.bf16.msra.mxu0 0
        %3905 = vmatprep.subr.bf16.mxu0 0
        %3906 = vmatpush1.bf16.msra.mxu0 0
        %3907 = vmatprep.subr.bf16.mxu0 0
        %3908 = vmatpush1.bf16.msra.mxu0 0
        %3909 = vmatprep.subr.bf16.mxu0 0
        %3910 = vmatpush1.bf16.msra.mxu0 0
        %3911 = vmatprep.subr.bf16.mxu0 0
        %3912 = vmatpush1.bf16.msra.mxu0 0
        %3913 = vmatprep.subr.bf16.mxu0 0
        %3914 = vmatpush1.bf16.msra.mxu0 0
        %3915 = vmatprep.subr.bf16.mxu0 0
        %3916 = vmatpush1.bf16.msra.mxu0 0
        %3917 = vmatprep.subr.bf16.mxu0 0
        %3918 = vmatpush1.bf16.msra.mxu0 0
        %3919 = vmatprep.subr.bf16.mxu0 0
        %3920 = vmatpush1.bf16.msra.mxu0 0
        %3921 = vmatprep.mubr.bf16.mxu0 0
        %3922 = vmatmul.mubr.bf16.gmra.mrb[0].mxu0 %v3884
        %v3923 = vpop.f32.mrb[0].mxu0
        %v3924 = vadd.f32 0.0, %v3923
        %v3925 = vpop.f32.mrb[0].mxu0
        %v3926 = vpop.f32.mrb[0].mxu0
        %v3927 = vpop.f32.mrb[0].mxu0
        %3928 = vdwg.mxu0
        %v3929 = vsel %vm925, %v3786, 0.0
        %v3930 = vsel %vm925, %v3832, 0.0
        %v3931 = vadd.f32 %v3929, %v3930
        %v3932 = vsel %vm925, %v3878, 0.0
        %v3933 = vadd.f32 %v3931, %v3932
        %v3934 = vsel %vm925, %v3924, 0.0
        %v3935 = vadd.f32 %v3933, %v3934
        %s3936 = scalar_lea.vmem %s13, 1
        %v3937 = vld [vmem:[%s3936] sm:$0x1]
        %v3939 = vlaneseq
        %v3940 = vshrl.u32 %v3939, 7
        %v3941 = vsub.s32 0, %v3940
        %v3942 = vrot.slane %v3937, %v3941
        %v3944 = vadd.f32 %v3935, %v3942
        %v3945 = vadd.f32 %v3944, %v2486
        %v3946 = vsel %vm925, %v3945, 0.0
        %3947 = vadd.xlane.f32.xlu0 %v3946
        %v3948 = vpop.xlane.xlu0 %3947
        %v3949 = vmul.f32 %v3948, %v2278
        %v3950 = vsub.f32 %v3945, %v3949
        %v3951 = vmul.f32 %v3950, %v3950
        %v3952 = vsel %vm925, %v3951, 0.0
        %3953 = vadd.xlane.f32.xlu0 %v3952
        %v3954 = vpop.xlane.xlu0 %3953
        %v3955 = vmul.f32 %v3954, %v2278
        %v3956 = vadd.f32 %v3955, 1e-12
        %v3957 = vrsqrt.pop %v3956
        %v3958 = vmul.f32 %v3950, %v3957
        %s3959 = scalar_lea.vmem %s14, 1
        %v3960 = vld [vmem:[%s3959] sm:$0x1]
        %v3962 = vlaneseq
        %v3963 = vshrl.u32 %v3962, 7
        %v3964 = vsub.s32 0, %v3963
        %v3965 = vrot.slane %v3960, %v3964
        %v3967 = vmul.f32 %v3965, %v3958
        %s3968 = scalar_lea.vmem %s15, 1
        %v3969 = vld [vmem:[%s3968] sm:$0x1]
        %v3971 = vlaneseq
        %v3972 = vshrl.u32 %v3971, 7
        %v3973 = vsub.s32 0, %v3972
        %v3974 = vrot.slane %v3969, %v3973
        %v3976 = vadd.f32 %v3967, %v3974
        %v3977 = vpack.c.bf16 %v3976, %v3976
        %s3978 = scalar_lea.vmem %s16, 16
        %v3979 = vld [vmem:[%s3978] sm:$0xf]
        %v3980 = vld [vmem:[%s3978 + $0x4] sm:$0xf]
        %v3981 = vld [vmem:[%s3978 + $0x8] sm:$0xf]
        %v3982 = vld [vmem:[%s3978 + $0xc] sm:$0xf]
        %s3983 = scalar_lea.vmem %s17, 1
        %v3984 = vld [vmem:[%s3983] sm:$0x1]
        %v3986 = vlaneseq
        %v3987 = vshrl.u32 %v3986, 7
        %v3988 = vsub.s32 0, %v3987
        %v3989 = vrot.slane %v3984, %v3988
        %v3995 = vunpack.c.l.b16 %v3979
        %v3996 = vunpack.c.l.b16 %v3980
        %v3997 = vunpack.c.l.b16 %v3981
        %v3998 = vunpack.c.l.b16 %v3982
        %v3999 = vpack.c.b16 %v3996, %v3995
        %v4000 = vpack.c.b16 %v3998, %v3997
        %v4004 = vsel %vm925, %v3977, 0
        %4006 = vmatprep.subr.bf16.mxu0 0
        %4007 = vmatpush1.bf16.msra.mxu0 %v3999
        %4008 = vmatprep.subr.bf16.mxu0 0
        %4009 = vmatpush1.bf16.msra.mxu0 %v4000
        %4010 = vmatprep.subr.bf16.mxu0 0
        %4011 = vmatpush1.bf16.msra.mxu0 0
        %4012 = vmatprep.subr.bf16.mxu0 0
        %4013 = vmatpush1.bf16.msra.mxu0 0
        %4014 = vmatprep.subr.bf16.mxu0 0
        %4015 = vmatpush1.bf16.msra.mxu0 0
        %4016 = vmatprep.subr.bf16.mxu0 0
        %4017 = vmatpush1.bf16.msra.mxu0 0
        %4018 = vmatprep.subr.bf16.mxu0 0
        %4019 = vmatpush1.bf16.msra.mxu0 0
        %4020 = vmatprep.subr.bf16.mxu0 0
        %4021 = vmatpush1.bf16.msra.mxu0 0
        %4022 = vmatprep.subr.bf16.mxu0 0
        %4023 = vmatpush1.bf16.msra.mxu0 0
        %4024 = vmatprep.subr.bf16.mxu0 0
        %4025 = vmatpush1.bf16.msra.mxu0 0
        %4026 = vmatprep.subr.bf16.mxu0 0
        %4027 = vmatpush1.bf16.msra.mxu0 0
        %4028 = vmatprep.subr.bf16.mxu0 0
        %4029 = vmatpush1.bf16.msra.mxu0 0
        %4030 = vmatprep.subr.bf16.mxu0 0
        %4031 = vmatpush1.bf16.msra.mxu0 0
        %4032 = vmatprep.subr.bf16.mxu0 0
        %4033 = vmatpush1.bf16.msra.mxu0 0
        %4034 = vmatprep.subr.bf16.mxu0 0
        %4035 = vmatpush1.bf16.msra.mxu0 0
        %4036 = vmatprep.subr.bf16.mxu0 0
        %4037 = vmatpush1.bf16.msra.mxu0 0
        %4038 = vmatprep.mubr.bf16.mxu0 0
        %4039 = vmatmul.mubr.bf16.gmra.mrb[0].mxu0 %v4004
        %v4040 = vpop.f32.mrb[0].mxu0
        %v4041 = vadd.f32 %v3989, %v4040
        %v4042 = vpop.f32.mrb[0].mxu0
        %v4043 = vpop.f32.mrb[0].mxu0
        %v4044 = vpop.f32.mrb[0].mxu0
        %4045 = vdwg.mxu0
        %v4046 = vmax.f32 %v4041, 0.0
        %v4047 = vpack.c.bf16 %v4046, %v4046
        %s4048 = scalar_lea.vmem %s18, 32
        %v4049 = vld [vmem:[%s4048] sm:$0xf]
        %v4050 = vld [vmem:[%s4048 + $0x4] sm:$0xf]
        %v4051 = vld [vmem:[%s4048 + $0x8] sm:$0xf]
        %v4052 = vld [vmem:[%s4048 + $0xc] sm:$0xf]
        %v4053 = vld [vmem:[%s4048 + $0x10] sm:$0xf]
        %v4054 = vld [vmem:[%s4048 + $0x14] sm:$0xf]
        %v4055 = vld [vmem:[%s4048 + $0x18] sm:$0xf]
        %v4056 = vld [vmem:[%s4048 + $0x1c] sm:$0xf]
        %s4057 = scalar_lea.vmem %s19, 1
        %v4058 = vld [vmem:[%s4057] sm:$0x1]
        %v4060 = vlaneseq
        %v4061 = vshrl.u32 %v4060, 7
        %v4062 = vsub.s32 0, %v4061
        %v4063 = vrot.slane %v4058, %v4062
        %v4073 = vunpack.c.l.b16 %v4049
        %v4074 = vunpack.c.l.b16 %v4050
        %v4075 = vunpack.c.l.b16 %v4051
        %v4076 = vunpack.c.l.b16 %v4052
        %v4077 = vunpack.c.l.b16 %v4053
        %v4078 = vunpack.c.l.b16 %v4054
        %v4079 = vunpack.c.l.b16 %v4055
        %v4080 = vunpack.c.l.b16 %v4056
        %v4081 = vpack.c.b16 %v4074, %v4073
        %v4082 = vpack.c.b16 %v4076, %v4075
        %v4083 = vpack.c.b16 %v4078, %v4077
        %v4084 = vpack.c.b16 %v4080, %v4079
        %v4090 = vsel %vm2413, %v4047, 0
        %4092 = vmatprep.subr.bf16.mxu0 0
        %4093 = vmatpush1.bf16.msra.mxu0 %v4081
        %4094 = vmatprep.subr.bf16.mxu0 0
        %4095 = vmatpush1.bf16.msra.mxu0 %v4082
        %4096 = vmatprep.subr.bf16.mxu0 0
        %4097 = vmatpush1.bf16.msra.mxu0 %v4083
        %4098 = vmatprep.subr.bf16.mxu0 0
        %4099 = vmatpush1.bf16.msra.mxu0 %v4084
        %4100 = vmatprep.subr.bf16.mxu0 0
        %4101 = vmatpush1.bf16.msra.mxu0 0
        %4102 = vmatprep.subr.bf16.mxu0 0
        %4103 = vmatpush1.bf16.msra.mxu0 0
        %4104 = vmatprep.subr.bf16.mxu0 0
        %4105 = vmatpush1.bf16.msra.mxu0 0
        %4106 = vmatprep.subr.bf16.mxu0 0
        %4107 = vmatpush1.bf16.msra.mxu0 0
        %4108 = vmatprep.subr.bf16.mxu0 0
        %4109 = vmatpush1.bf16.msra.mxu0 0
        %4110 = vmatprep.subr.bf16.mxu0 0
        %4111 = vmatpush1.bf16.msra.mxu0 0
        %4112 = vmatprep.subr.bf16.mxu0 0
        %4113 = vmatpush1.bf16.msra.mxu0 0
        %4114 = vmatprep.subr.bf16.mxu0 0
        %4115 = vmatpush1.bf16.msra.mxu0 0
        %4116 = vmatprep.subr.bf16.mxu0 0
        %4117 = vmatpush1.bf16.msra.mxu0 0
        %4118 = vmatprep.subr.bf16.mxu0 0
        %4119 = vmatpush1.bf16.msra.mxu0 0
        %4120 = vmatprep.subr.bf16.mxu0 0
        %4121 = vmatpush1.bf16.msra.mxu0 0
        %4122 = vmatprep.subr.bf16.mxu0 0
        %4123 = vmatpush1.bf16.msra.mxu0 0
        %4124 = vmatprep.mubr.bf16.mxu0 0
        %4125 = vmatmul.mubr.bf16.gmra.mrb[0].mxu0 %v4090
        %v4126 = vpop.f32.mrb[0].mxu0
        %v4127 = vadd.f32 %v4063, %v4126
        %v4128 = vpop.f32.mrb[0].mxu0
        %v4129 = vpop.f32.mrb[0].mxu0
        %v4130 = vpop.f32.mrb[0].mxu0
        %4131 = vdwg.mxu0
        %v4132 = vadd.f32 %v4127, %v3976
        %v4133 = vsel %vm925, %v4132, 0.0
        %4134 = vadd.xlane.f32.xlu0 %v4133
        %v4135 = vpop.xlane.xlu0 %4134
        %v4136 = vmul.f32 %v4135, %v2278
        %v4137 = vsub.f32 %v4132, %v4136
        %v4138 = vmul.f32 %v4137, %v4137
        %v4139 = vsel %vm925, %v4138, 0.0
        %4140 = vadd.xlane.f32.xlu0 %v4139
        %v4141 = vpop.xlane.xlu0 %4140
        %v4142 = vmul.f32 %v4141, %v2278
        %v4143 = vadd.f32 %v4142, 1e-12
        %v4144 = vrsqrt.pop %v4143
        %v4145 = vmul.f32 %v4137, %v4144
        %s4146 = scalar_lea.vmem %s20, 1
        %v4147 = vld [vmem:[%s4146] sm:$0x1]
        %v4149 = vlaneseq
        %v4150 = vshrl.u32 %v4149, 7
        %v4151 = vsub.s32 0, %v4150
        %v4152 = vrot.slane %v4147, %v4151
        %v4154 = vmul.f32 %v4152, %v4145
        %s4155 = scalar_lea.vmem %s21, 1
        %v4156 = vld [vmem:[%s4155] sm:$0x1]
        %v4158 = vlaneseq
        %v4159 = vshrl.u32 %v4158, 7
        %v4160 = vsub.s32 0, %v4159
        %v4161 = vrot.slane %v4156, %v4160
        %v4163 = vadd.f32 %v4154, %v4161
        %4164 = vst.msk [vmem:[%s713] sm:$0xff] %vm925, %v4163
        %s4165 = sand.u32 %s526, 1
        %s4166 = scalar_lea.sflag [#allocation3], %s4165
        %s4167 = sand.u32 %s526, 1
        %s4168 = smul.addr %s4167, 8
        %s4169 = scalar_lea.vmem [#allocation2], %s4168
        // Predicated region
        $region109: #{tpu_custom_call.1} parent=107 // pred_check
          %p4170 = pneg %p536
        $region110: #{tpu_custom_call.1} parent=107 // pred_check_branch
          %4172 = sbr.rel (%p4170) target = $region112
        $region111: #{tpu_custom_call.1} parent=107 // pred_region
          %s4174 = ssub.s32 128, 128
          %4175 = vsyncadd %s4166, %s4174
          %s4176 = smul.addr %s36, 128
          %s4177 = scalar_lea.hbm %s22, %s4176
          %s4179 = sshll.u32 %s4169, 4
          %s4180 = int_to_ptr.vmem [resolvable:$true] %s4179
          %4182 = dma.vmem_to_hbm [thread:$0]  %s4180, 128, %s4177, %s4166
        $region112: #{tpu_custom_call.1} parent=107 // pred_fallthru
          _
      $region108: #{tpu_custom_call.1} parent=5 // pred_fallthru
        _
      %p4183 = scmp.le.s32.totalorder 2, %s31
      // Predicated region
      $region113: #{tpu_custom_call.1} parent=5 // pred_check
        %p4184 = pneg %p4183
      $region114: #{tpu_custom_call.1} parent=5 // pred_check_branch
        %4186 = sbr.rel (%p4184) target = $region116
      $region115: #{tpu_custom_call.1} parent=5 // pred_region
        %s4187 = ssub.s32 %s31, 2
        // Predicated region
        $region117: #{tpu_custom_call.1} parent=115 // pred_check
          %p4188 = pneg %p542
        $region118: #{tpu_custom_call.1} parent=115 // pred_check_branch
          %4190 = sbr.rel (%p4188) target = $region120
        $region119: #{tpu_custom_call.1} parent=115 // pred_region
          %s4191 = sand.u32 %s527, 1
          %s4192 = scalar_lea.sflag [#allocation3], %s4191
          %s4193 = sand.u32 %s527, 1
          %s4194 = smul.addr %s4193, 8
          %s4195 = scalar_lea.vmem [#allocation2], %s4194
          %4196 = dma.done %s4192, 128
        $region120: #{tpu_custom_call.1} parent=115 // pred_fallthru
          _
      $region116: #{tpu_custom_call.1} parent=5 // pred_fallthru
        _
    $region6: #{tpu_custom_call.1} parent=1 // loop_footer
      %s35 = sadd.s32 1, %s31
    $region7: #{tpu_custom_call.1} parent=1 // loop_footer_branch
      %30 = sbr.rel target = $region3
    $region8: #{tpu_custom_call.1} parent=1 // loop_exit
      _
    %4197 = vsyncpa [#allocation3], 1
    %s4198 = scalar_lea.sflag [#allocation3], 1
    %4199 = vsyncpa %s4198, 1

</llo_original>
